<compile_context>
chip_gen: v5e
topology: v5e:2x2
jax: 0.10.0
libtpu: 0.0.40
codegen_flags: <defaults>
</compile_context>

<pallas_src>
import functools

import jax
import jax.numpy as jnp
import numpy as np
from jax.experimental import pallas as pl
from jax.experimental.pallas import tpu as pltpu

MAX_ATOMIC_NUM = 100
ATOM_FDIM = (MAX_ATOMIC_NUM + 1) + 7 + 6 + 5 + 6 + 6 + 2   # = 133 (matches the module)
BOND_FDIM = 14
BOND_TOTAL_FDIM = BOND_FDIM + ATOM_FDIM                    # = 147 (W_i input dim)

HIDDEN = 32
DEPTH = 3

MAX_BOND_TILE = 2048     # bond row / contraction tile cap (large to amortize per-step overhead)
MAX_ATOM_TILE = 512      # atom row tile cap; multiple of 128 so the s_mat lane dim stays legal


def _vmem_limit_bytes():
    """Generation-aware scoped-VMEM limit: ~96 MiB on v5e/v6e (128 MiB), ~48 MiB on v7x (64 MiB)."""
    cap = 64 * 1024 * 1024
    try:
        cap = int(getattr(pltpu.get_tpu_info(), "vmem_capacity_bytes", cap))
    except Exception:
        pass
    return max(32 * 1024 * 1024, min(cap * 3 // 4, 96 * 1024 * 1024))


VMEM_LIMIT = _vmem_limit_bytes()


def _round_up(x, m):
    return ((x + m - 1) // m) * m


def _pad2d(x, rows, cols):
    x = np.asarray(x, np.float32)
    out = np.zeros((rows, cols), dtype=np.float32)
    out[: x.shape[0], : x.shape[1]] = x
    return out


# --------------------------------------------------------------------------------- kernels
def _init_kernel(fb_ref, w_i_ref, inp_ref, msg_ref):
    """inp = W_i(f_bonds); message_0 = ReLU(inp).  Tiled over bond rows."""
    x = jnp.dot(fb_ref[...], w_i_ref[...], preferred_element_type=jnp.float32)
    inp_ref[...] = x.astype(inp_ref.dtype)
    msg_ref[...] = jnp.maximum(x, 0.0).astype(msg_ref.dtype)


def _fused_step_kernel(t_ref, msg0_ref, inp_ref, w_h_ref, out_ref, msg_sc, acc_ref, *, bt, bp):
    """All (depth-1) steps of  msg = ReLU(inp + (T @ msg) @ W_h)  in one pallas_call.

    Grid = (depth-1, bond row tiles, bond K tiles).  The message vector ping-pongs inside a
    resident VMEM scratch of shape (2*Bp, H): slot d%2 holds the current message, slot
    1-(d%2) receives the new one.  T streams from HBM as int8 and is cast to bf16 in-kernel.
    """
    d = pl.program_id(0)
    i = pl.program_id(1)
    k = pl.program_id(2)
    nk = pl.num_programs(2)

    # Seed the ping-pong buffer (slot 0) with message_0 from the init kernel.
    @pl.when((d == 0) & (i == 0) & (k == 0))
    def _():
        msg_sc[pl.ds(0, bp), :] = msg0_ref[...]

    @pl.when(k == 0)
    def _():
        acc_ref[...] = jnp.zeros_like(acc_ref)

    read_slot = d % 2
    koff = pl.multiple_of(read_slot * bp + k * bt, bt)
    prev = msg_sc[pl.ds(koff, bt), :]
    acc_ref[...] += jnp.dot(t_ref[...].astype(jnp.bfloat16), prev,
                            preferred_element_type=jnp.float32)

    @pl.when(k == nk - 1)
    def _():
        h = jnp.dot(acc_ref[...].astype(jnp.bfloat16), w_h_ref[...],
                    preferred_element_type=jnp.float32)
        new_msg = jnp.maximum(inp_ref[...].astype(jnp.float32) + h, 0.0).astype(jnp.bfloat16)
        woff = pl.multiple_of((1 - read_slot) * bp + i * bt, bt)
        msg_sc[pl.ds(woff, bt), :] = new_msg
        out_ref[...] = new_msg


def _atom_hidden_kernel(m_a2b_ref, msg_ref, fa_ref, w_oa_ref, w_oh_ref, b_o_ref,
                        atom_h_ref, acc_ref):
    """a_msg = M_a2b @ message (K-tiled over bonds); atom_h = ReLU(f_atoms@W_oa + a_msg@W_oh + b_o).
    Grid = (atom row tiles, bond K tiles)."""
    k = pl.program_id(1)

    @pl.when(k == 0)
    def _():
        acc_ref[...] = jnp.zeros_like(acc_ref)

    acc_ref[...] += jnp.dot(m_a2b_ref[...], msg_ref[...], preferred_element_type=jnp.float32)

    @pl.when(k == pl.num_programs(1) - 1)
    def _():
        atom_h = jnp.dot(fa_ref[...], w_oa_ref[...], preferred_element_type=jnp.float32)
        atom_h = atom_h + jnp.dot(acc_ref[...].astype(jnp.bfloat16), w_oh_ref[...],
                                  preferred_element_type=jnp.float32)
        atom_h_ref[...] = jnp.maximum(atom_h + b_o_ref[...], 0.0)


def _pool_kernel(s_ref, atom_h_ref, out_ref, acc_ref):
    """mol_vecs = s_mat_scaled @ atom_h (1/a_size already folded into s_mat rows).
    Grid = (atom contraction tiles,)."""
    k = pl.program_id(0)

    @pl.when(k == 0)
    def _():
        acc_ref[...] = jnp.zeros_like(acc_ref)

    acc_ref[...] += jnp.dot(s_ref[...], atom_h_ref[...], preferred_element_type=jnp.float32)

    @pl.when(k == pl.num_programs(0) - 1)
    def _():
        out_ref[...] = acc_ref[...]


# ------------------------------------------------------------------------ jitted device part
@functools.partial(jax.jit, static_argnames=("depth",))
def _mpn_device(f_atoms, f_bonds, T, m_a2b, s_mat, W_i, W_h, W_oa, W_oh, b_o, *, depth):
    Bp = T.shape[0]
    Ap, Fap = f_atoms.shape
    Mp = s_mat.shape[0]
    Fbp = f_bonds.shape[1]
    Hp = W_i.shape[1]

    # Tile sizes are re-derivable from the (wrapper-chosen) padded shapes.
    BT = min(MAX_BOND_TILE, Bp)
    AT = Ap if Ap <= MAX_ATOM_TILE else MAX_ATOM_TILE
    nbt = Bp // BT
    nat = Ap // AT

    def cparams(sem):
        return pltpu.CompilerParams(dimension_semantics=sem, vmem_limit_bytes=VMEM_LIMIT)

    # ---- inp = W_i(f_bonds); message_0 = ReLU(inp) -------------------------------------
    inp, msg = pl.pallas_call(
        _init_kernel,
        out_shape=(jax.ShapeDtypeStruct((Bp, Hp), jnp.bfloat16),
                   jax.ShapeDtypeStruct((Bp, Hp), jnp.bfloat16)),
        grid=(nbt,),
        in_specs=[pl.BlockSpec((BT, Fbp), lambda i: (i, 0)),
                  pl.BlockSpec((Fbp, Hp), lambda i: (0, 0))],
        out_specs=(pl.BlockSpec((BT, Hp), lambda i: (i, 0)),
                   pl.BlockSpec((BT, Hp), lambda i: (i, 0))),
        compiler_params=cparams(("parallel",)),
        cost_estimate=pl.CostEstimate(
            flops=2 * Bp * Fbp * Hp, transcendentals=0,
            bytes_accessed=Bp * Fbp * 2 + Fbp * Hp * 2 + Bp * Hp * 4),
    )(f_bonds, W_i)

    # ---- fused (depth - 1) message passing steps ----------------------------------------
    if depth > 1:
        msg = pl.pallas_call(
            functools.partial(_fused_step_kernel, bt=BT, bp=Bp),
            out_shape=jax.ShapeDtypeStruct((Bp, Hp), jnp.bfloat16),
            grid=(depth - 1, nbt, nbt),                            # (depth, row tiles, K tiles)
            in_specs=[pl.BlockSpec((BT, BT), lambda d, i, k: (i, k)),   # T (int8)
                      pl.BlockSpec((Bp, Hp), lambda d, i, k: (0, 0)),   # message_0 (resident)
                      pl.BlockSpec((BT, Hp), lambda d, i, k: (i, 0)),   # inp (bf16, per row tile)
                      pl.BlockSpec((Hp, Hp), lambda d, i, k: (0, 0))],  # W_h
            out_specs=pl.BlockSpec((BT, Hp), lambda d, i, k: (i, 0)),
            scratch_shapes=[pltpu.VMEM((2 * Bp, Hp), jnp.bfloat16),     # ping-pong message
                            pltpu.VMEM((BT, Hp), jnp.float32)],         # K accumulator
            compiler_params=cparams(("arbitrary", "arbitrary", "arbitrary")),
            cost_estimate=pl.CostEstimate(
                flops=(depth - 1) * (2 * Bp * Bp * Hp + 2 * Bp * Hp * Hp),
                transcendentals=0,
                bytes_accessed=(depth - 1) * (Bp * Bp + 2 * Bp * Hp * 2)
                               + Bp * Hp * 2 + Hp * Hp * 2),
        )(T, msg, inp, W_h)

    # ---- atom_h = ReLU(f_atoms@W_oa + (M_a2b@msg)@W_oh + b_o), tiled over atoms ----------
    atom_h = pl.pallas_call(
        _atom_hidden_kernel,
        out_shape=jax.ShapeDtypeStruct((Ap, Hp), jnp.float32),
        grid=(nat, nbt),                                            # (atom tiles, bond K tiles)
        in_specs=[pl.BlockSpec((AT, BT), lambda i, k: (i, k)),      # M_a2b
                  pl.BlockSpec((BT, Hp), lambda i, k: (k, 0)),      # message (final)
                  pl.BlockSpec((AT, Fap), lambda i, k: (i, 0)),     # f_atoms
                  pl.BlockSpec((Fap, Hp), lambda i, k: (0, 0)),     # W_o (atom part)
                  pl.BlockSpec((Hp, Hp), lambda i, k: (0, 0)),      # W_o (hidden part)
                  pl.BlockSpec((1, Hp), lambda i, k: (0, 0))],      # b_o
        out_specs=pl.BlockSpec((AT, Hp), lambda i, k: (i, 0)),
        scratch_shapes=[pltpu.VMEM((AT, Hp), jnp.float32)],
        compiler_params=cparams(("parallel", "arbitrary")),
        cost_estimate=pl.CostEstimate(
            flops=2 * Ap * Bp * Hp + 2 * Ap * Fap * Hp + 2 * Ap * Hp * Hp,
            transcendentals=0,
            bytes_accessed=Ap * Bp * 2 + nat * Bp * Hp * 2 + Ap * Fap * 2 + Ap * Hp * 4),
    )(m_a2b, msg, f_atoms, W_oa, W_oh, b_o)

    # ---- per-molecule mean pooling:  mol_vecs = s_mat_scaled @ atom_h --------------------
    out = pl.pallas_call(
        _pool_kernel,
        out_shape=jax.ShapeDtypeStruct((Mp, Hp), jnp.float32),
        grid=(nat,),                                                # atom contraction tiles
        in_specs=[pl.BlockSpec((Mp, AT), lambda k: (0, k)),         # selector (1/a_size folded)
                  pl.BlockSpec((AT, Hp), lambda k: (k, 0))],        # atom_h
        out_specs=pl.BlockSpec((Mp, Hp), lambda k: (0, 0)),
        scratch_shapes=[pltpu.VMEM((Mp, Hp), jnp.float32)],
        compiler_params=cparams(("arbitrary",)),
        cost_estimate=pl.CostEstimate(
            flops=2 * Mp * Ap * Hp, transcendentals=0,
            bytes_accessed=Mp * Ap * 4 + Ap * Hp * 4 + Mp * Hp * 4),
    )(s_mat, atom_h)
    return out


# --------------------------------------------------------------------------------- wrapper
def mpn_encoder_pallas(f_atoms, f_bonds, a2b, b2a, b2revb, a_scope,
                       W_i, W_h, W_o, b_o, depth=DEPTH, hidden=HIDDEN):
    """f_atoms:(A,133) f_bonds:(B,147) a2b:(A,max_nb) b2a:(B,) b2revb:(B,)
    a_scope: list of (a_start, a_size). Weights stored (in_dim, out_dim)."""
    f_atoms = np.asarray(f_atoms, np.float32)
    f_bonds = np.asarray(f_bonds, np.float32)
    n_atoms, atom_fdim = f_atoms.shape
    n_bonds, bond_fdim = f_bonds.shape
    n_mols = len(a_scope)

    # ---- padded sizes / tile choices (derivable inside the jitted function) --------------
    BT = min(MAX_BOND_TILE, _round_up(max(n_bonds, 1), 256))
    Bp = _round_up(max(n_bonds, 1), BT)
    at_full = _round_up(max(n_atoms, 1), 16)
    if at_full <= MAX_ATOM_TILE:
        AT, Ap = at_full, at_full
    else:
        AT, Ap = MAX_ATOM_TILE, _round_up(n_atoms, MAX_ATOM_TILE)
    Mp = _round_up(max(n_mols, 1), 16)
    Fap = _round_up(atom_fdim, 128)
    Fbp = _round_up(bond_fdim, 128)
    Hp = _round_up(hidden, 128)
    del AT  # (only needed to pick Ap; the device fn re-derives it)

    a2b_np = np.asarray(a2b, np.int64)
    b2a_np = np.asarray(b2a, np.int64)
    b2revb_np = np.asarray(b2revb, np.int64)

    # M_a2b[a, b] = multiplicity of bond b in a2b[a]; column 0 (padding bond) explicitly 0.
    m_a2b = np.zeros((Ap, Bp), np.float32)
    if a2b_np.size:
        a_idx = np.repeat(np.arange(n_atoms), a2b_np.shape[1])
        b_idx = a2b_np.reshape(-1)
        valid = b_idx > 0
        np.add.at(m_a2b, (a_idx[valid], b_idx[valid]), 1.0)

    # Fused transition matrix: T = G_b2a @ M_a2b - P_rev  (exact small integers -> int8).
    # NOTE: correctness of row 0 / padding rows relies on f_bonds[0] == 0 (chemprop padding).
    T = np.zeros((Bp, Bp), np.float32)
    T[:n_bonds, :] = m_a2b[b2a_np, :]
    T[np.arange(n_bonds), b2revb_np] -= 1.0
    T_i8 = T.astype(np.int8)

    # Per-molecule mean-pooling selector with 1/a_size folded in (a_size==0 -> zero row).
    s_mat = np.zeros((Mp, Ap), np.float32)
    if n_mols:
        starts = np.asarray([s for s, _ in a_scope], np.int64)
        sizes = np.asarray([n for _, n in a_scope], np.int64)
        atoms = np.arange(Ap)[None, :]
        sel = ((atoms >= starts[:, None]) &
               (atoms < (starts + sizes)[:, None])).astype(np.float32)
        inv = np.where(sizes > 0, 1.0 / np.maximum(sizes, 1), 0.0).astype(np.float32)
        s_mat[:n_mols] = sel * inv[:, None]

    f_atoms_p = _pad2d(f_atoms, Ap, Fap)
    f_bonds_p = _pad2d(f_bonds, Bp, Fbp)
    w_i_p = _pad2d(W_i, Fbp, Hp)
    w_h_p = _pad2d(W_h, Hp, Hp)
    w_oa_p = _pad2d(np.asarray(W_o)[:atom_fdim], Fap, Hp)
    w_oh_p = _pad2d(np.asarray(W_o)[atom_fdim:], Hp, Hp)
    b_o_p = _pad2d(np.asarray(b_o).reshape(1, -1), 1, Hp)

    bf16 = jnp.bfloat16
    out = _mpn_device(
        jnp.asarray(f_atoms_p, bf16), jnp.asarray(f_bonds_p, bf16),
        jnp.asarray(T_i8, jnp.int8), jnp.asarray(m_a2b, bf16),
        jnp.asarray(s_mat, jnp.float32),
        jnp.asarray(w_i_p, bf16), jnp.asarray(w_h_p, bf16),
        jnp.asarray(w_oa_p, bf16), jnp.asarray(w_oh_p, bf16),
        jnp.asarray(b_o_p, jnp.float32),
        depth=depth)
    return out[:n_mols, :hidden]


# --------------------------------------------------------------------- pure-JAX reference
def mpn_encoder_ref(f_atoms, f_bonds, a2b, b2a, b2revb, a_scope,
                    W_i, W_h, W_o, b_o, depth=DEPTH):
    f_atoms = jnp.asarray(f_atoms, jnp.float32)
    f_bonds = jnp.asarray(f_bonds, jnp.float32)
    inp = f_bonds @ W_i
    message = jnp.maximum(inp, 0.0)
    for _ in range(depth - 1):
        a_msg = message[a2b].sum(axis=1)
        rev = message[b2revb]
        message = a_msg[b2a] - rev
        message = jnp.maximum(inp + message @ W_h, 0.0)
    a_msg = message[a2b].sum(axis=1)
    a_input = jnp.concatenate([f_atoms, a_msg], axis=1)
    atom_h = jnp.maximum(a_input @ W_o + b_o, 0.0)
    mol_vecs = [atom_h[s:s + n].sum(axis=0) / n for (s, n) in a_scope]
    return jnp.stack(mol_vecs, axis=0)


# --------------------------------------------------------------------------------- main
def _build_synthetic_graph(key):
    """Chemprop-style batch graph: row 0 of atoms/bonds is the zero padding entry."""
    mols = [(4, [(0, 1), (1, 2), (2, 3), (0, 2)]),   # molecule 1: 4 atoms
            (3, [(0, 1), (1, 2)])]                   # molecule 2: 3 atoms
    n_atoms, n_bonds = 1, 1
    a2b, b2a, b2revb, a_scope = [[]], [0], [0], []
    for na, edges in mols:
        a_start = n_atoms
        for _ in range(na):
            a2b.append([])
        for (u, v) in edges:
            au, av = a_start + u, a_start + v
            b1, b2 = n_bonds, n_bonds + 1
            b2a.extend([au, av])
            a2b[av].append(b1)
            a2b[au].append(b2)
            b2revb.extend([b2, b1])
            n_bonds += 2
        a_scope.append((a_start, na))
        n_atoms += na
    max_nb = max(len(x) for x in a2b)
    a2b_arr = np.zeros((n_atoms, max_nb), dtype=np.int32)
    for i, lst in enumerate(a2b):
        a2b_arr[i, :len(lst)] = lst

    k1, k2 = jax.random.split(key)
    f_atoms = np.array(jax.random.uniform(k1, (n_atoms, ATOM_FDIM)), dtype=np.float32)
    f_bonds = np.array(jax.random.uniform(k2, (n_bonds, BOND_TOTAL_FDIM)), dtype=np.float32)
    f_atoms[0] = 0.0   # padding atom
    f_bonds[0] = 0.0   # padding bond
    return f_atoms, f_bonds, a2b_arr, np.array(b2a, np.int32), np.array(b2revb, np.int32), a_scope


if __name__ == "__main__":
    key = jax.random.PRNGKey(0)
    kg, kw1, kw2, kw3, kb = jax.random.split(key, 5)

    f_atoms, f_bonds, a2b, b2a, b2revb, a_scope = _build_synthetic_graph(kg)

    # deterministic parameter init (shapes match the module; stored as (in_dim, out_dim))
    W_i = jax.random.normal(kw1, (BOND_TOTAL_FDIM, HIDDEN), jnp.float32) * (1.0 / np.sqrt(BOND_TOTAL_FDIM))
    W_h = jax.random.normal(kw2, (HIDDEN, HIDDEN), jnp.float32) * (1.0 / np.sqrt(HIDDEN))
    W_o = jax.random.normal(kw3, (ATOM_FDIM + HIDDEN, HIDDEN), jnp.float32) * (1.0 / np.sqrt(ATOM_FDIM + HIDDEN))
    b_o = jax.random.normal(kb, (HIDDEN,), jnp.float32) * 0.01

    out = mpn_encoder_pallas(f_atoms, f_bonds, a2b, b2a, b2revb, a_scope, W_i, W_h, W_o, b_o)
    out = jax.block_until_ready(out)

    ref = mpn_encoder_ref(f_atoms, f_bonds, a2b, b2a, b2revb, a_scope, W_i, W_h, W_o, b_o)
    assert out.shape == (len(a_scope), HIDDEN)
    max_err = float(np.max(np.abs(np.asarray(out, np.float32) - np.asarray(ref, np.float32))))
    # bf16 operands with f32 accumulation => loose-ish tolerance vs the f32 reference
    assert np.allclose(np.asarray(out, np.float32), np.asarray(ref, np.float32),
                       rtol=5e-2, atol=5e-2), f"max abs err = {max_err}"
    print("KERNEL_OK")
</pallas_src>

<mosaic_0001>
module attributes {stable_mosaic.version = 11 : i64} {
  func.func @_init_kernel(%arg0: i32, %arg1: memref<256x256xbf16, #tpu.memory_space<vmem>>, %arg2: memref<256x128xbf16, #tpu.memory_space<vmem>>, %arg3: memref<256x128xbf16, #tpu.memory_space<vmem>>, %arg4: memref<256x128xbf16, #tpu.memory_space<vmem>>) attributes {dimension_semantics = [#tpu.dimension_semantics<parallel>], iteration_bounds = array<i64: 1>, scalar_prefetch = 0 : i64, scratch_operands = 0 : i64, tpu.core_type = #tpu.core_type<tc>, window_params = [{transform_indices = @transform_0, window_bounds = array<i64: 256, 256>}, {pipeline_mode = #tpu.pipeline_mode<synchronous>, transform_indices = @transform_1, window_bounds = array<i64: 256, 128>}, {transform_indices = @transform_2, window_bounds = array<i64: 256, 128>}, {transform_indices = @transform_3, window_bounds = array<i64: 256, 128>}]} {
    %c0 = arith.constant 0 : index
    %c0_0 = arith.constant 0 : index
    %0 = vector.load %arg1[%c0, %c0_0] : memref<256x256xbf16, #tpu.memory_space<vmem>>, vector<256x256xbf16>
    %c0_1 = arith.constant 0 : index
    %c0_2 = arith.constant 0 : index
    %1 = vector.load %arg2[%c0_1, %c0_2] : memref<256x128xbf16, #tpu.memory_space<vmem>>, vector<256x128xbf16>
    %cst = arith.constant dense<0.000000e+00> : vector<256x128xf32>
    %2 = tpu.matmul %0, %1, %cst {dimension_numbers = #tpu.dot_dimension_numbers<[1], [0], [0], [1], [0, 0, 1, 1], [], []>} : vector<256x256xbf16>, vector<256x128xbf16>, vector<256x128xf32> -> vector<256x128xf32>
    %3 = arith.truncf %2 : vector<256x128xf32> to vector<256x128xbf16>
    %c0_3 = arith.constant 0 : index
    %c0_4 = arith.constant 0 : index
    %4 = vector.load %arg3[%c0_3, %c0_4] : memref<256x128xbf16, #tpu.memory_space<vmem>>, vector<256x128xbf16>
    tpu.vector_store %arg3[%c0_3, %c0_4], %3 {strides = array<i32>} : memref<256x128xbf16, #tpu.memory_space<vmem>>, vector<256x128xbf16>,
    %cst_5 = arith.constant 0.000000e+00 : f32
    %5 = vector.broadcast %cst_5 : f32 to vector<256x128xf32>
    %6 = arith.maximumf %2, %5 : vector<256x128xf32>
    %7 = arith.truncf %6 : vector<256x128xf32> to vector<256x128xbf16>
    %c0_6 = arith.constant 0 : index
    %c0_7 = arith.constant 0 : index
    %8 = vector.load %arg4[%c0_6, %c0_7] : memref<256x128xbf16, #tpu.memory_space<vmem>>, vector<256x128xbf16>
    tpu.vector_store %arg4[%c0_6, %c0_7], %7 {strides = array<i32>} : memref<256x128xbf16, #tpu.memory_space<vmem>>, vector<256x128xbf16>,
    return
  }
  func.func @transform_0(%arg0: i32) -> (i32, i32) {
    %c0_i32 = arith.constant 0 : i32
    %c0_i32_0 = arith.constant 0 : i32
    return %arg0, %c0_i32 : i32, i32
  }
  func.func @transform_1(%arg0: i32) -> (i32, i32) {
    %c0_i32 = arith.constant 0 : i32
    %c0_i32_0 = arith.constant 0 : i32
    %c0_i32_1 = arith.constant 0 : i32
    return %c0_i32, %c0_i32_0 : i32, i32
  }
  func.func @transform_2(%arg0: i32) -> (i32, i32) {
    %c0_i32 = arith.constant 0 : i32
    %c0_i32_0 = arith.constant 0 : i32
    return %arg0, %c0_i32 : i32, i32
  }
  func.func @transform_3(%arg0: i32) -> (i32, i32) {
    %c0_i32 = arith.constant 0 : i32
    %c0_i32_0 = arith.constant 0 : i32
    return %arg0, %c0_i32 : i32, i32
  }
}

module attributes {stable_mosaic.version = 11 : i64} {
  func.func @_pool_kernel(%arg0: i32, %arg1: memref<16x16xf32, #tpu.memory_space<vmem>>, %arg2: memref<16x128xf32, #tpu.memory_space<vmem>>, %arg3: memref<16x128xf32, #tpu.memory_space<vmem>>, %arg4: memref<16x128xf32, #tpu.memory_space<vmem>>) attributes {dimension_semantics = [#tpu.dimension_semantics<arbitrary>], iteration_bounds = array<i64: 1>, scalar_prefetch = 0 : i64, scratch_operands = 1 : i64, tpu.core_type = #tpu.core_type<tc>, window_params = [{transform_indices = @transform_0, window_bounds = array<i64: 16, 16>}, {transform_indices = @transform_1, window_bounds = array<i64: 16, 128>}, {pipeline_mode = #tpu.pipeline_mode<synchronous>, transform_indices = @transform_2, window_bounds = array<i64: 16, 128>}]} {
    %c0_i32 = arith.constant 0 : i32
    %0 = arith.cmpi eq, %arg0, %c0_i32 : i32
    %1 = arith.extui %0 : i1 to i32
    %c0_i32_0 = arith.constant 0 : i32
    %2 = arith.cmpi ne, %1, %c0_i32_0 : i32
    scf.if %2 {
      %cst_10 = arith.constant 0.000000e+00 : f32
      %12 = vector.broadcast %cst_10 : f32 to vector<16x128xf32>
      %c0_11 = arith.constant 0 : index
      %c0_12 = arith.constant 0 : index
      %13 = vector.load %arg4[%c0_11, %c0_12] : memref<16x128xf32, #tpu.memory_space<vmem>>, vector<16x128xf32>
      tpu.vector_store %arg4[%c0_11, %c0_12], %12 {strides = array<i32>} : memref<16x128xf32, #tpu.memory_space<vmem>>, vector<16x128xf32>,
    } else {
    }
    %c0 = arith.constant 0 : index
    %c0_1 = arith.constant 0 : index
    %3 = vector.load %arg4[%c0, %c0_1] : memref<16x128xf32, #tpu.memory_space<vmem>>, vector<16x128xf32>
    %c0_2 = arith.constant 0 : index
    %c0_3 = arith.constant 0 : index
    %4 = vector.load %arg1[%c0_2, %c0_3] : memref<16x16xf32, #tpu.memory_space<vmem>>, vector<16x16xf32>
    %c0_4 = arith.constant 0 : index
    %c0_5 = arith.constant 0 : index
    %5 = vector.load %arg2[%c0_4, %c0_5] : memref<16x128xf32, #tpu.memory_space<vmem>>, vector<16x128xf32>
    %cst = arith.constant dense<0.000000e+00> : vector<16x128xf32>
    %6 = tpu.matmul %4, %5, %cst {dimension_numbers = #tpu.dot_dimension_numbers<[1], [0], [0], [1], [0, 0, 1, 1], [], []>} : vector<16x16xf32>, vector<16x128xf32>, vector<16x128xf32> -> vector<16x128xf32>
    %7 = arith.addf %3, %6 : vector<16x128xf32>
    %c0_6 = arith.constant 0 : index
    %c0_7 = arith.constant 0 : index
    %8 = vector.load %arg4[%c0_6, %c0_7] : memref<16x128xf32, #tpu.memory_space<vmem>>, vector<16x128xf32>
    tpu.vector_store %arg4[%c0_6, %c0_7], %7 {strides = array<i32>} : memref<16x128xf32, #tpu.memory_space<vmem>>, vector<16x128xf32>,
    %c0_i32_8 = arith.constant 0 : i32
    %9 = arith.cmpi eq, %arg0, %c0_i32_8 : i32
    %10 = arith.extui %9 : i1 to i32
    %c0_i32_9 = arith.constant 0 : i32
    %11 = arith.cmpi ne, %10, %c0_i32_9 : i32
    scf.if %11 {
      %c0_10 = arith.constant 0 : index
      %c0_11 = arith.constant 0 : index
      %12 = vector.load %arg4[%c0_10, %c0_11] : memref<16x128xf32, #tpu.memory_space<vmem>>, vector<16x128xf32>
      %c0_12 = arith.constant 0 : index
      %c0_13 = arith.constant 0 : index
      %13 = vector.load %arg3[%c0_12, %c0_13] : memref<16x128xf32, #tpu.memory_space<vmem>>, vector<16x128xf32>
      tpu.vector_store %arg3[%c0_12, %c0_13], %12 {strides = array<i32>} : memref<16x128xf32, #tpu.memory_space<vmem>>, vector<16x128xf32>,
    } else {
    }
    return
  }
  func.func @transform_0(%arg0: i32) -> (i32, i32) {
    %c0_i32 = arith.constant 0 : i32
    %c0_i32_0 = arith.constant 0 : i32
    return %c0_i32, %arg0 : i32, i32
  }
  func.func @transform_1(%arg0: i32) -> (i32, i32) {
    %c0_i32 = arith.constant 0 : i32
    %c0_i32_0 = arith.constant 0 : i32
    return %arg0, %c0_i32 : i32, i32
  }
  func.func @transform_2(%arg0: i32) -> (i32, i32) {
    %c0_i32 = arith.constant 0 : i32
    %c0_i32_0 = arith.constant 0 : i32
    %c0_i32_1 = arith.constant 0 : i32
    return %c0_i32, %c0_i32_0 : i32, i32
  }
}

module attributes {stable_mosaic.version = 11 : i64} {
  func.func @_fused_step_kernel(%arg0: i32, %arg1: i32, %arg2: i32, %arg3: memref<256x256xi8, #tpu.memory_space<vmem>>, %arg4: memref<256x128xbf16, #tpu.memory_space<vmem>>, %arg5: memref<256x128xbf16, #tpu.memory_space<vmem>>, %arg6: memref<128x128xbf16, #tpu.memory_space<vmem>>, %arg7: memref<256x128xbf16, #tpu.memory_space<vmem>>, %arg8: memref<512x128xbf16, #tpu.memory_space<vmem>>, %arg9: memref<256x128xf32, #tpu.memory_space<vmem>>) attributes {dimension_semantics = [#tpu.dimension_semantics<arbitrary>, #tpu.dimension_semantics<arbitrary>, #tpu.dimension_semantics<arbitrary>], iteration_bounds = array<i64: 2, 1, 1>, scalar_prefetch = 0 : i64, scratch_operands = 2 : i64, tpu.core_type = #tpu.core_type<tc>, window_params = [{transform_indices = @transform_0, window_bounds = array<i64: 256, 256>}, {pipeline_mode = #tpu.pipeline_mode<synchronous>, transform_indices = @transform_1, window_bounds = array<i64: 256, 128>}, {transform_indices = @transform_2, window_bounds = array<i64: 256, 128>}, {pipeline_mode = #tpu.pipeline_mode<synchronous>, transform_indices = @transform_3, window_bounds = array<i64: 128, 128>}, {transform_indices = @transform_4, window_bounds = array<i64: 256, 128>}]} {
    %c0_i32 = arith.constant 0 : i32
    %0 = arith.cmpi eq, %arg0, %c0_i32 : i32
    %c0_i32_0 = arith.constant 0 : i32
    %1 = arith.cmpi eq, %arg1, %c0_i32_0 : i32
    %2 = arith.andi %0, %1 : i1
    %c0_i32_1 = arith.constant 0 : i32
    %3 = arith.cmpi eq, %arg2, %c0_i32_1 : i32
    %4 = arith.andi %2, %3 : i1
    %5 = arith.extui %4 : i1 to i32
    %c0_i32_2 = arith.constant 0 : i32
    %6 = arith.cmpi ne, %5, %c0_i32_2 : i32
    scf.if %6 {
      %c0_18 = arith.constant 0 : index
      %c0_19 = arith.constant 0 : index
      %35 = vector.load %arg4[%c0_18, %c0_19] : memref<256x128xbf16, #tpu.memory_space<vmem>>, vector<256x128xbf16>
      %c0_20 = arith.constant 0 : index
      %c0_21 = arith.constant 0 : index
      %36 = vector.load %arg8[%c0_20, %c0_21] : memref<512x128xbf16, #tpu.memory_space<vmem>>, vector<256x128xbf16>
      tpu.vector_store %arg8[%c0_20, %c0_21], %35 {strides = array<i32>} : memref<512x128xbf16, #tpu.memory_space<vmem>>, vector<256x128xbf16>,
    } else {
    }
    %c0_i32_3 = arith.constant 0 : i32
    %7 = arith.cmpi eq, %arg2, %c0_i32_3 : i32
    %8 = arith.extui %7 : i1 to i32
    %c0_i32_4 = arith.constant 0 : i32
    %9 = arith.cmpi ne, %8, %c0_i32_4 : i32
    scf.if %9 {
      %cst_18 = arith.constant 0.000000e+00 : f32
      %35 = vector.broadcast %cst_18 : f32 to vector<256x128xf32>
      %c0_19 = arith.constant 0 : index
      %c0_20 = arith.constant 0 : index
      %36 = vector.load %arg9[%c0_19, %c0_20] : memref<256x128xf32, #tpu.memory_space<vmem>>, vector<256x128xf32>
      tpu.vector_store %arg9[%c0_19, %c0_20], %35 {strides = array<i32>} : memref<256x128xf32, #tpu.memory_space<vmem>>, vector<256x128xf32>,
    } else {
    }
    %c2_i32 = arith.constant 2 : i32
    %c0_i32_5 = arith.constant 0 : i32
    %10 = arith.cmpi eq, %c2_i32, %c0_i32_5 : i32
    %c1_i32 = arith.constant 1 : i32
    %11 = arith.select %10, %c1_i32, %c2_i32 : i32
    %12 = arith.remsi %arg0, %11 : i32
    %c0_i32_6 = arith.constant 0 : i32
    %13 = arith.cmpi ne, %12, %c0_i32_6 : i32
    %c0_i32_7 = arith.constant 0 : i32
    %14 = arith.cmpi slt, %12, %c0_i32_7 : i32
    %c0_i32_8 = arith.constant 0 : i32
    %15 = arith.cmpi slt, %11, %c0_i32_8 : i32
    %16 = arith.xori %14, %15 : i1
    %17 = arith.andi %16, %13 : i1
    %18 = arith.addi %12, %11 : i32
    %19 = arith.select %17, %18, %12 : i32
    %c256_i32 = arith.constant 256 : i32
    %20 = arith.muli %19, %c256_i32 : i32
    %c256_i32_9 = arith.constant 256 : i32
    %21 = arith.muli %arg2, %c256_i32_9 : i32
    %22 = arith.addi %20, %21 : i32
    %23 = tpu.assume_multiple %22, 256 : i32
    %24 = arith.index_cast %23 : i32 to index
    %c0 = arith.constant 0 : index
    %25 = vector.load %arg8[%24, %c0] : memref<512x128xbf16, #tpu.memory_space<vmem>>, vector<256x128xbf16>
    %c0_10 = arith.constant 0 : index
    %c0_11 = arith.constant 0 : index
    %26 = vector.load %arg9[%c0_10, %c0_11] : memref<256x128xf32, #tpu.memory_space<vmem>>, vector<256x128xf32>
    %c0_12 = arith.constant 0 : index
    %c0_13 = arith.constant 0 : index
    %27 = vector.load %arg3[%c0_12, %c0_13] : memref<256x256xi8, #tpu.memory_space<vmem>>, vector<256x256xi8>
    %28 = arith.sitofp %27 : vector<256x256xi8> to vector<256x256xbf16>
    %cst = arith.constant dense<0.000000e+00> : vector<256x128xf32>
    %29 = tpu.matmul %28, %25, %cst {dimension_numbers = #tpu.dot_dimension_numbers<[1], [0], [0], [1], [0, 0, 1, 1], [], []>} : vector<256x256xbf16>, vector<256x128xbf16>, vector<256x128xf32> -> vector<256x128xf32>
    %30 = arith.addf %26, %29 : vector<256x128xf32>
    %c0_14 = arith.constant 0 : index
    %c0_15 = arith.constant 0 : index
    %31 = vector.load %arg9[%c0_14, %c0_15] : memref<256x128xf32, #tpu.memory_space<vmem>>, vector<256x128xf32>
    tpu.vector_store %arg9[%c0_14, %c0_15], %30 {strides = array<i32>} : memref<256x128xf32, #tpu.memory_space<vmem>>, vector<256x128xf32>,
    %c0_i32_16 = arith.constant 0 : i32
    %32 = arith.cmpi eq, %arg2, %c0_i32_16 : i32
    %33 = arith.extui %32 : i1 to i32
    %c0_i32_17 = arith.constant 0 : i32
    %34 = arith.cmpi ne, %33, %c0_i32_17 : i32
    scf.if %34 {
      %c0_18 = arith.constant 0 : index
      %c0_19 = arith.constant 0 : index
      %35 = vector.load %arg9[%c0_18, %c0_19] : memref<256x128xf32, #tpu.memory_space<vmem>>, vector<256x128xf32>
      %36 = arith.truncf %35 : vector<256x128xf32> to vector<256x128xbf16>
      %c0_20 = arith.constant 0 : index
      %c0_21 = arith.constant 0 : index
      %37 = vector.load %arg6[%c0_20, %c0_21] : memref<128x128xbf16, #tpu.memory_space<vmem>>, vector<128x128xbf16>
      %cst_22 = arith.constant dense<0.000000e+00> : vector<256x128xf32>
      %38 = tpu.matmul %36, %37, %cst_22 {dimension_numbers = #tpu.dot_dimension_numbers<[1], [0], [0], [1], [0, 0, 1, 1], [], []>} : vector<256x128xbf16>, vector<128x128xbf16>, vector<256x128xf32> -> vector<256x128xf32>
      %c0_23 = arith.constant 0 : index
      %c0_24 = arith.constant 0 : index
      %39 = vector.load %arg5[%c0_23, %c0_24] : memref<256x128xbf16, #tpu.memory_space<vmem>>, vector<256x128xbf16>
      %40 = arith.extf %39 : vector<256x128xbf16> to vector<256x128xf32>
      %41 = arith.addf %40, %38 : vector<256x128xf32>
      %cst_25 = arith.constant 0.000000e+00 : f32
      %42 = vector.broadcast %cst_25 : f32 to vector<256x128xf32>
      %43 = arith.maximumf %41, %42 : vector<256x128xf32>
      %44 = arith.truncf %43 : vector<256x128xf32> to vector<256x128xbf16>
      %c1_i32_26 = arith.constant 1 : i32
      %45 = arith.subi %c1_i32_26, %19 : i32
      %c256_i32_27 = arith.constant 256 : i32
      %46 = arith.muli %45, %c256_i32_27 : i32
      %c256_i32_28 = arith.constant 256 : i32
      %47 = arith.muli %arg1, %c256_i32_28 : i32
      %48 = arith.addi %46, %47 : i32
      %49 = tpu.assume_multiple %48, 256 : i32
      %50 = arith.index_cast %49 : i32 to index
      %c0_29 = arith.constant 0 : index
      %51 = vector.load %arg8[%50, %c0_29] : memref<512x128xbf16, #tpu.memory_space<vmem>>, vector<256x128xbf16>
      tpu.vector_store %arg8[%50, %c0_29], %44 {strides = array<i32>} : memref<512x128xbf16, #tpu.memory_space<vmem>>, vector<256x128xbf16>,
      %c0_30 = arith.constant 0 : index
      %c0_31 = arith.constant 0 : index
      %52 = vector.load %arg7[%c0_30, %c0_31] : memref<256x128xbf16, #tpu.memory_space<vmem>>, vector<256x128xbf16>
      tpu.vector_store %arg7[%c0_30, %c0_31], %44 {strides = array<i32>} : memref<256x128xbf16, #tpu.memory_space<vmem>>, vector<256x128xbf16>,
    } else {
    }
    return
  }
  func.func @transform_0(%arg0: i32, %arg1: i32, %arg2: i32) -> (i32, i32) {
    %c0_i32 = arith.constant 0 : i32
    return %arg1, %arg2 : i32, i32
  }
  func.func @transform_1(%arg0: i32, %arg1: i32, %arg2: i32) -> (i32, i32) {
    %c0_i32 = arith.constant 0 : i32
    %c0_i32_0 = arith.constant 0 : i32
    %c0_i32_1 = arith.constant 0 : i32
    return %c0_i32, %c0_i32_0 : i32, i32
  }
  func.func @transform_2(%arg0: i32, %arg1: i32, %arg2: i32) -> (i32, i32) {
    %c0_i32 = arith.constant 0 : i32
    %c0_i32_0 = arith.constant 0 : i32
    return %arg1, %c0_i32 : i32, i32
  }
  func.func @transform_3(%arg0: i32, %arg1: i32, %arg2: i32) -> (i32, i32) {
    %c0_i32 = arith.constant 0 : i32
    %c0_i32_0 = arith.constant 0 : i32
    %c0_i32_1 = arith.constant 0 : i32
    return %c0_i32, %c0_i32_0 : i32, i32
  }
  func.func @transform_4(%arg0: i32, %arg1: i32, %arg2: i32) -> (i32, i32) {
    %c0_i32 = arith.constant 0 : i32
    %c0_i32_0 = arith.constant 0 : i32
    return %arg1, %c0_i32 : i32, i32
  }
}

module attributes {stable_mosaic.version = 11 : i64} {
  func.func @_atom_hidden_kernel(%arg0: i32, %arg1: i32, %arg2: memref<16x256xbf16, #tpu.memory_space<vmem>>, %arg3: memref<256x128xbf16, #tpu.memory_space<vmem>>, %arg4: memref<16x256xbf16, #tpu.memory_space<vmem>>, %arg5: memref<256x128xbf16, #tpu.memory_space<vmem>>, %arg6: memref<128x128xbf16, #tpu.memory_space<vmem>>, %arg7: memref<1x128xf32, #tpu.memory_space<vmem>>, %arg8: memref<16x128xf32, #tpu.memory_space<vmem>>, %arg9: memref<16x128xf32, #tpu.memory_space<vmem>>) attributes {dimension_semantics = [#tpu.dimension_semantics<parallel>, #tpu.dimension_semantics<arbitrary>], iteration_bounds = array<i64: 1, 1>, scalar_prefetch = 0 : i64, scratch_operands = 1 : i64, tpu.core_type = #tpu.core_type<tc>, window_params = [{transform_indices = @transform_0, window_bounds = array<i64: 16, 256>}, {transform_indices = @transform_1, window_bounds = array<i64: 256, 128>}, {transform_indices = @transform_2, window_bounds = array<i64: 16, 256>}, {pipeline_mode = #tpu.pipeline_mode<synchronous>, transform_indices = @transform_3, window_bounds = array<i64: 256, 128>}, {pipeline_mode = #tpu.pipeline_mode<synchronous>, transform_indices = @transform_4, window_bounds = array<i64: 128, 128>}, {pipeline_mode = #tpu.pipeline_mode<synchronous>, transform_indices = @transform_5, window_bounds = array<i64: 1, 128>}, {transform_indices = @transform_6, window_bounds = array<i64: 16, 128>}]} {
    %c0_i32 = arith.constant 0 : i32
    %0 = arith.cmpi eq, %arg1, %c0_i32 : i32
    %1 = arith.extui %0 : i1 to i32
    %c0_i32_0 = arith.constant 0 : i32
    %2 = arith.cmpi ne, %1, %c0_i32_0 : i32
    scf.if %2 {
      %cst_10 = arith.constant 0.000000e+00 : f32
      %12 = vector.broadcast %cst_10 : f32 to vector<16x128xf32>
      %c0_11 = arith.constant 0 : index
      %c0_12 = arith.constant 0 : index
      %13 = vector.load %arg9[%c0_11, %c0_12] : memref<16x128xf32, #tpu.memory_space<vmem>>, vector<16x128xf32>
      tpu.vector_store %arg9[%c0_11, %c0_12], %12 {strides = array<i32>} : memref<16x128xf32, #tpu.memory_space<vmem>>, vector<16x128xf32>,
    } else {
    }
    %c0 = arith.constant 0 : index
    %c0_1 = arith.constant 0 : index
    %3 = vector.load %arg9[%c0, %c0_1] : memref<16x128xf32, #tpu.memory_space<vmem>>, vector<16x128xf32>
    %c0_2 = arith.constant 0 : index
    %c0_3 = arith.constant 0 : index
    %4 = vector.load %arg2[%c0_2, %c0_3] : memref<16x256xbf16, #tpu.memory_space<vmem>>, vector<16x256xbf16>
    %c0_4 = arith.constant 0 : index
    %c0_5 = arith.constant 0 : index
    %5 = vector.load %arg3[%c0_4, %c0_5] : memref<256x128xbf16, #tpu.memory_space<vmem>>, vector<256x128xbf16>
    %cst = arith.constant dense<0.000000e+00> : vector<16x128xf32>
    %6 = tpu.matmul %4, %5, %cst {dimension_numbers = #tpu.dot_dimension_numbers<[1], [0], [0], [1], [0, 0, 1, 1], [], []>} : vector<16x256xbf16>, vector<256x128xbf16>, vector<16x128xf32> -> vector<16x128xf32>
    %7 = arith.addf %3, %6 : vector<16x128xf32>
    %c0_6 = arith.constant 0 : index
    %c0_7 = arith.constant 0 : index
    %8 = vector.load %arg9[%c0_6, %c0_7] : memref<16x128xf32, #tpu.memory_space<vmem>>, vector<16x128xf32>
    tpu.vector_store %arg9[%c0_6, %c0_7], %7 {strides = array<i32>} : memref<16x128xf32, #tpu.memory_space<vmem>>, vector<16x128xf32>,
    %c0_i32_8 = arith.constant 0 : i32
    %9 = arith.cmpi eq, %arg1, %c0_i32_8 : i32
    %10 = arith.extui %9 : i1 to i32
    %c0_i32_9 = arith.constant 0 : i32
    %11 = arith.cmpi ne, %10, %c0_i32_9 : i32
    scf.if %11 {
      %c0_10 = arith.constant 0 : index
      %c0_11 = arith.constant 0 : index
      %12 = vector.load %arg4[%c0_10, %c0_11] : memref<16x256xbf16, #tpu.memory_space<vmem>>, vector<16x256xbf16>
      %c0_12 = arith.constant 0 : index
      %c0_13 = arith.constant 0 : index
      %13 = vector.load %arg5[%c0_12, %c0_13] : memref<256x128xbf16, #tpu.memory_space<vmem>>, vector<256x128xbf16>
      %cst_14 = arith.constant dense<0.000000e+00> : vector<16x128xf32>
      %14 = tpu.matmul %12, %13, %cst_14 {dimension_numbers = #tpu.dot_dimension_numbers<[1], [0], [0], [1], [0, 0, 1, 1], [], []>} : vector<16x256xbf16>, vector<256x128xbf16>, vector<16x128xf32> -> vector<16x128xf32>
      %c0_15 = arith.constant 0 : index
      %c0_16 = arith.constant 0 : index
      %15 = vector.load %arg9[%c0_15, %c0_16] : memref<16x128xf32, #tpu.memory_space<vmem>>, vector<16x128xf32>
      %16 = arith.truncf %15 : vector<16x128xf32> to vector<16x128xbf16>
      %c0_17 = arith.constant 0 : index
      %c0_18 = arith.constant 0 : index
      %17 = vector.load %arg6[%c0_17, %c0_18] : memref<128x128xbf16, #tpu.memory_space<vmem>>, vector<128x128xbf16>
      %cst_19 = arith.constant dense<0.000000e+00> : vector<16x128xf32>
      %18 = tpu.matmul %16, %17, %cst_19 {dimension_numbers = #tpu.dot_dimension_numbers<[1], [0], [0], [1], [0, 0, 1, 1], [], []>} : vector<16x128xbf16>, vector<128x128xbf16>, vector<16x128xf32> -> vector<16x128xf32>
      %19 = arith.addf %14, %18 : vector<16x128xf32>
      %c0_20 = arith.constant 0 : index
      %c0_21 = arith.constant 0 : index
      %20 = vector.load %arg7[%c0_20, %c0_21] : memref<1x128xf32, #tpu.memory_space<vmem>>, vector<1x128xf32>
      %21 = vector.broadcast %20 : vector<1x128xf32> to vector<16x128xf32>
      %22 = arith.addf %19, %21 : vector<16x128xf32>
      %cst_22 = arith.constant 0.000000e+00 : f32
      %23 = vector.broadcast %cst_22 : f32 to vector<16x128xf32>
      %24 = arith.maximumf %22, %23 : vector<16x128xf32>
      %c0_23 = arith.constant 0 : index
      %c0_24 = arith.constant 0 : index
      %25 = vector.load %arg8[%c0_23, %c0_24] : memref<16x128xf32, #tpu.memory_space<vmem>>, vector<16x128xf32>
      tpu.vector_store %arg8[%c0_23, %c0_24], %24 {strides = array<i32>} : memref<16x128xf32, #tpu.memory_space<vmem>>, vector<16x128xf32>,
    } else {
    }
    return
  }
  func.func @transform_0(%arg0: i32, %arg1: i32) -> (i32, i32) {
    %c0_i32 = arith.constant 0 : i32
    return %arg0, %arg1 : i32, i32
  }
  func.func @transform_1(%arg0: i32, %arg1: i32) -> (i32, i32) {
    %c0_i32 = arith.constant 0 : i32
    %c0_i32_0 = arith.constant 0 : i32
    return %arg1, %c0_i32 : i32, i32
  }
  func.func @transform_2(%arg0: i32, %arg1: i32) -> (i32, i32) {
    %c0_i32 = arith.constant 0 : i32
    %c0_i32_0 = arith.constant 0 : i32
    return %arg0, %c0_i32 : i32, i32
  }
  func.func @transform_3(%arg0: i32, %arg1: i32) -> (i32, i32) {
    %c0_i32 = arith.constant 0 : i32
    %c0_i32_0 = arith.constant 0 : i32
    %c0_i32_1 = arith.constant 0 : i32
    return %c0_i32, %c0_i32_0 : i32, i32
  }
  func.func @transform_4(%arg0: i32, %arg1: i32) -> (i32, i32) {
    %c0_i32 = arith.constant 0 : i32
    %c0_i32_0 = arith.constant 0 : i32
    %c0_i32_1 = arith.constant 0 : i32
    return %c0_i32, %c0_i32_0 : i32, i32
  }
  func.func @transform_5(%arg0: i32, %arg1: i32) -> (i32, i32) {
    %c0_i32 = arith.constant 0 : i32
    %c0_i32_0 = arith.constant 0 : i32
    %c0_i32_1 = arith.constant 0 : i32
    return %c0_i32, %c0_i32_0 : i32, i32
  }
  func.func @transform_6(%arg0: i32, %arg1: i32) -> (i32, i32) {
    %c0_i32 = arith.constant 0 : i32
    %c0_i32_0 = arith.constant 0 : i32
    return %arg0, %c0_i32 : i32, i32
  }
}

</mosaic_0001>

<llo_original>
// kernel: _mpn_device.7
$region0: #{_mpn_device.7}
  #allocation0 [shape = 'u32[]', space=smem, size = 0x4, offset = 0x4, fixed_abs, tag = 'smem constant byte address 0x4 - core index']
  #allocation1 [shape = 'u32[72,128]{1,0:T(1,128)}', space=vmem, size = 0x9000, scoped, tag = 'internal scratch']
  #allocation2 [shape = 'f32[16,128]{1,0:T(8,128)}', space=vmem, size = 0x2000, scoped, tag = 'scratch operand']
  %s0 = inlined_call_operand.vmem [shape: f32[16,16], index: 0, kind: input, shape index: {}]
  %s1 = inlined_call_operand.vmem [shape: f32[16,128], index: 1, kind: input, shape index: {}]
  %s2 = inlined_call_operand.hbm [shape: f32[16,128], index: 2, kind: output, shape index: {}]
  %s3 = sld [smem:[#allocation0]]
  $region26: #{_mpn_device.7} parent=0
    _
  %s5 = ssub.s32 1, %s3
  %s6 = scalar_select 0, %s5, %s3
  $region1: #{_mpn_device.7} parent=0
    #allocation3 [shape = 'u8[8192]{0}', space=vmem, size = 0x2000, scoped, tag = 'output window, operand 0, single buffered']
    #allocation4 [shape = 's32[1]{0}', space=sflag, size = 0x4, scoped, tag = 'scoped memory for _mpn_device.7']
    %7 = vsyncpa [#allocation4], 0
    // Predicated region
    $region2: #{_mpn_device.7} parent=1 // pred_check
      _
    $region3: #{_mpn_device.7} parent=1 // pred_check_branch
      %9 = sbr.rel (0) target = $region5
    $region4: #{_mpn_device.7} parent=1 // pred_region
      _
    $region5: #{_mpn_device.7} parent=1 // pred_fallthru
      _
    // Predicated region
    $region6: #{_mpn_device.7} parent=1 // pred_check
      _
    $region7: #{_mpn_device.7} parent=1 // pred_check_branch
      %11 = sbr.rel (0) target = $region9
    $region8: #{_mpn_device.7} parent=1 // pred_region
      _
    $region9: #{_mpn_device.7} parent=1 // pred_fallthru
      _
    %p12 = scmp.eq.s32.totalorder 0, 0
    // Predicated region
    $region10: #{_mpn_device.7} parent=1 // pred_check
      %p13 = pneg %p12
    $region11: #{_mpn_device.7} parent=1 // pred_check_branch
      %15 = sbr.rel (%p13) target = $region13
    $region12: #{_mpn_device.7} parent=1 // pred_region
      %16 = vst [vmem:[#allocation2] sm:$0xff] 0.0
      %17 = vst [vmem:[#allocation2 + $0x8] sm:$0xff] 0.0
    $region13: #{_mpn_device.7} parent=1 // pred_fallthru
      _
    %v18 = vld [vmem:[#allocation2] sm:$0xff]
    %v19 = vld [vmem:[#allocation2 + $0x8] sm:$0xff]
    %v20 = vld [vmem:[%s0] sm:$0xff]
    %v21 = vld [vmem:[%s0 + $0x8] sm:$0xff]
    %v22 = vld [vmem:[%s1] sm:$0xff]
    %v23 = vld [vmem:[%s1 + $0x8] sm:$0xff]
    %vm24 = vcmask 130048
    %v26 = vsel %vm24, %v20, 0
    %v29 = vsel %vm24, %v21, 0
    %31 = vmatpush.msra.mxu0 0.0
    %32 = vmatpush.msra.mxu0 0.0
    %33 = vmatpush.msra.mxu0 0.0
    %34 = vmatpush.msra.mxu0 0.0
    %35 = vmatpush.msra.mxu0 0.0
    %36 = vmatpush.msra.mxu0 0.0
    %37 = vmatpush.msra.mxu0 0.0
    %38 = vmatpush.msra.mxu0 0.0
    %39 = vmatpush.msra.mxu0 0.0
    %40 = vmatpush.msra.mxu0 0.0
    %41 = vmatpush.msra.mxu0 0.0
    %42 = vmatpush.msra.mxu0 0.0
    %43 = vmatpush.msra.mxu0 0.0
    %44 = vmatpush.msra.mxu0 0.0
    %45 = vmatpush.msra.mxu0 %v23
    %46 = vmatpush.msra.mxu0 %v22
    %47 = vmatmul.f32.gmra.mxu0 %v26
    %v48 = vpop.f32.mrf.mxu0
    %v49 = vadd.f32 0.0, %v48
    %50 = vmatmul.f32.gmra.mxu0 %v29
    %v51 = vpop.f32.mrf.mxu0
    %v52 = vadd.f32 0.0, %v51
    %53 = vdwg.mxu0
    %v54 = vadd.f32 %v18, %v49
    %v55 = vadd.f32 %v19, %v52
    %56 = vst [vmem:[#allocation2] sm:$0xff] %v54
    %57 = vst [vmem:[#allocation2 + $0x8] sm:$0xff] %v55
    // Predicated region
    $region14: #{_mpn_device.7} parent=1 // pred_check
      %p58 = pneg %p12
    $region15: #{_mpn_device.7} parent=1 // pred_check_branch
      %60 = sbr.rel (%p58) target = $region17
    $region16: #{_mpn_device.7} parent=1 // pred_region
      %v61 = vld [vmem:[#allocation2] sm:$0xff]
      %v62 = vld [vmem:[#allocation2 + $0x8] sm:$0xff]
      %63 = vst [vmem:[#allocation3] sm:$0xff] %v61
      %64 = vst [vmem:[#allocation3 + $0x8] sm:$0xff] %v62
    $region17: #{_mpn_device.7} parent=1 // pred_fallthru
      _
    // Predicated region
    $region18: #{_mpn_device.7} parent=1 // pred_check
      _
    $region19: #{_mpn_device.7} parent=1 // pred_check_branch
      %66 = sbr.rel (0) target = $region21
    $region20: #{_mpn_device.7} parent=1 // pred_region
      %68 = vsyncadd [#allocation4], 0
      %s69 = sshll.u32 [#allocation3], 4
      %s70 = int_to_ptr.vmem [resolvable:$true] %s69
      %s71 = sshll.u32 %s2, 4
      %s72 = int_to_ptr.hbm [resolvable:$true] %s71
      %77 = dma.vmem_to_hbm [thread:$0]  %s70, 256, %s72, [#allocation4], 128, 128, 8
    $region21: #{_mpn_device.7} parent=1 // pred_fallthru
      _
    // Predicated region
    $region22: #{_mpn_device.7} parent=1 // pred_check
      _
    $region23: #{_mpn_device.7} parent=1 // pred_check_branch
      %79 = sbr.rel (0) target = $region25
    $region24: #{_mpn_device.7} parent=1 // pred_region
      %81 = dma.done [#allocation4], 256
    $region25: #{_mpn_device.7} parent=1 // pred_fallthru
      _
    %82 = vsyncpa [#allocation4], 1

// kernel: _mpn_device.4
$region0: #{_mpn_device.4}
  #allocation0 [shape = 'u32[]', space=smem, size = 0x4, offset = 0x4, fixed_abs, tag = 'smem constant byte address 0x4 - core index']
  #allocation1 [shape = 'u32[72,128]{1,0:T(1,128)}', space=vmem, size = 0x9000, scoped, tag = 'internal scratch']
  %s0 = inlined_call_operand.hbm [shape: bf16[256,256], index: 0, kind: input, shape index: {}]
  %s1 = inlined_call_operand.hbm [shape: bf16[256,128], index: 1, kind: input, shape index: {}]
  %s2 = inlined_call_operand.vmem [shape: bf16[256,128], index: 2, kind: output, shape index: {0}]
  %s3 = inlined_call_operand.vmem [shape: bf16[256,128], index: 3, kind: output, shape index: {1}]
  %4 = xla_tuple %s2, %s3
  %s5 = sld [smem:[#allocation0]]
  $region34: #{_mpn_device.4} parent=0
    _
  %s7 = ssub.s32 1, %s5
  %s8 = scalar_select 0, %s7, %s5
  $region1: #{_mpn_device.4} parent=0
    #allocation2 [shape = 'u8[131072]{0}', space=vmem, size = 0x20000, scoped, tag = 'input window, operand 0, single buffered']
    #allocation3 [shape = 's32[1]{0}', space=sflag, size = 0x4, scoped, tag = 'scoped memory for _mpn_device.4']
    #allocation4 [shape = 'u8[65536]{0}', space=vmem, size = 0x10000, scoped, tag = 'input window, operand 1, single buffered']
    #allocation5 [shape = 's32[1]{0}', space=sflag, size = 0x4, scoped, tag = 'scoped memory for _mpn_device.4']
    %9 = vsyncpa [#allocation3], 0
    %10 = vsyncpa [#allocation5], 0
    // Predicated region
    $region2: #{_mpn_device.4} parent=1 // pred_check
      _
    $region3: #{_mpn_device.4} parent=1 // pred_check_branch
      %12 = sbr.rel (0) target = $region5
    $region4: #{_mpn_device.4} parent=1 // pred_region
      %14 = vsyncadd [#allocation3], 0
      %s15 = sshll.u32 %s0, 4
      %s16 = int_to_ptr.hbm [resolvable:$true] %s15
      %s17 = sshll.u32 [#allocation2], 4
      %s18 = int_to_ptr.vmem [resolvable:$true] %s17
      %23 = dma.hbm_to_vmem [thread:$0]  %s16, 4096, %s18, [#allocation3], 128, 128, 8
    $region5: #{_mpn_device.4} parent=1 // pred_fallthru
      _
    // Predicated region
    $region6: #{_mpn_device.4} parent=1 // pred_check
      _
    $region7: #{_mpn_device.4} parent=1 // pred_check_branch
      %25 = sbr.rel (0) target = $region9
    $region8: #{_mpn_device.4} parent=1 // pred_region
      %27 = vsyncadd [#allocation5], 0
      %s28 = sshll.u32 %s1, 4
      %s29 = int_to_ptr.hbm [resolvable:$true] %s28
      %s30 = sshll.u32 [#allocation4], 4
      %s31 = int_to_ptr.vmem [resolvable:$true] %s30
      %36 = dma.hbm_to_vmem [thread:$0]  %s29, 2048, %s31, [#allocation5], 64, 64, 4
    $region9: #{_mpn_device.4} parent=1 // pred_fallthru
      _
    // Predicated region
    $region10: #{_mpn_device.4} parent=1 // pred_check
      _
    $region11: #{_mpn_device.4} parent=1 // pred_check_branch
      %38 = sbr.rel (0) target = $region13
    $region12: #{_mpn_device.4} parent=1 // pred_region
      %40 = dma.done [#allocation3], 4096
    $region13: #{_mpn_device.4} parent=1 // pred_fallthru
      _
    // Predicated region
    $region14: #{_mpn_device.4} parent=1 // pred_check
      _
    $region15: #{_mpn_device.4} parent=1 // pred_check_branch
      %42 = sbr.rel (0) target = $region17
    $region16: #{_mpn_device.4} parent=1 // pred_region
      %44 = dma.done [#allocation5], 2048
    $region17: #{_mpn_device.4} parent=1 // pred_fallthru
      _
    %v45 = vld [vmem:[#allocation2] sm:$0xff]
    %v46 = vld [vmem:[#allocation2 + $0x8] sm:$0xff]
    %v47 = vld [vmem:[#allocation2 + $0x10] sm:$0xff]
    %v48 = vld [vmem:[#allocation2 + $0x18] sm:$0xff]
    %v49 = vld [vmem:[#allocation2 + $0x20] sm:$0xff]
    %v50 = vld [vmem:[#allocation2 + $0x28] sm:$0xff]
    %v51 = vld [vmem:[#allocation2 + $0x30] sm:$0xff]
    %v52 = vld [vmem:[#allocation2 + $0x38] sm:$0xff]
    %v53 = vld [vmem:[#allocation2 + $0x40] sm:$0xff]
    %v54 = vld [vmem:[#allocation2 + $0x48] sm:$0xff]
    %v55 = vld [vmem:[#allocation2 + $0x50] sm:$0xff]
    %v56 = vld [vmem:[#allocation2 + $0x58] sm:$0xff]
    %v57 = vld [vmem:[#allocation2 + $0x60] sm:$0xff]
    %v58 = vld [vmem:[#allocation2 + $0x68] sm:$0xff]
    %v59 = vld [vmem:[#allocation2 + $0x70] sm:$0xff]
    %v60 = vld [vmem:[#allocation2 + $0x78] sm:$0xff]
    %v61 = vld [vmem:[#allocation2 + $0x80] sm:$0xff]
    %v62 = vld [vmem:[#allocation2 + $0x88] sm:$0xff]
    %v63 = vld [vmem:[#allocation2 + $0x90] sm:$0xff]
    %v64 = vld [vmem:[#allocation2 + $0x98] sm:$0xff]
    %v65 = vld [vmem:[#allocation2 + $0xa0] sm:$0xff]
    %v66 = vld [vmem:[#allocation2 + $0xa8] sm:$0xff]
    %v67 = vld [vmem:[#allocation2 + $0xb0] sm:$0xff]
    %v68 = vld [vmem:[#allocation2 + $0xb8] sm:$0xff]
    %v69 = vld [vmem:[#allocation2 + $0xc0] sm:$0xff]
    %v70 = vld [vmem:[#allocation2 + $0xc8] sm:$0xff]
    %v71 = vld [vmem:[#allocation2 + $0xd0] sm:$0xff]
    %v72 = vld [vmem:[#allocation2 + $0xd8] sm:$0xff]
    %v73 = vld [vmem:[#allocation2 + $0xe0] sm:$0xff]
    %v74 = vld [vmem:[#allocation2 + $0xe8] sm:$0xff]
    %v75 = vld [vmem:[#allocation2 + $0xf0] sm:$0xff]
    %v76 = vld [vmem:[#allocation2 + $0xf8] sm:$0xff]
    %v77 = vld [vmem:[#allocation4] sm:$0xf]
    %v78 = vld [vmem:[#allocation4 + $0x4] sm:$0xf]
    %v79 = vld [vmem:[#allocation4 + $0x8] sm:$0xf]
    %v80 = vld [vmem:[#allocation4 + $0xc] sm:$0xf]
    %v81 = vld [vmem:[#allocation4 + $0x10] sm:$0xf]
    %v82 = vld [vmem:[#allocation4 + $0x14] sm:$0xf]
    %v83 = vld [vmem:[#allocation4 + $0x18] sm:$0xf]
    %v84 = vld [vmem:[#allocation4 + $0x1c] sm:$0xf]
    %v85 = vld [vmem:[#allocation4 + $0x20] sm:$0xf]
    %v86 = vld [vmem:[#allocation4 + $0x24] sm:$0xf]
    %v87 = vld [vmem:[#allocation4 + $0x28] sm:$0xf]
    %v88 = vld [vmem:[#allocation4 + $0x2c] sm:$0xf]
    %v89 = vld [vmem:[#allocation4 + $0x30] sm:$0xf]
    %v90 = vld [vmem:[#allocation4 + $0x34] sm:$0xf]
    %v91 = vld [vmem:[#allocation4 + $0x38] sm:$0xf]
    %v92 = vld [vmem:[#allocation4 + $0x3c] sm:$0xf]
    %v93 = vld [vmem:[#allocation4 + $0x40] sm:$0xf]
    %v94 = vld [vmem:[#allocation4 + $0x44] sm:$0xf]
    %v95 = vld [vmem:[#allocation4 + $0x48] sm:$0xf]
    %v96 = vld [vmem:[#allocation4 + $0x4c] sm:$0xf]
    %v97 = vld [vmem:[#allocation4 + $0x50] sm:$0xf]
    %v98 = vld [vmem:[#allocation4 + $0x54] sm:$0xf]
    %v99 = vld [vmem:[#allocation4 + $0x58] sm:$0xf]
    %v100 = vld [vmem:[#allocation4 + $0x5c] sm:$0xf]
    %v101 = vld [vmem:[#allocation4 + $0x60] sm:$0xf]
    %v102 = vld [vmem:[#allocation4 + $0x64] sm:$0xf]
    %v103 = vld [vmem:[#allocation4 + $0x68] sm:$0xf]
    %v104 = vld [vmem:[#allocation4 + $0x6c] sm:$0xf]
    %v105 = vld [vmem:[#allocation4 + $0x70] sm:$0xf]
    %v106 = vld [vmem:[#allocation4 + $0x74] sm:$0xf]
    %v107 = vld [vmem:[#allocation4 + $0x78] sm:$0xf]
    %v108 = vld [vmem:[#allocation4 + $0x7c] sm:$0xf]
    %v141 = vunpack.c.l.b16 %v45
    %v142 = vunpack.c.h.b16 %v45
    %v143 = vunpack.c.l.b16 %v46
    %v144 = vunpack.c.h.b16 %v46
    %v145 = vunpack.c.l.b16 %v47
    %v146 = vunpack.c.h.b16 %v47
    %v147 = vunpack.c.l.b16 %v48
    %v148 = vunpack.c.h.b16 %v48
    %v149 = vunpack.c.l.b16 %v49
    %v150 = vunpack.c.h.b16 %v49
    %v151 = vunpack.c.l.b16 %v50
    %v152 = vunpack.c.h.b16 %v50
    %v153 = vunpack.c.l.b16 %v51
    %v154 = vunpack.c.h.b16 %v51
    %v155 = vunpack.c.l.b16 %v52
    %v156 = vunpack.c.h.b16 %v52
    %v157 = vunpack.c.l.b16 %v53
    %v158 = vunpack.c.h.b16 %v53
    %v159 = vunpack.c.l.b16 %v54
    %v160 = vunpack.c.h.b16 %v54
    %v161 = vunpack.c.l.b16 %v55
    %v162 = vunpack.c.h.b16 %v55
    %v163 = vunpack.c.l.b16 %v56
    %v164 = vunpack.c.h.b16 %v56
    %v165 = vunpack.c.l.b16 %v57
    %v166 = vunpack.c.h.b16 %v57
    %v167 = vunpack.c.l.b16 %v58
    %v168 = vunpack.c.h.b16 %v58
    %v169 = vunpack.c.l.b16 %v59
    %v170 = vunpack.c.h.b16 %v59
    %v171 = vunpack.c.l.b16 %v60
    %v172 = vunpack.c.h.b16 %v60
    %v173 = vunpack.c.l.b16 %v61
    %v174 = vunpack.c.h.b16 %v61
    %v175 = vunpack.c.l.b16 %v62
    %v176 = vunpack.c.h.b16 %v62
    %v177 = vunpack.c.l.b16 %v63
    %v178 = vunpack.c.h.b16 %v63
    %v179 = vunpack.c.l.b16 %v64
    %v180 = vunpack.c.h.b16 %v64
    %v181 = vunpack.c.l.b16 %v65
    %v182 = vunpack.c.h.b16 %v65
    %v183 = vunpack.c.l.b16 %v66
    %v184 = vunpack.c.h.b16 %v66
    %v185 = vunpack.c.l.b16 %v67
    %v186 = vunpack.c.h.b16 %v67
    %v187 = vunpack.c.l.b16 %v68
    %v188 = vunpack.c.h.b16 %v68
    %v189 = vunpack.c.l.b16 %v69
    %v190 = vunpack.c.h.b16 %v69
    %v191 = vunpack.c.l.b16 %v70
    %v192 = vunpack.c.h.b16 %v70
    %v193 = vunpack.c.l.b16 %v71
    %v194 = vunpack.c.h.b16 %v71
    %v195 = vunpack.c.l.b16 %v72
    %v196 = vunpack.c.h.b16 %v72
    %v197 = vunpack.c.l.b16 %v73
    %v198 = vunpack.c.h.b16 %v73
    %v199 = vunpack.c.l.b16 %v74
    %v200 = vunpack.c.h.b16 %v74
    %v201 = vunpack.c.l.b16 %v75
    %v202 = vunpack.c.h.b16 %v75
    %v203 = vunpack.c.l.b16 %v76
    %v204 = vunpack.c.h.b16 %v76
    %v205 = vpack.c.b16 %v143, %v141
    %v206 = vpack.c.b16 %v144, %v142
    %v207 = vpack.c.b16 %v147, %v145
    %v208 = vpack.c.b16 %v148, %v146
    %v209 = vpack.c.b16 %v151, %v149
    %v210 = vpack.c.b16 %v152, %v150
    %v211 = vpack.c.b16 %v155, %v153
    %v212 = vpack.c.b16 %v156, %v154
    %v213 = vpack.c.b16 %v159, %v157
    %v214 = vpack.c.b16 %v160, %v158
    %v215 = vpack.c.b16 %v163, %v161
    %v216 = vpack.c.b16 %v164, %v162
    %v217 = vpack.c.b16 %v167, %v165
    %v218 = vpack.c.b16 %v168, %v166
    %v219 = vpack.c.b16 %v171, %v169
    %v220 = vpack.c.b16 %v172, %v170
    %v221 = vpack.c.b16 %v175, %v173
    %v222 = vpack.c.b16 %v176, %v174
    %v223 = vpack.c.b16 %v179, %v177
    %v224 = vpack.c.b16 %v180, %v178
    %v225 = vpack.c.b16 %v183, %v181
    %v226 = vpack.c.b16 %v184, %v182
    %v227 = vpack.c.b16 %v187, %v185
    %v228 = vpack.c.b16 %v188, %v186
    %v229 = vpack.c.b16 %v191, %v189
    %v230 = vpack.c.b16 %v192, %v190
    %v231 = vpack.c.b16 %v195, %v193
    %v232 = vpack.c.b16 %v196, %v194
    %v233 = vpack.c.b16 %v199, %v197
    %v234 = vpack.c.b16 %v200, %v198
    %v235 = vpack.c.b16 %v203, %v201
    %v236 = vpack.c.b16 %v204, %v202
    %v301 = vunpack.c.l.b16 %v77
    %v302 = vunpack.c.l.b16 %v78
    %v303 = vunpack.c.l.b16 %v79
    %v304 = vunpack.c.l.b16 %v80
    %v305 = vunpack.c.l.b16 %v81
    %v306 = vunpack.c.l.b16 %v82
    %v307 = vunpack.c.l.b16 %v83
    %v308 = vunpack.c.l.b16 %v84
    %v309 = vunpack.c.l.b16 %v85
    %v310 = vunpack.c.l.b16 %v86
    %v311 = vunpack.c.l.b16 %v87
    %v312 = vunpack.c.l.b16 %v88
    %v313 = vunpack.c.l.b16 %v89
    %v314 = vunpack.c.l.b16 %v90
    %v315 = vunpack.c.l.b16 %v91
    %v316 = vunpack.c.l.b16 %v92
    %v317 = vunpack.c.l.b16 %v93
    %v318 = vunpack.c.l.b16 %v94
    %v319 = vunpack.c.l.b16 %v95
    %v320 = vunpack.c.l.b16 %v96
    %v321 = vunpack.c.l.b16 %v97
    %v322 = vunpack.c.l.b16 %v98
    %v323 = vunpack.c.l.b16 %v99
    %v324 = vunpack.c.l.b16 %v100
    %v325 = vunpack.c.l.b16 %v101
    %v326 = vunpack.c.l.b16 %v102
    %v327 = vunpack.c.l.b16 %v103
    %v328 = vunpack.c.l.b16 %v104
    %v329 = vunpack.c.l.b16 %v105
    %v330 = vunpack.c.l.b16 %v106
    %v331 = vunpack.c.l.b16 %v107
    %v332 = vunpack.c.l.b16 %v108
    %v333 = vpack.c.b16 %v302, %v301
    %v334 = vpack.c.b16 %v304, %v303
    %v335 = vpack.c.b16 %v306, %v305
    %v336 = vpack.c.b16 %v308, %v307
    %v337 = vpack.c.b16 %v310, %v309
    %v338 = vpack.c.b16 %v312, %v311
    %v339 = vpack.c.b16 %v314, %v313
    %v340 = vpack.c.b16 %v316, %v315
    %v341 = vpack.c.b16 %v318, %v317
    %v342 = vpack.c.b16 %v320, %v319
    %v343 = vpack.c.b16 %v322, %v321
    %v344 = vpack.c.b16 %v324, %v323
    %v345 = vpack.c.b16 %v326, %v325
    %v346 = vpack.c.b16 %v328, %v327
    %v347 = vpack.c.b16 %v330, %v329
    %v348 = vpack.c.b16 %v332, %v331
    %365 = vmatpush.bf16.msra.mxu0 %v340
    %366 = vmatpush.bf16.msra.mxu0 %v339
    %367 = vmatpush.bf16.msra.mxu0 %v338
    %368 = vmatpush.bf16.msra.mxu0 %v337
    %369 = vmatpush.bf16.msra.mxu0 %v336
    %370 = vmatpush.bf16.msra.mxu0 %v335
    %371 = vmatpush.bf16.msra.mxu0 %v334
    %372 = vmatpush.bf16.msra.mxu0 %v333
    %373 = vmatmul.bf16.gmra.mxu0 %v205
    %v374 = vpop.f32.mrf.mxu0
    %v375 = vadd.f32 0.0, %v374
    %v376 = vpop.f32.mrf.mxu0
    %v377 = vadd.f32 0.0, %v376
    %378 = vmatmul.bf16.gmra.mxu0 %v207
    %v379 = vpop.f32.mrf.mxu0
    %v380 = vadd.f32 0.0, %v379
    %v381 = vpop.f32.mrf.mxu0
    %v382 = vadd.f32 0.0, %v381
    %383 = vmatmul.bf16.gmra.mxu0 %v209
    %v384 = vpop.f32.mrf.mxu0
    %v385 = vadd.f32 0.0, %v384
    %v386 = vpop.f32.mrf.mxu0
    %v387 = vadd.f32 0.0, %v386
    %388 = vmatmul.bf16.gmra.mxu0 %v211
    %v389 = vpop.f32.mrf.mxu0
    %v390 = vadd.f32 0.0, %v389
    %v391 = vpop.f32.mrf.mxu0
    %v392 = vadd.f32 0.0, %v391
    %393 = vmatmul.bf16.gmra.mxu0 %v213
    %v394 = vpop.f32.mrf.mxu0
    %v395 = vadd.f32 0.0, %v394
    %v396 = vpop.f32.mrf.mxu0
    %v397 = vadd.f32 0.0, %v396
    %398 = vmatmul.bf16.gmra.mxu0 %v215
    %v399 = vpop.f32.mrf.mxu0
    %v400 = vadd.f32 0.0, %v399
    %v401 = vpop.f32.mrf.mxu0
    %v402 = vadd.f32 0.0, %v401
    %403 = vmatmul.bf16.gmra.mxu0 %v217
    %v404 = vpop.f32.mrf.mxu0
    %v405 = vadd.f32 0.0, %v404
    %v406 = vpop.f32.mrf.mxu0
    %v407 = vadd.f32 0.0, %v406
    %408 = vmatmul.bf16.gmra.mxu0 %v219
    %v409 = vpop.f32.mrf.mxu0
    %v410 = vadd.f32 0.0, %v409
    %v411 = vpop.f32.mrf.mxu0
    %v412 = vadd.f32 0.0, %v411
    %413 = vmatmul.bf16.gmra.mxu0 %v221
    %v414 = vpop.f32.mrf.mxu0
    %v415 = vadd.f32 0.0, %v414
    %v416 = vpop.f32.mrf.mxu0
    %v417 = vadd.f32 0.0, %v416
    %418 = vmatmul.bf16.gmra.mxu0 %v223
    %v419 = vpop.f32.mrf.mxu0
    %v420 = vadd.f32 0.0, %v419
    %v421 = vpop.f32.mrf.mxu0
    %v422 = vadd.f32 0.0, %v421
    %423 = vmatmul.bf16.gmra.mxu0 %v225
    %v424 = vpop.f32.mrf.mxu0
    %v425 = vadd.f32 0.0, %v424
    %v426 = vpop.f32.mrf.mxu0
    %v427 = vadd.f32 0.0, %v426
    %428 = vmatmul.bf16.gmra.mxu0 %v227
    %v429 = vpop.f32.mrf.mxu0
    %v430 = vadd.f32 0.0, %v429
    %v431 = vpop.f32.mrf.mxu0
    %v432 = vadd.f32 0.0, %v431
    %433 = vmatmul.bf16.gmra.mxu0 %v229
    %v434 = vpop.f32.mrf.mxu0
    %v435 = vadd.f32 0.0, %v434
    %v436 = vpop.f32.mrf.mxu0
    %v437 = vadd.f32 0.0, %v436
    %438 = vmatmul.bf16.gmra.mxu0 %v231
    %v439 = vpop.f32.mrf.mxu0
    %v440 = vadd.f32 0.0, %v439
    %v441 = vpop.f32.mrf.mxu0
    %v442 = vadd.f32 0.0, %v441
    %443 = vmatmul.bf16.gmra.mxu0 %v233
    %v444 = vpop.f32.mrf.mxu0
    %v445 = vadd.f32 0.0, %v444
    %v446 = vpop.f32.mrf.mxu0
    %v447 = vadd.f32 0.0, %v446
    %448 = vmatmul.bf16.gmra.mxu0 %v235
    %v449 = vpop.f32.mrf.mxu0
    %v450 = vadd.f32 0.0, %v449
    %v451 = vpop.f32.mrf.mxu0
    %v452 = vadd.f32 0.0, %v451
    %453 = vdwg.mxu0
    %454 = vmatpush.bf16.msra.mxu0 %v348
    %455 = vmatpush.bf16.msra.mxu0 %v347
    %456 = vmatpush.bf16.msra.mxu0 %v346
    %457 = vmatpush.bf16.msra.mxu0 %v345
    %458 = vmatpush.bf16.msra.mxu0 %v344
    %459 = vmatpush.bf16.msra.mxu0 %v343
    %460 = vmatpush.bf16.msra.mxu0 %v342
    %461 = vmatpush.bf16.msra.mxu0 %v341
    %462 = vmatmul.bf16.gmra.mxu0 %v206
    %v463 = vpop.f32.mrf.mxu0
    %v464 = vadd.f32 %v375, %v463
    %v465 = vpop.f32.mrf.mxu0
    %v466 = vadd.f32 %v377, %v465
    %467 = vmatmul.bf16.gmra.mxu0 %v208
    %v468 = vpop.f32.mrf.mxu0
    %v469 = vadd.f32 %v380, %v468
    %v470 = vpop.f32.mrf.mxu0
    %v471 = vadd.f32 %v382, %v470
    %472 = vmatmul.bf16.gmra.mxu0 %v210
    %v473 = vpop.f32.mrf.mxu0
    %v474 = vadd.f32 %v385, %v473
    %v475 = vpop.f32.mrf.mxu0
    %v476 = vadd.f32 %v387, %v475
    %477 = vmatmul.bf16.gmra.mxu0 %v212
    %v478 = vpop.f32.mrf.mxu0
    %v479 = vadd.f32 %v390, %v478
    %v480 = vpop.f32.mrf.mxu0
    %v481 = vadd.f32 %v392, %v480
    %482 = vmatmul.bf16.gmra.mxu0 %v214
    %v483 = vpop.f32.mrf.mxu0
    %v484 = vadd.f32 %v395, %v483
    %v485 = vpop.f32.mrf.mxu0
    %v486 = vadd.f32 %v397, %v485
    %487 = vmatmul.bf16.gmra.mxu0 %v216
    %v488 = vpop.f32.mrf.mxu0
    %v489 = vadd.f32 %v400, %v488
    %v490 = vpop.f32.mrf.mxu0
    %v491 = vadd.f32 %v402, %v490
    %492 = vmatmul.bf16.gmra.mxu0 %v218
    %v493 = vpop.f32.mrf.mxu0
    %v494 = vadd.f32 %v405, %v493
    %v495 = vpop.f32.mrf.mxu0
    %v496 = vadd.f32 %v407, %v495
    %497 = vmatmul.bf16.gmra.mxu0 %v220
    %v498 = vpop.f32.mrf.mxu0
    %v499 = vadd.f32 %v410, %v498
    %v500 = vpop.f32.mrf.mxu0
    %v501 = vadd.f32 %v412, %v500
    %502 = vmatmul.bf16.gmra.mxu0 %v222
    %v503 = vpop.f32.mrf.mxu0
    %v504 = vadd.f32 %v415, %v503
    %v505 = vpop.f32.mrf.mxu0
    %v506 = vadd.f32 %v417, %v505
    %507 = vmatmul.bf16.gmra.mxu0 %v224
    %v508 = vpop.f32.mrf.mxu0
    %v509 = vadd.f32 %v420, %v508
    %v510 = vpop.f32.mrf.mxu0
    %v511 = vadd.f32 %v422, %v510
    %512 = vmatmul.bf16.gmra.mxu0 %v226
    %v513 = vpop.f32.mrf.mxu0
    %v514 = vadd.f32 %v425, %v513
    %v515 = vpop.f32.mrf.mxu0
    %v516 = vadd.f32 %v427, %v515
    %517 = vmatmul.bf16.gmra.mxu0 %v228
    %v518 = vpop.f32.mrf.mxu0
    %v519 = vadd.f32 %v430, %v518
    %v520 = vpop.f32.mrf.mxu0
    %v521 = vadd.f32 %v432, %v520
    %522 = vmatmul.bf16.gmra.mxu0 %v230
    %v523 = vpop.f32.mrf.mxu0
    %v524 = vadd.f32 %v435, %v523
    %v525 = vpop.f32.mrf.mxu0
    %v526 = vadd.f32 %v437, %v525
    %527 = vmatmul.bf16.gmra.mxu0 %v232
    %v528 = vpop.f32.mrf.mxu0
    %v529 = vadd.f32 %v440, %v528
    %v530 = vpop.f32.mrf.mxu0
    %v531 = vadd.f32 %v442, %v530
    %532 = vmatmul.bf16.gmra.mxu0 %v234
    %v533 = vpop.f32.mrf.mxu0
    %v534 = vadd.f32 %v445, %v533
    %v535 = vpop.f32.mrf.mxu0
    %v536 = vadd.f32 %v447, %v535
    %537 = vmatmul.bf16.gmra.mxu0 %v236
    %v538 = vpop.f32.mrf.mxu0
    %v539 = vadd.f32 %v450, %v538
    %v540 = vpop.f32.mrf.mxu0
    %v541 = vadd.f32 %v452, %v540
    %542 = vdwg.mxu0
    %v543 = vpack.c.bf16 %v464, %v464
    %v544 = vpack.c.bf16 %v466, %v466
    %v545 = vpack.c.bf16 %v469, %v469
    %v546 = vpack.c.bf16 %v471, %v471
    %v547 = vpack.c.bf16 %v474, %v474
    %v548 = vpack.c.bf16 %v476, %v476
    %v549 = vpack.c.bf16 %v479, %v479
    %v550 = vpack.c.bf16 %v481, %v481
    %v551 = vpack.c.bf16 %v484, %v484
    %v552 = vpack.c.bf16 %v486, %v486
    %v553 = vpack.c.bf16 %v489, %v489
    %v554 = vpack.c.bf16 %v491, %v491
    %v555 = vpack.c.bf16 %v494, %v494
    %v556 = vpack.c.bf16 %v496, %v496
    %v557 = vpack.c.bf16 %v499, %v499
    %v558 = vpack.c.bf16 %v501, %v501
    %v559 = vpack.c.bf16 %v504, %v504
    %v560 = vpack.c.bf16 %v506, %v506
    %v561 = vpack.c.bf16 %v509, %v509
    %v562 = vpack.c.bf16 %v511, %v511
    %v563 = vpack.c.bf16 %v514, %v514
    %v564 = vpack.c.bf16 %v516, %v516
    %v565 = vpack.c.bf16 %v519, %v519
    %v566 = vpack.c.bf16 %v521, %v521
    %v567 = vpack.c.bf16 %v524, %v524
    %v568 = vpack.c.bf16 %v526, %v526
    %v569 = vpack.c.bf16 %v529, %v529
    %v570 = vpack.c.bf16 %v531, %v531
    %v571 = vpack.c.bf16 %v534, %v534
    %v572 = vpack.c.bf16 %v536, %v536
    %v573 = vpack.c.bf16 %v539, %v539
    %v574 = vpack.c.bf16 %v541, %v541
    %575 = vst [vmem:[%s2] sm:$0xf] %v543
    %576 = vst [vmem:[%s2 + $0x4] sm:$0xf] %v544
    %577 = vst [vmem:[%s2 + $0x8] sm:$0xf] %v545
    %578 = vst [vmem:[%s2 + $0xc] sm:$0xf] %v546
    %579 = vst [vmem:[%s2 + $0x10] sm:$0xf] %v547
    %580 = vst [vmem:[%s2 + $0x14] sm:$0xf] %v548
    %581 = vst [vmem:[%s2 + $0x18] sm:$0xf] %v549
    %582 = vst [vmem:[%s2 + $0x1c] sm:$0xf] %v550
    %583 = vst [vmem:[%s2 + $0x20] sm:$0xf] %v551
    %584 = vst [vmem:[%s2 + $0x24] sm:$0xf] %v552
    %585 = vst [vmem:[%s2 + $0x28] sm:$0xf] %v553
    %586 = vst [vmem:[%s2 + $0x2c] sm:$0xf] %v554
    %587 = vst [vmem:[%s2 + $0x30] sm:$0xf] %v555
    %588 = vst [vmem:[%s2 + $0x34] sm:$0xf] %v556
    %589 = vst [vmem:[%s2 + $0x38] sm:$0xf] %v557
    %590 = vst [vmem:[%s2 + $0x3c] sm:$0xf] %v558
    %591 = vst [vmem:[%s2 + $0x40] sm:$0xf] %v559
    %592 = vst [vmem:[%s2 + $0x44] sm:$0xf] %v560
    %593 = vst [vmem:[%s2 + $0x48] sm:$0xf] %v561
    %594 = vst [vmem:[%s2 + $0x4c] sm:$0xf] %v562
    %595 = vst [vmem:[%s2 + $0x50] sm:$0xf] %v563
    %596 = vst [vmem:[%s2 + $0x54] sm:$0xf] %v564
    %597 = vst [vmem:[%s2 + $0x58] sm:$0xf] %v565
    %598 = vst [vmem:[%s2 + $0x5c] sm:$0xf] %v566
    %599 = vst [vmem:[%s2 + $0x60] sm:$0xf] %v567
    %600 = vst [vmem:[%s2 + $0x64] sm:$0xf] %v568
    %601 = vst [vmem:[%s2 + $0x68] sm:$0xf] %v569
    %602 = vst [vmem:[%s2 + $0x6c] sm:$0xf] %v570
    %603 = vst [vmem:[%s2 + $0x70] sm:$0xf] %v571
    %604 = vst [vmem:[%s2 + $0x74] sm:$0xf] %v572
    %605 = vst [vmem:[%s2 + $0x78] sm:$0xf] %v573
    %606 = vst [vmem:[%s2 + $0x7c] sm:$0xf] %v574
    %v607 = vmax.f32 %v464, 0.0
    %v608 = vmax.f32 %v466, 0.0
    %v609 = vmax.f32 %v469, 0.0
    %v610 = vmax.f32 %v471, 0.0
    %v611 = vmax.f32 %v474, 0.0
    %v612 = vmax.f32 %v476, 0.0
    %v613 = vmax.f32 %v479, 0.0
    %v614 = vmax.f32 %v481, 0.0
    %v615 = vmax.f32 %v484, 0.0
    %v616 = vmax.f32 %v486, 0.0
    %v617 = vmax.f32 %v489, 0.0
    %v618 = vmax.f32 %v491, 0.0
    %v619 = vmax.f32 %v494, 0.0
    %v620 = vmax.f32 %v496, 0.0
    %v621 = vmax.f32 %v499, 0.0
    %v622 = vmax.f32 %v501, 0.0
    %v623 = vmax.f32 %v504, 0.0
    %v624 = vmax.f32 %v506, 0.0
    %v625 = vmax.f32 %v509, 0.0
    %v626 = vmax.f32 %v511, 0.0
    %v627 = vmax.f32 %v514, 0.0
    %v628 = vmax.f32 %v516, 0.0
    %v629 = vmax.f32 %v519, 0.0
    %v630 = vmax.f32 %v521, 0.0
    %v631 = vmax.f32 %v524, 0.0
    %v632 = vmax.f32 %v526, 0.0
    %v633 = vmax.f32 %v529, 0.0
    %v634 = vmax.f32 %v531, 0.0
    %v635 = vmax.f32 %v534, 0.0
    %v636 = vmax.f32 %v536, 0.0
    %v637 = vmax.f32 %v539, 0.0
    %v638 = vmax.f32 %v541, 0.0
    %v639 = vpack.c.bf16 %v607, %v607
    %v640 = vpack.c.bf16 %v608, %v608
    %v641 = vpack.c.bf16 %v609, %v609
    %v642 = vpack.c.bf16 %v610, %v610
    %v643 = vpack.c.bf16 %v611, %v611
    %v644 = vpack.c.bf16 %v612, %v612
    %v645 = vpack.c.bf16 %v613, %v613
    %v646 = vpack.c.bf16 %v614, %v614
    %v647 = vpack.c.bf16 %v615, %v615
    %v648 = vpack.c.bf16 %v616, %v616
    %v649 = vpack.c.bf16 %v617, %v617
    %v650 = vpack.c.bf16 %v618, %v618
    %v651 = vpack.c.bf16 %v619, %v619
    %v652 = vpack.c.bf16 %v620, %v620
    %v653 = vpack.c.bf16 %v621, %v621
    %v654 = vpack.c.bf16 %v622, %v622
    %v655 = vpack.c.bf16 %v623, %v623
    %v656 = vpack.c.bf16 %v624, %v624
    %v657 = vpack.c.bf16 %v625, %v625
    %v658 = vpack.c.bf16 %v626, %v626
    %v659 = vpack.c.bf16 %v627, %v627
    %v660 = vpack.c.bf16 %v628, %v628
    %v661 = vpack.c.bf16 %v629, %v629
    %v662 = vpack.c.bf16 %v630, %v630
    %v663 = vpack.c.bf16 %v631, %v631
    %v664 = vpack.c.bf16 %v632, %v632
    %v665 = vpack.c.bf16 %v633, %v633
    %v666 = vpack.c.bf16 %v634, %v634
    %v667 = vpack.c.bf16 %v635, %v635
    %v668 = vpack.c.bf16 %v636, %v636
    %v669 = vpack.c.bf16 %v637, %v637
    %v670 = vpack.c.bf16 %v638, %v638
    %671 = vst [vmem:[%s3] sm:$0xf] %v639
    %672 = vst [vmem:[%s3 + $0x4] sm:$0xf] %v640
    %673 = vst [vmem:[%s3 + $0x8] sm:$0xf] %v641
    %674 = vst [vmem:[%s3 + $0xc] sm:$0xf] %v642
    %675 = vst [vmem:[%s3 + $0x10] sm:$0xf] %v643
    %676 = vst [vmem:[%s3 + $0x14] sm:$0xf] %v644
    %677 = vst [vmem:[%s3 + $0x18] sm:$0xf] %v645
    %678 = vst [vmem:[%s3 + $0x1c] sm:$0xf] %v646
    %679 = vst [vmem:[%s3 + $0x20] sm:$0xf] %v647
    %680 = vst [vmem:[%s3 + $0x24] sm:$0xf] %v648
    %681 = vst [vmem:[%s3 + $0x28] sm:$0xf] %v649
    %682 = vst [vmem:[%s3 + $0x2c] sm:$0xf] %v650
    %683 = vst [vmem:[%s3 + $0x30] sm:$0xf] %v651
    %684 = vst [vmem:[%s3 + $0x34] sm:$0xf] %v652
    %685 = vst [vmem:[%s3 + $0x38] sm:$0xf] %v653
    %686 = vst [vmem:[%s3 + $0x3c] sm:$0xf] %v654
    %687 = vst [vmem:[%s3 + $0x40] sm:$0xf] %v655
    %688 = vst [vmem:[%s3 + $0x44] sm:$0xf] %v656
    %689 = vst [vmem:[%s3 + $0x48] sm:$0xf] %v657
    %690 = vst [vmem:[%s3 + $0x4c] sm:$0xf] %v658
    %691 = vst [vmem:[%s3 + $0x50] sm:$0xf] %v659
    %692 = vst [vmem:[%s3 + $0x54] sm:$0xf] %v660
    %693 = vst [vmem:[%s3 + $0x58] sm:$0xf] %v661
    %694 = vst [vmem:[%s3 + $0x5c] sm:$0xf] %v662
    %695 = vst [vmem:[%s3 + $0x60] sm:$0xf] %v663
    %696 = vst [vmem:[%s3 + $0x64] sm:$0xf] %v664
    %697 = vst [vmem:[%s3 + $0x68] sm:$0xf] %v665
    %698 = vst [vmem:[%s3 + $0x6c] sm:$0xf] %v666
    %699 = vst [vmem:[%s3 + $0x70] sm:$0xf] %v667
    %700 = vst [vmem:[%s3 + $0x74] sm:$0xf] %v668
    %701 = vst [vmem:[%s3 + $0x78] sm:$0xf] %v669
    %702 = vst [vmem:[%s3 + $0x7c] sm:$0xf] %v670
    // Predicated region
    $region18: #{_mpn_device.4} parent=1 // pred_check
      _
    $region19: #{_mpn_device.4} parent=1 // pred_check_branch
      %704 = sbr.rel (0) target = $region21
    $region20: #{_mpn_device.4} parent=1 // pred_region
      _
    $region21: #{_mpn_device.4} parent=1 // pred_fallthru
      _
    // Predicated region
    $region22: #{_mpn_device.4} parent=1 // pred_check
      _
    $region23: #{_mpn_device.4} parent=1 // pred_check_branch
      %706 = sbr.rel (0) target = $region25
    $region24: #{_mpn_device.4} parent=1 // pred_region
      _
    $region25: #{_mpn_device.4} parent=1 // pred_fallthru
      _
    // Predicated region
    $region26: #{_mpn_device.4} parent=1 // pred_check
      _
    $region27: #{_mpn_device.4} parent=1 // pred_check_branch
      %708 = sbr.rel (0) target = $region29
    $region28: #{_mpn_device.4} parent=1 // pred_region
      _
    $region29: #{_mpn_device.4} parent=1 // pred_fallthru
      _
    // Predicated region
    $region30: #{_mpn_device.4} parent=1 // pred_check
      _
    $region31: #{_mpn_device.4} parent=1 // pred_check_branch
      %710 = sbr.rel (0) target = $region33
    $region32: #{_mpn_device.4} parent=1 // pred_region
      _
    $region33: #{_mpn_device.4} parent=1 // pred_fallthru
      _
    %711 = vsyncpa [#allocation3], 1
    %712 = vsyncpa [#allocation5], 1

// kernel: _mpn_device.6
$region0: #{_mpn_device.6}
  #allocation0 [shape = 'u32[]', space=smem, size = 0x4, offset = 0x4, fixed_abs, tag = 'smem constant byte address 0x4 - core index']
  #allocation1 [shape = 'u32[72,128]{1,0:T(1,128)}', space=vmem, size = 0x9000, scoped, tag = 'internal scratch']
  #allocation2 [shape = 'f32[16,128]{1,0:T(8,128)}', space=vmem, size = 0x2000, scoped, tag = 'scratch operand']
  %s0 = inlined_call_operand.vmem [shape: bf16[16,256], index: 0, kind: input, shape index: {}]
  %s1 = inlined_call_operand.vmem [shape: bf16[256,128], index: 1, kind: input, shape index: {}]
  %s2 = inlined_call_operand.vmem [shape: bf16[16,256], index: 2, kind: input, shape index: {}]
  %s3 = inlined_call_operand.vmem [shape: bf16[256,128], index: 3, kind: input, shape index: {}]
  %s4 = inlined_call_operand.vmem [shape: bf16[128,128], index: 4, kind: input, shape index: {}]
  %s5 = inlined_call_operand.vmem [shape: f32[1,128], index: 5, kind: input, shape index: {}]
  %s6 = inlined_call_operand.vmem [shape: f32[16,128], index: 6, kind: output, shape index: {}]
  %s7 = sld [smem:[#allocation0]]
  $region42: #{_mpn_device.6} parent=0
    _
  %s9 = ssub.s32 1, %s7
  %s10 = scalar_select 0, %s9, %s7
  // Predicated region
  $region2: #{_mpn_device.6} parent=0 // pred_check
    _
  $region3: #{_mpn_device.6} parent=0 // pred_check_branch
    %12 = sbr.rel (0) target = $region5
  $region4: #{_mpn_device.6} parent=0 // pred_region
    _
  $region5: #{_mpn_device.6} parent=0 // pred_fallthru
    _
  // Predicated region
  $region6: #{_mpn_device.6} parent=0 // pred_check
    _
  $region7: #{_mpn_device.6} parent=0 // pred_check_branch
    %14 = sbr.rel (0) target = $region9
  $region8: #{_mpn_device.6} parent=0 // pred_region
    _
  $region9: #{_mpn_device.6} parent=0 // pred_fallthru
    _
  // Predicated region
  $region10: #{_mpn_device.6} parent=0 // pred_check
    _
  $region11: #{_mpn_device.6} parent=0 // pred_check_branch
    %16 = sbr.rel (0) target = $region13
  $region12: #{_mpn_device.6} parent=0 // pred_region
    _
  $region13: #{_mpn_device.6} parent=0 // pred_fallthru
    _
  // Predicated region
  $region14: #{_mpn_device.6} parent=0 // pred_check
    _
  $region15: #{_mpn_device.6} parent=0 // pred_check_branch
    %18 = sbr.rel (0) target = $region17
  $region16: #{_mpn_device.6} parent=0 // pred_region
    _
  $region17: #{_mpn_device.6} parent=0 // pred_fallthru
    _
  // Predicated region
  $region18: #{_mpn_device.6} parent=0 // pred_check
    _
  $region19: #{_mpn_device.6} parent=0 // pred_check_branch
    %20 = sbr.rel (0) target = $region21
  $region20: #{_mpn_device.6} parent=0 // pred_region
    _
  $region21: #{_mpn_device.6} parent=0 // pred_fallthru
    _
  // Predicated region
  $region22: #{_mpn_device.6} parent=0 // pred_check
    _
  $region23: #{_mpn_device.6} parent=0 // pred_check_branch
    %22 = sbr.rel (0) target = $region25
  $region24: #{_mpn_device.6} parent=0 // pred_region
    _
  $region25: #{_mpn_device.6} parent=0 // pred_fallthru
    _
  %p23 = scmp.eq.s32.totalorder 0, 0
  // Predicated region
  $region26: #{_mpn_device.6} parent=0 // pred_check
    %p24 = pneg %p23
  $region27: #{_mpn_device.6} parent=0 // pred_check_branch
    %26 = sbr.rel (%p24) target = $region29
  $region28: #{_mpn_device.6} parent=0 // pred_region
    %27 = vst [vmem:[#allocation2] sm:$0xff] 0.0
    %28 = vst [vmem:[#allocation2 + $0x8] sm:$0xff] 0.0
  $region29: #{_mpn_device.6} parent=0 // pred_fallthru
    _
  %v29 = vld [vmem:[#allocation2] sm:$0xff]
  %v30 = vld [vmem:[#allocation2 + $0x8] sm:$0xff]
  %v31 = vld [vmem:[%s0] sm:$0xff]
  %v32 = vld [vmem:[%s0 + $0x8] sm:$0xff]
  %v33 = vld [vmem:[%s1] sm:$0xf]
  %v34 = vld [vmem:[%s1 + $0x4] sm:$0xf]
  %v35 = vld [vmem:[%s1 + $0x8] sm:$0xf]
  %v36 = vld [vmem:[%s1 + $0xc] sm:$0xf]
  %v37 = vld [vmem:[%s1 + $0x10] sm:$0xf]
  %v38 = vld [vmem:[%s1 + $0x14] sm:$0xf]
  %v39 = vld [vmem:[%s1 + $0x18] sm:$0xf]
  %v40 = vld [vmem:[%s1 + $0x1c] sm:$0xf]
  %v41 = vld [vmem:[%s1 + $0x20] sm:$0xf]
  %v42 = vld [vmem:[%s1 + $0x24] sm:$0xf]
  %v43 = vld [vmem:[%s1 + $0x28] sm:$0xf]
  %v44 = vld [vmem:[%s1 + $0x2c] sm:$0xf]
  %v45 = vld [vmem:[%s1 + $0x30] sm:$0xf]
  %v46 = vld [vmem:[%s1 + $0x34] sm:$0xf]
  %v47 = vld [vmem:[%s1 + $0x38] sm:$0xf]
  %v48 = vld [vmem:[%s1 + $0x3c] sm:$0xf]
  %v49 = vld [vmem:[%s1 + $0x40] sm:$0xf]
  %v50 = vld [vmem:[%s1 + $0x44] sm:$0xf]
  %v51 = vld [vmem:[%s1 + $0x48] sm:$0xf]
  %v52 = vld [vmem:[%s1 + $0x4c] sm:$0xf]
  %v53 = vld [vmem:[%s1 + $0x50] sm:$0xf]
  %v54 = vld [vmem:[%s1 + $0x54] sm:$0xf]
  %v55 = vld [vmem:[%s1 + $0x58] sm:$0xf]
  %v56 = vld [vmem:[%s1 + $0x5c] sm:$0xf]
  %v57 = vld [vmem:[%s1 + $0x60] sm:$0xf]
  %v58 = vld [vmem:[%s1 + $0x64] sm:$0xf]
  %v59 = vld [vmem:[%s1 + $0x68] sm:$0xf]
  %v60 = vld [vmem:[%s1 + $0x6c] sm:$0xf]
  %v61 = vld [vmem:[%s1 + $0x70] sm:$0xf]
  %v62 = vld [vmem:[%s1 + $0x74] sm:$0xf]
  %v63 = vld [vmem:[%s1 + $0x78] sm:$0xf]
  %v64 = vld [vmem:[%s1 + $0x7c] sm:$0xf]
  %v67 = vunpack.c.l.b16 %v31
  %v68 = vunpack.c.h.b16 %v31
  %v69 = vunpack.c.l.b16 %v32
  %v70 = vunpack.c.h.b16 %v32
  %v71 = vpack.c.b16 %v69, %v67
  %v72 = vpack.c.b16 %v70, %v68
  %v107 = vunpack.c.l.b16 %v33
  %v108 = vunpack.c.l.b16 %v34
  %v109 = vunpack.c.l.b16 %v35
  %v110 = vunpack.c.l.b16 %v36
  %v111 = vunpack.c.l.b16 %v37
  %v112 = vunpack.c.l.b16 %v38
  %v113 = vunpack.c.l.b16 %v39
  %v114 = vunpack.c.l.b16 %v40
  %v115 = vunpack.c.l.b16 %v41
  %v116 = vunpack.c.l.b16 %v42
  %v117 = vunpack.c.l.b16 %v43
  %v118 = vunpack.c.l.b16 %v44
  %v119 = vunpack.c.l.b16 %v45
  %v120 = vunpack.c.l.b16 %v46
  %v121 = vunpack.c.l.b16 %v47
  %v122 = vunpack.c.l.b16 %v48
  %v123 = vunpack.c.l.b16 %v49
  %v124 = vunpack.c.l.b16 %v50
  %v125 = vunpack.c.l.b16 %v51
  %v126 = vunpack.c.l.b16 %v52
  %v127 = vunpack.c.l.b16 %v53
  %v128 = vunpack.c.l.b16 %v54
  %v129 = vunpack.c.l.b16 %v55
  %v130 = vunpack.c.l.b16 %v56
  %v131 = vunpack.c.l.b16 %v57
  %v132 = vunpack.c.l.b16 %v58
  %v133 = vunpack.c.l.b16 %v59
  %v134 = vunpack.c.l.b16 %v60
  %v135 = vunpack.c.l.b16 %v61
  %v136 = vunpack.c.l.b16 %v62
  %v137 = vunpack.c.l.b16 %v63
  %v138 = vunpack.c.l.b16 %v64
  %v139 = vpack.c.b16 %v108, %v107
  %v140 = vpack.c.b16 %v110, %v109
  %v141 = vpack.c.b16 %v112, %v111
  %v142 = vpack.c.b16 %v114, %v113
  %v143 = vpack.c.b16 %v116, %v115
  %v144 = vpack.c.b16 %v118, %v117
  %v145 = vpack.c.b16 %v120, %v119
  %v146 = vpack.c.b16 %v122, %v121
  %v147 = vpack.c.b16 %v124, %v123
  %v148 = vpack.c.b16 %v126, %v125
  %v149 = vpack.c.b16 %v128, %v127
  %v150 = vpack.c.b16 %v130, %v129
  %v151 = vpack.c.b16 %v132, %v131
  %v152 = vpack.c.b16 %v134, %v133
  %v153 = vpack.c.b16 %v136, %v135
  %v154 = vpack.c.b16 %v138, %v137
  %171 = vmatpush.bf16.msra.mxu0 %v146
  %172 = vmatpush.bf16.msra.mxu0 %v145
  %173 = vmatpush.bf16.msra.mxu0 %v144
  %174 = vmatpush.bf16.msra.mxu0 %v143
  %175 = vmatpush.bf16.msra.mxu0 %v142
  %176 = vmatpush.bf16.msra.mxu0 %v141
  %177 = vmatpush.bf16.msra.mxu0 %v140
  %178 = vmatpush.bf16.msra.mxu0 %v139
  %179 = vmatmul.bf16.gmra.mxu0 %v71
  %v180 = vpop.f32.mrf.mxu0
  %v181 = vadd.f32 0.0, %v180
  %v182 = vpop.f32.mrf.mxu0
  %v183 = vadd.f32 0.0, %v182
  %184 = vdwg.mxu0
  %185 = vmatpush.bf16.msra.mxu0 %v154
  %186 = vmatpush.bf16.msra.mxu0 %v153
  %187 = vmatpush.bf16.msra.mxu0 %v152
  %188 = vmatpush.bf16.msra.mxu0 %v151
  %189 = vmatpush.bf16.msra.mxu0 %v150
  %190 = vmatpush.bf16.msra.mxu0 %v149
  %191 = vmatpush.bf16.msra.mxu0 %v148
  %192 = vmatpush.bf16.msra.mxu0 %v147
  %193 = vmatmul.bf16.gmra.mxu0 %v72
  %v194 = vpop.f32.mrf.mxu0
  %v195 = vadd.f32 %v181, %v194
  %v196 = vpop.f32.mrf.mxu0
  %v197 = vadd.f32 %v183, %v196
  %198 = vdwg.mxu0
  %v199 = vadd.f32 %v29, %v195
  %v200 = vadd.f32 %v30, %v197
  %201 = vst [vmem:[#allocation2] sm:$0xff] %v199
  %202 = vst [vmem:[#allocation2 + $0x8] sm:$0xff] %v200
  // Predicated region
  $region30: #{_mpn_device.6} parent=0 // pred_check
    %p203 = pneg %p23
  $region31: #{_mpn_device.6} parent=0 // pred_check_branch
    %205 = sbr.rel (%p203) target = $region33
  $region32: #{_mpn_device.6} parent=0 // pred_region
    %v206 = vld [vmem:[%s2] sm:$0xff]
    %v207 = vld [vmem:[%s2 + $0x8] sm:$0xff]
    %v208 = vld [vmem:[%s3] sm:$0xf]
    %v209 = vld [vmem:[%s3 + $0x4] sm:$0xf]
    %v210 = vld [vmem:[%s3 + $0x8] sm:$0xf]
    %v211 = vld [vmem:[%s3 + $0xc] sm:$0xf]
    %v212 = vld [vmem:[%s3 + $0x10] sm:$0xf]
    %v213 = vld [vmem:[%s3 + $0x14] sm:$0xf]
    %v214 = vld [vmem:[%s3 + $0x18] sm:$0xf]
    %v215 = vld [vmem:[%s3 + $0x1c] sm:$0xf]
    %v216 = vld [vmem:[%s3 + $0x20] sm:$0xf]
    %v217 = vld [vmem:[%s3 + $0x24] sm:$0xf]
    %v218 = vld [vmem:[%s3 + $0x28] sm:$0xf]
    %v219 = vld [vmem:[%s3 + $0x2c] sm:$0xf]
    %v220 = vld [vmem:[%s3 + $0x30] sm:$0xf]
    %v221 = vld [vmem:[%s3 + $0x34] sm:$0xf]
    %v222 = vld [vmem:[%s3 + $0x38] sm:$0xf]
    %v223 = vld [vmem:[%s3 + $0x3c] sm:$0xf]
    %v224 = vld [vmem:[%s3 + $0x40] sm:$0xf]
    %v225 = vld [vmem:[%s3 + $0x44] sm:$0xf]
    %v226 = vld [vmem:[%s3 + $0x48] sm:$0xf]
    %v227 = vld [vmem:[%s3 + $0x4c] sm:$0xf]
    %v228 = vld [vmem:[%s3 + $0x50] sm:$0xf]
    %v229 = vld [vmem:[%s3 + $0x54] sm:$0xf]
    %v230 = vld [vmem:[%s3 + $0x58] sm:$0xf]
    %v231 = vld [vmem:[%s3 + $0x5c] sm:$0xf]
    %v232 = vld [vmem:[%s3 + $0x60] sm:$0xf]
    %v233 = vld [vmem:[%s3 + $0x64] sm:$0xf]
    %v234 = vld [vmem:[%s3 + $0x68] sm:$0xf]
    %v235 = vld [vmem:[%s3 + $0x6c] sm:$0xf]
    %v236 = vld [vmem:[%s3 + $0x70] sm:$0xf]
    %v237 = vld [vmem:[%s3 + $0x74] sm:$0xf]
    %v238 = vld [vmem:[%s3 + $0x78] sm:$0xf]
    %v239 = vld [vmem:[%s3 + $0x7c] sm:$0xf]
    %v240 = vld [vmem:[#allocation2] sm:$0xff]
    %v241 = vld [vmem:[#allocation2 + $0x8] sm:$0xff]
    %v242 = vpack.c.bf16 %v241, %v240
    %v243 = vld [vmem:[%s4] sm:$0xf]
    %v244 = vld [vmem:[%s4 + $0x4] sm:$0xf]
    %v245 = vld [vmem:[%s4 + $0x8] sm:$0xf]
    %v246 = vld [vmem:[%s4 + $0xc] sm:$0xf]
    %v247 = vld [vmem:[%s4 + $0x10] sm:$0xf]
    %v248 = vld [vmem:[%s4 + $0x14] sm:$0xf]
    %v249 = vld [vmem:[%s4 + $0x18] sm:$0xf]
    %v250 = vld [vmem:[%s4 + $0x1c] sm:$0xf]
    %v251 = vld [vmem:[%s4 + $0x20] sm:$0xf]
    %v252 = vld [vmem:[%s4 + $0x24] sm:$0xf]
    %v253 = vld [vmem:[%s4 + $0x28] sm:$0xf]
    %v254 = vld [vmem:[%s4 + $0x2c] sm:$0xf]
    %v255 = vld [vmem:[%s4 + $0x30] sm:$0xf]
    %v256 = vld [vmem:[%s4 + $0x34] sm:$0xf]
    %v257 = vld [vmem:[%s4 + $0x38] sm:$0xf]
    %v258 = vld [vmem:[%s4 + $0x3c] sm:$0xf]
    %v275 = vunpack.c.l.b16 %v243
    %v276 = vunpack.c.l.b16 %v244
    %v277 = vunpack.c.l.b16 %v245
    %v278 = vunpack.c.l.b16 %v246
    %v279 = vunpack.c.l.b16 %v247
    %v280 = vunpack.c.l.b16 %v248
    %v281 = vunpack.c.l.b16 %v249
    %v282 = vunpack.c.l.b16 %v250
    %v283 = vunpack.c.l.b16 %v251
    %v284 = vunpack.c.l.b16 %v252
    %v285 = vunpack.c.l.b16 %v253
    %v286 = vunpack.c.l.b16 %v254
    %v287 = vunpack.c.l.b16 %v255
    %v288 = vunpack.c.l.b16 %v256
    %v289 = vunpack.c.l.b16 %v257
    %v290 = vunpack.c.l.b16 %v258
    %v291 = vpack.c.b16 %v276, %v275
    %v292 = vpack.c.b16 %v278, %v277
    %v293 = vpack.c.b16 %v280, %v279
    %v294 = vpack.c.b16 %v282, %v281
    %v295 = vpack.c.b16 %v284, %v283
    %v296 = vpack.c.b16 %v286, %v285
    %v297 = vpack.c.b16 %v288, %v287
    %v298 = vpack.c.b16 %v290, %v289
    %307 = vmatpush.bf16.msra.mxu0 %v298
    %308 = vmatpush.bf16.msra.mxu0 %v297
    %309 = vmatpush.bf16.msra.mxu0 %v296
    %310 = vmatpush.bf16.msra.mxu0 %v295
    %311 = vmatpush.bf16.msra.mxu0 %v294
    %312 = vmatpush.bf16.msra.mxu0 %v293
    %313 = vmatpush.bf16.msra.mxu0 %v292
    %314 = vmatpush.bf16.msra.mxu0 %v291
    %315 = vmatmul.bf16.gmra.mxu0 %v242
    %v316 = vpop.f32.mrf.mxu0
    %v317 = vadd.f32 0.0, %v316
    %v318 = vpop.f32.mrf.mxu0
    %v319 = vadd.f32 0.0, %v318
    %320 = vdwg.mxu0
    %v323 = vunpack.c.l.b16 %v206
    %v324 = vunpack.c.h.b16 %v206
    %v325 = vunpack.c.l.b16 %v207
    %v326 = vunpack.c.h.b16 %v207
    %v327 = vpack.c.b16 %v325, %v323
    %v328 = vpack.c.b16 %v326, %v324
    %v363 = vunpack.c.l.b16 %v208
    %v364 = vunpack.c.l.b16 %v209
    %v365 = vunpack.c.l.b16 %v210
    %v366 = vunpack.c.l.b16 %v211
    %v367 = vunpack.c.l.b16 %v212
    %v368 = vunpack.c.l.b16 %v213
    %v369 = vunpack.c.l.b16 %v214
    %v370 = vunpack.c.l.b16 %v215
    %v371 = vunpack.c.l.b16 %v216
    %v372 = vunpack.c.l.b16 %v217
    %v373 = vunpack.c.l.b16 %v218
    %v374 = vunpack.c.l.b16 %v219
    %v375 = vunpack.c.l.b16 %v220
    %v376 = vunpack.c.l.b16 %v221
    %v377 = vunpack.c.l.b16 %v222
    %v378 = vunpack.c.l.b16 %v223
    %v379 = vunpack.c.l.b16 %v224
    %v380 = vunpack.c.l.b16 %v225
    %v381 = vunpack.c.l.b16 %v226
    %v382 = vunpack.c.l.b16 %v227
    %v383 = vunpack.c.l.b16 %v228
    %v384 = vunpack.c.l.b16 %v229
    %v385 = vunpack.c.l.b16 %v230
    %v386 = vunpack.c.l.b16 %v231
    %v387 = vunpack.c.l.b16 %v232
    %v388 = vunpack.c.l.b16 %v233
    %v389 = vunpack.c.l.b16 %v234
    %v390 = vunpack.c.l.b16 %v235
    %v391 = vunpack.c.l.b16 %v236
    %v392 = vunpack.c.l.b16 %v237
    %v393 = vunpack.c.l.b16 %v238
    %v394 = vunpack.c.l.b16 %v239
    %v395 = vpack.c.b16 %v364, %v363
    %v396 = vpack.c.b16 %v366, %v365
    %v397 = vpack.c.b16 %v368, %v367
    %v398 = vpack.c.b16 %v370, %v369
    %v399 = vpack.c.b16 %v372, %v371
    %v400 = vpack.c.b16 %v374, %v373
    %v401 = vpack.c.b16 %v376, %v375
    %v402 = vpack.c.b16 %v378, %v377
    %v403 = vpack.c.b16 %v380, %v379
    %v404 = vpack.c.b16 %v382, %v381
    %v405 = vpack.c.b16 %v384, %v383
    %v406 = vpack.c.b16 %v386, %v385
    %v407 = vpack.c.b16 %v388, %v387
    %v408 = vpack.c.b16 %v390, %v389
    %v409 = vpack.c.b16 %v392, %v391
    %v410 = vpack.c.b16 %v394, %v393
    %427 = vmatpush.bf16.msra.mxu0 %v402
    %428 = vmatpush.bf16.msra.mxu0 %v401
    %429 = vmatpush.bf16.msra.mxu0 %v400
    %430 = vmatpush.bf16.msra.mxu0 %v399
    %431 = vmatpush.bf16.msra.mxu0 %v398
    %432 = vmatpush.bf16.msra.mxu0 %v397
    %433 = vmatpush.bf16.msra.mxu0 %v396
    %434 = vmatpush.bf16.msra.mxu0 %v395
    %435 = vmatmul.bf16.gmra.mxu0 %v327
    %v436 = vpop.f32.mrf.mxu0
    %v437 = vadd.f32 %v317, %v436
    %v438 = vpop.f32.mrf.mxu0
    %v439 = vadd.f32 %v319, %v438
    %440 = vdwg.mxu0
    %441 = vmatpush.bf16.msra.mxu0 %v410
    %442 = vmatpush.bf16.msra.mxu0 %v409
    %443 = vmatpush.bf16.msra.mxu0 %v408
    %444 = vmatpush.bf16.msra.mxu0 %v407
    %445 = vmatpush.bf16.msra.mxu0 %v406
    %446 = vmatpush.bf16.msra.mxu0 %v405
    %447 = vmatpush.bf16.msra.mxu0 %v404
    %448 = vmatpush.bf16.msra.mxu0 %v403
    %449 = vmatmul.bf16.gmra.mxu0 %v328
    %v450 = vpop.f32.mrf.mxu0
    %v451 = vadd.f32 %v437, %v450
    %v452 = vpop.f32.mrf.mxu0
    %v453 = vadd.f32 %v439, %v452
    %454 = vdwg.mxu0
    %v455 = vld [vmem:[%s5] sm:$0x1]
    %v457 = vperm.slane %v455, 0
    %v459 = vadd.f32 %v451, %v457
    %v460 = vadd.f32 %v453, %v457
    %v461 = vmax.f32 %v459, 0.0
    %v462 = vmax.f32 %v460, 0.0
    %463 = vst [vmem:[%s6] sm:$0xff] %v461
    %464 = vst [vmem:[%s6 + $0x8] sm:$0xff] %v462
  $region33: #{_mpn_device.6} parent=0 // pred_fallthru
    _
  // Predicated region
  $region34: #{_mpn_device.6} parent=0 // pred_check
    _
  $region35: #{_mpn_device.6} parent=0 // pred_check_branch
    %466 = sbr.rel (0) target = $region37
  $region36: #{_mpn_device.6} parent=0 // pred_region
    _
  $region37: #{_mpn_device.6} parent=0 // pred_fallthru
    _
  // Predicated region
  $region38: #{_mpn_device.6} parent=0 // pred_check
    _
  $region39: #{_mpn_device.6} parent=0 // pred_check_branch
    %468 = sbr.rel (0) target = $region41
  $region40: #{_mpn_device.6} parent=0 // pred_region
    _
  $region41: #{_mpn_device.6} parent=0 // pred_fallthru
    _

// kernel: _mpn_device.5
$region0: #{_mpn_device.5}
  #allocation0 [shape = 'u32[]', space=smem, size = 0x4, offset = 0x4, fixed_abs, tag = 'smem constant byte address 0x4 - core index']
  #allocation1 [shape = 'u32[72,128]{1,0:T(1,128)}', space=vmem, size = 0x9000, scoped, tag = 'internal scratch']
  #allocation2 [shape = 'bf16[512,128]{1,0:T(8,128)(2,1)}', space=vmem, size = 0x20000, scoped, tag = 'scratch operand']
  #allocation3 [shape = 'f32[256,128]{1,0:T(8,128)}', space=vmem, size = 0x20000, scoped, tag = 'scratch operand']
  %s0 = inlined_call_operand.vmem [shape: s8[256,256], index: 0, kind: input, shape index: {}]
  %s1 = inlined_call_operand.vmem [shape: bf16[256,128], index: 1, kind: input, shape index: {}]
  %s2 = inlined_call_operand.vmem [shape: bf16[256,128], index: 2, kind: input, shape index: {}]
  %s3 = inlined_call_operand.vmem [shape: bf16[128,128], index: 3, kind: input, shape index: {}]
  %s4 = inlined_call_operand.vmem [shape: bf16[256,128], index: 4, kind: output, shape index: {}]
  %s5 = sld [smem:[#allocation0]]
  $region61: #{_mpn_device.5} parent=0
    _
  %s7 = ssub.s32 1, %s5
  %s8 = scalar_select 0, %s7, %s5
  loop: start=0, step=1, limit=4
  $region2: #{_mpn_device.5} parent=0 // loop_pre_header
    _
  $region3: #{_mpn_device.5} parent=0 // loop_header
    %s10 = sphi 0, %s14
    %p11 = scmp.ge.s32.totalorder %s10, 4
    %s17 = sphi 0, %s36
    %s18 = sphi 0, %s32
    %s19 = sphi 0, %s28
    %s20 = sphi 0, %s17
    %s21 = sphi 0, %s18
    %s22 = sphi 0, %s19
    %s23 = sphi 0, %s20
    %s24 = sphi 0, %s21
    %s25 = sphi 0, %s22
    %s41 = sphi 0, %s43
    %s44 = sphi 0, %s41
    %s45 = sphi 0, %s44
    %s61 = sphi 0, %s45
    %s65 = sphi 0, %s65
    %s67 = sphi 0, %s65
    %s68 = sphi 0, %s67
    %s82 = sphi 0, %s68
    %s88 = sphi 0, %s90
    %s91 = sphi 0, %s88
    %s92 = sphi 0, %s91
    %s108 = sphi 0, %s92
    %s112 = sphi 0, %s112
    %s114 = sphi 0, %s112
    %s115 = sphi 0, %s114
    %s129 = sphi 0, %s115
    %s135 = sphi 0, %s137
    %s138 = sphi 0, %s135
    %s139 = sphi 0, %s138
    %s155 = sphi 0, %s139
  $region4: #{_mpn_device.5} parent=0 // loop_header_branch
    %13 = sbr.rel (%p11) target = $region8
  $region5: #{_mpn_device.5} parent=0 // loop_body
    %s15 = ssub.s32 %s10, 1
    %s16 = ssub.s32 %s10, 2
    %s26 = sadd.s32 1, %s19
    %p27 = scmp.ge.s32.totalorder %s26, 1
    %s28 = scalar_select %p27, 0, %s26
    %s29 = sadd.s32 1, %s18
    %s30 = scalar_select %p27, %s29, %s18
    %p31 = scmp.ge.s32.totalorder %s30, 1
    %s32 = scalar_select %p31, 0, %s30
    %s33 = sadd.s32 1, %s17
    %s34 = scalar_select %p31, %s33, %s17
    %p35 = scmp.ge.s32.totalorder %s34, 2
    %s36 = scalar_select %p35, 0, %s34
    %s37 = ssub.s32 %s18, %s32
    %s38 = ssub.s32 %s19, %s28
    %s39 = sor.u32 %s37, %s38
    %p40 = scmp.eq.s32.totalorder %s39, 0
    %s42 = sadd.s32 %s41, 1
    %s43 = scalar_select %p40, %s41, %s42
    %p46 = pneg %p40
    %p47 = scmp.eq.s32.totalorder %s10, 1
    %p48 = por %p46, %p47
    %p49 = scmp.ne.s32.totalorder %s41, %s44
    %p50 = scmp.eq.s32.totalorder %s10, 0
    %p51 = por %p49, %p50
    %p52 = scmp.ne.s32.totalorder %s41, %s44
    %p53 = scmp.eq.s32.totalorder %s15, 1
    %p54 = por %p52, %p53
    %p55 = scmp.ne.s32.totalorder %s44, %s45
    %p56 = scmp.eq.s32.totalorder %s15, 0
    %p57 = por %p55, %p56
    %p58 = scmp.ne.s32.totalorder %s44, %s45
    %p59 = scmp.eq.s32.totalorder %s16, 1
    %p60 = por %p58, %p59
    %p62 = scmp.ne.s32.totalorder %s45, %s61
    %p63 = scmp.eq.s32.totalorder %s16, 0
    %p64 = por %p62, %p63
    %s66 = sadd.s32 %s65, 1
    %p69 = scmp.eq.s32.totalorder %s10, 1
    %p70 = scmp.ne.s32.totalorder %s65, %s67
    %p71 = scmp.eq.s32.totalorder %s10, 0
    %p72 = por %p70, %p71
    %p73 = scmp.ne.s32.totalorder %s65, %s67
    %p74 = scmp.eq.s32.totalorder %s15, 1
    %p75 = por %p73, %p74
    %p76 = scmp.ne.s32.totalorder %s67, %s68
    %p77 = scmp.eq.s32.totalorder %s15, 0
    %p78 = por %p76, %p77
    %p79 = scmp.ne.s32.totalorder %s67, %s68
    %p80 = scmp.eq.s32.totalorder %s16, 1
    %p81 = por %p79, %p80
    %p83 = scmp.ne.s32.totalorder %s68, %s82
    %p84 = scmp.eq.s32.totalorder %s16, 0
    %p85 = por %p83, %p84
    %s86 = ssub.s32 %s18, %s32
    %p87 = scmp.eq.s32.totalorder %s86, 0
    %s89 = sadd.s32 %s88, 1
    %s90 = scalar_select %p87, %s88, %s89
    %p93 = pneg %p87
    %p94 = scmp.eq.s32.totalorder %s10, 1
    %p95 = por %p93, %p94
    %p96 = scmp.ne.s32.totalorder %s88, %s91
    %p97 = scmp.eq.s32.totalorder %s10, 0
    %p98 = por %p96, %p97
    %p99 = scmp.ne.s32.totalorder %s88, %s91
    %p100 = scmp.eq.s32.totalorder %s15, 1
    %p101 = por %p99, %p100
    %p102 = scmp.ne.s32.totalorder %s91, %s92
    %p103 = scmp.eq.s32.totalorder %s15, 0
    %p104 = por %p102, %p103
    %p105 = scmp.ne.s32.totalorder %s91, %s92
    %p106 = scmp.eq.s32.totalorder %s16, 1
    %p107 = por %p105, %p106
    %p109 = scmp.ne.s32.totalorder %s92, %s108
    %p110 = scmp.eq.s32.totalorder %s16, 0
    %p111 = por %p109, %p110
    %s113 = sadd.s32 %s112, 1
    %p116 = scmp.eq.s32.totalorder %s10, 1
    %p117 = scmp.ne.s32.totalorder %s112, %s114
    %p118 = scmp.eq.s32.totalorder %s10, 0
    %p119 = por %p117, %p118
    %p120 = scmp.ne.s32.totalorder %s112, %s114
    %p121 = scmp.eq.s32.totalorder %s15, 1
    %p122 = por %p120, %p121
    %p123 = scmp.ne.s32.totalorder %s114, %s115
    %p124 = scmp.eq.s32.totalorder %s15, 0
    %p125 = por %p123, %p124
    %p126 = scmp.ne.s32.totalorder %s114, %s115
    %p127 = scmp.eq.s32.totalorder %s16, 1
    %p128 = por %p126, %p127
    %p130 = scmp.ne.s32.totalorder %s115, %s129
    %p131 = scmp.eq.s32.totalorder %s16, 0
    %p132 = por %p130, %p131
    %s133 = ssub.s32 %s18, %s32
    %p134 = scmp.eq.s32.totalorder %s133, 0
    %s136 = sadd.s32 %s135, 1
    %s137 = scalar_select %p134, %s135, %s136
    %p140 = pneg %p134
    %p141 = scmp.eq.s32.totalorder %s10, 1
    %p142 = por %p140, %p141
    %p143 = scmp.ne.s32.totalorder %s135, %s138
    %p144 = scmp.eq.s32.totalorder %s10, 0
    %p145 = por %p143, %p144
    %p146 = scmp.ne.s32.totalorder %s135, %s138
    %p147 = scmp.eq.s32.totalorder %s15, 1
    %p148 = por %p146, %p147
    %p149 = scmp.ne.s32.totalorder %s138, %s139
    %p150 = scmp.eq.s32.totalorder %s15, 0
    %p151 = por %p149, %p150
    %p152 = scmp.ne.s32.totalorder %s138, %s139
    %p153 = scmp.eq.s32.totalorder %s16, 1
    %p154 = por %p152, %p153
    %p156 = scmp.ne.s32.totalorder %s139, %s155
    %p157 = scmp.eq.s32.totalorder %s16, 0
    %p158 = por %p156, %p157
    %p159 = scmp.le.s32.totalorder 1, %s10
    %p160 = scmp.lt.s32.totalorder %s10, 3
    %p161 = pnand %p159, %p160
    %p162 = pneg %p161
    // Predicated region
    $region9: #{_mpn_device.5} parent=5 // pred_check
      _
    $region10: #{_mpn_device.5} parent=5 // pred_check_branch
      %164 = sbr.rel (%p161) target = $region12
    $region11: #{_mpn_device.5} parent=5 // pred_region
      %s165 = ssub.s32 %s10, 1
      // Predicated region
      $region13: #{_mpn_device.5} parent=11 // pred_check
        %p166 = pneg %p57
      $region14: #{_mpn_device.5} parent=11 // pred_check_branch
        %168 = sbr.rel (%p166) target = $region16
      $region15: #{_mpn_device.5} parent=11 // pred_region
        %s169 = smul.u32 8, %s21
        %s170 = smul.u32 2, %s22
        %p171 = scmp.lt.s32.totalorder %s169, 7
        %s172 = scalar_select %p171, %s169, 7
        %p173 = scmp.lt.s32.totalorder %s170, 1
        %s174 = scalar_select %p173, %s170, 1
        %s175 = smul.addr %s172, 2
        %s176 = sadd.s32 %s174, %s175
        %s177 = smul.addr %s176, 8
        %s178 = scalar_lea.vmem %s0, %s177
        %s179 = smul.u32 8, %s21
        %s180 = smul.u32 2, %s22
      $region16: #{_mpn_device.5} parent=11 // pred_fallthru
        _
      // Predicated region
      $region17: #{_mpn_device.5} parent=11 // pred_check
        %p181 = pneg %p78
      $region18: #{_mpn_device.5} parent=11 // pred_check_branch
        %183 = sbr.rel (%p181) target = $region20
      $region19: #{_mpn_device.5} parent=11 // pred_region
        _
      $region20: #{_mpn_device.5} parent=11 // pred_fallthru
        _
      // Predicated region
      $region21: #{_mpn_device.5} parent=11 // pred_check
        %p184 = pneg %p104
      $region22: #{_mpn_device.5} parent=11 // pred_check_branch
        %186 = sbr.rel (%p184) target = $region24
      $region23: #{_mpn_device.5} parent=11 // pred_region
        %s187 = smul.u32 32, %s21
        %p188 = scmp.lt.s32.totalorder %s187, 31
        %s189 = scalar_select %p188, %s187, 31
        %s190 = smul.addr %s189, 4
        %s191 = scalar_lea.vmem %s2, %s190
        %s192 = smul.u32 32, %s21
      $region24: #{_mpn_device.5} parent=11 // pred_fallthru
        _
      // Predicated region
      $region25: #{_mpn_device.5} parent=11 // pred_check
        %p193 = pneg %p125
      $region26: #{_mpn_device.5} parent=11 // pred_check_branch
        %195 = sbr.rel (%p193) target = $region28
      $region27: #{_mpn_device.5} parent=11 // pred_region
        _
      $region28: #{_mpn_device.5} parent=11 // pred_fallthru
        _
    $region12: #{_mpn_device.5} parent=5 // pred_fallthru
      _
    %p196 = scmp.lt.s32.totalorder %s10, 2
    // Predicated region
    $region29: #{_mpn_device.5} parent=5 // pred_check
      %p197 = pneg %p196
    $region30: #{_mpn_device.5} parent=5 // pred_check_branch
      %199 = sbr.rel (%p197) target = $region32
    $region31: #{_mpn_device.5} parent=5 // pred_region
      _
    $region32: #{_mpn_device.5} parent=5 // pred_fallthru
      _
    %p200 = scmp.le.s32.totalorder 1, %s10
    %p201 = scmp.lt.s32.totalorder %s10, 3
    %p202 = pnand %p200, %p201
    %p203 = pneg %p202
    // Predicated region
    $region33: #{_mpn_device.5} parent=5 // pred_check
      _
    $region34: #{_mpn_device.5} parent=5 // pred_check_branch
      %205 = sbr.rel (%p202) target = $region36
    $region35: #{_mpn_device.5} parent=5 // pred_region
      %s206 = ssub.s32 %s10, 1
      %s207 = smul.u32 8, %s21
      %s208 = smul.u32 2, %s22
      %p209 = scmp.lt.s32.totalorder %s207, 7
      %s210 = scalar_select %p209, %s207, 7
      %p211 = scmp.lt.s32.totalorder %s208, 1
      %s212 = scalar_select %p211, %s208, 1
      %s213 = smul.addr %s210, 2
      %s214 = sadd.s32 %s212, %s213
      %s215 = smul.addr %s214, 8
      %s216 = scalar_lea.vmem %s0, %s215
      %p217 = pneg %p57
      %p218 = pneg %p54
      %p219 = pneg %p78
      %p220 = pneg %p75
      %s221 = smul.u32 32, %s21
      %p222 = scmp.lt.s32.totalorder %s221, 31
      %s223 = scalar_select %p222, %s221, 31
      %s224 = smul.addr %s223, 4
      %s225 = scalar_lea.vmem %s2, %s224
      %p226 = pneg %p104
      %p227 = pneg %p101
      %p228 = pneg %p125
      %p229 = pneg %p122
      %p230 = pneg %p151
      %p231 = pneg %p148
      %s232 = smul.u32 32, %s21
      %p233 = scmp.lt.s32.totalorder %s232, 31
      %s234 = scalar_select %p233, %s232, 31
      %s235 = smul.addr %s234, 4
      %s236 = scalar_lea.vmem %s4, %s235
      %s237 = smul.u32 8, %s21
      %s238 = smul.u32 2, %s22
      %p239 = scmp.lt.s32.totalorder %s237, 7
      %s240 = scalar_select %p239, %s237, 7
      %p241 = scmp.lt.s32.totalorder %s238, 1
      %s242 = scalar_select %p241, %s238, 1
      %s243 = smul.addr %s240, 2
      %s244 = sadd.s32 %s242, %s243
      %s245 = smul.addr %s244, 8
      %s246 = scalar_lea.vmem %s0, %s245
      %s247 = smul.u32 8, %s21
      %s248 = smul.u32 2, %s22
      %s249 = smul.u32 32, %s21
      %p250 = scmp.lt.s32.totalorder %s249, 31
      %s251 = scalar_select %p250, %s249, 31
      %s252 = smul.addr %s251, 4
      %s253 = scalar_lea.vmem %s2, %s252
      %s254 = smul.u32 32, %s21
      %s255 = smul.u32 32, %s21
      %p256 = scmp.lt.s32.totalorder %s255, 31
      %s257 = scalar_select %p256, %s255, 31
      %s258 = smul.addr %s257, 4
      %s259 = scalar_lea.vmem %s4, %s258
      %s260 = smul.u32 32, %s21
      %p261 = scmp.eq.s32.totalorder %s20, 0
      %p262 = scmp.eq.s32.totalorder %s21, 0
      %p263 = pnand %p261, %p262
      %p264 = pneg %p263
      %p265 = scmp.eq.s32.totalorder %s22, 0
      %p266 = pnand %p264, %p265
      %p267 = pneg %p266
      // Predicated region
      $region37: #{_mpn_device.5} parent=35 // pred_check
        _
      $region38: #{_mpn_device.5} parent=35 // pred_check_branch
        %269 = sbr.rel (%p266) target = $region40
      $region39: #{_mpn_device.5} parent=35 // pred_region
        %v270 = vld [vmem:[%s1] sm:$0xf]
        %v271 = vld [vmem:[%s1 + $0x4] sm:$0xf]
        %v272 = vld [vmem:[%s1 + $0x8] sm:$0xf]
        %v273 = vld [vmem:[%s1 + $0xc] sm:$0xf]
        %v274 = vld [vmem:[%s1 + $0x10] sm:$0xf]
        %v275 = vld [vmem:[%s1 + $0x14] sm:$0xf]
        %v276 = vld [vmem:[%s1 + $0x18] sm:$0xf]
        %v277 = vld [vmem:[%s1 + $0x1c] sm:$0xf]
        %v278 = vld [vmem:[%s1 + $0x20] sm:$0xf]
        %v279 = vld [vmem:[%s1 + $0x24] sm:$0xf]
        %v280 = vld [vmem:[%s1 + $0x28] sm:$0xf]
        %v281 = vld [vmem:[%s1 + $0x2c] sm:$0xf]
        %v282 = vld [vmem:[%s1 + $0x30] sm:$0xf]
        %v283 = vld [vmem:[%s1 + $0x34] sm:$0xf]
        %v284 = vld [vmem:[%s1 + $0x38] sm:$0xf]
        %v285 = vld [vmem:[%s1 + $0x3c] sm:$0xf]
        %v286 = vld [vmem:[%s1 + $0x40] sm:$0xf]
        %v287 = vld [vmem:[%s1 + $0x44] sm:$0xf]
        %v288 = vld [vmem:[%s1 + $0x48] sm:$0xf]
        %v289 = vld [vmem:[%s1 + $0x4c] sm:$0xf]
        %v290 = vld [vmem:[%s1 + $0x50] sm:$0xf]
        %v291 = vld [vmem:[%s1 + $0x54] sm:$0xf]
        %v292 = vld [vmem:[%s1 + $0x58] sm:$0xf]
        %v293 = vld [vmem:[%s1 + $0x5c] sm:$0xf]
        %v294 = vld [vmem:[%s1 + $0x60] sm:$0xf]
        %v295 = vld [vmem:[%s1 + $0x64] sm:$0xf]
        %v296 = vld [vmem:[%s1 + $0x68] sm:$0xf]
        %v297 = vld [vmem:[%s1 + $0x6c] sm:$0xf]
        %v298 = vld [vmem:[%s1 + $0x70] sm:$0xf]
        %v299 = vld [vmem:[%s1 + $0x74] sm:$0xf]
        %v300 = vld [vmem:[%s1 + $0x78] sm:$0xf]
        %v301 = vld [vmem:[%s1 + $0x7c] sm:$0xf]
        %302 = vst [vmem:[#allocation2] sm:$0xf] %v270
        %303 = vst [vmem:[#allocation2 + $0x4] sm:$0xf] %v271
        %304 = vst [vmem:[#allocation2 + $0x8] sm:$0xf] %v272
        %305 = vst [vmem:[#allocation2 + $0xc] sm:$0xf] %v273
        %306 = vst [vmem:[#allocation2 + $0x10] sm:$0xf] %v274
        %307 = vst [vmem:[#allocation2 + $0x14] sm:$0xf] %v275
        %308 = vst [vmem:[#allocation2 + $0x18] sm:$0xf] %v276
        %309 = vst [vmem:[#allocation2 + $0x1c] sm:$0xf] %v277
        %310 = vst [vmem:[#allocation2 + $0x20] sm:$0xf] %v278
        %311 = vst [vmem:[#allocation2 + $0x24] sm:$0xf] %v279
        %312 = vst [vmem:[#allocation2 + $0x28] sm:$0xf] %v280
        %313 = vst [vmem:[#allocation2 + $0x2c] sm:$0xf] %v281
        %314 = vst [vmem:[#allocation2 + $0x30] sm:$0xf] %v282
        %315 = vst [vmem:[#allocation2 + $0x34] sm:$0xf] %v283
        %316 = vst [vmem:[#allocation2 + $0x38] sm:$0xf] %v284
        %317 = vst [vmem:[#allocation2 + $0x3c] sm:$0xf] %v285
        %318 = vst [vmem:[#allocation2 + $0x40] sm:$0xf] %v286
        %319 = vst [vmem:[#allocation2 + $0x44] sm:$0xf] %v287
        %320 = vst [vmem:[#allocation2 + $0x48] sm:$0xf] %v288
        %321 = vst [vmem:[#allocation2 + $0x4c] sm:$0xf] %v289
        %322 = vst [vmem:[#allocation2 + $0x50] sm:$0xf] %v290
        %323 = vst [vmem:[#allocation2 + $0x54] sm:$0xf] %v291
        %324 = vst [vmem:[#allocation2 + $0x58] sm:$0xf] %v292
        %325 = vst [vmem:[#allocation2 + $0x5c] sm:$0xf] %v293
        %326 = vst [vmem:[#allocation2 + $0x60] sm:$0xf] %v294
        %327 = vst [vmem:[#allocation2 + $0x64] sm:$0xf] %v295
        %328 = vst [vmem:[#allocation2 + $0x68] sm:$0xf] %v296
        %329 = vst [vmem:[#allocation2 + $0x6c] sm:$0xf] %v297
        %330 = vst [vmem:[#allocation2 + $0x70] sm:$0xf] %v298
        %331 = vst [vmem:[#allocation2 + $0x74] sm:$0xf] %v299
        %332 = vst [vmem:[#allocation2 + $0x78] sm:$0xf] %v300
        %333 = vst [vmem:[#allocation2 + $0x7c] sm:$0xf] %v301
      $region40: #{_mpn_device.5} parent=35 // pred_fallthru
        _
      // Predicated region
      $region41: #{_mpn_device.5} parent=35 // pred_check
        %p334 = pneg %p265
      $region42: #{_mpn_device.5} parent=35 // pred_check_branch
        %336 = sbr.rel (%p334) target = $region44
      $region43: #{_mpn_device.5} parent=35 // pred_region
        %337 = vst [vmem:[#allocation3] sm:$0xff] 0.0
        %338 = vst [vmem:[#allocation3 + $0x8] sm:$0xff] 0.0
        %339 = vst [vmem:[#allocation3 + $0x10] sm:$0xff] 0.0
        %340 = vst [vmem:[#allocation3 + $0x18] sm:$0xff] 0.0
        %341 = vst [vmem:[#allocation3 + $0x20] sm:$0xff] 0.0
        %342 = vst [vmem:[#allocation3 + $0x28] sm:$0xff] 0.0
        %343 = vst [vmem:[#allocation3 + $0x30] sm:$0xff] 0.0
        %344 = vst [vmem:[#allocation3 + $0x38] sm:$0xff] 0.0
        %345 = vst [vmem:[#allocation3 + $0x40] sm:$0xff] 0.0
        %346 = vst [vmem:[#allocation3 + $0x48] sm:$0xff] 0.0
        %347 = vst [vmem:[#allocation3 + $0x50] sm:$0xff] 0.0
        %348 = vst [vmem:[#allocation3 + $0x58] sm:$0xff] 0.0
        %349 = vst [vmem:[#allocation3 + $0x60] sm:$0xff] 0.0
        %350 = vst [vmem:[#allocation3 + $0x68] sm:$0xff] 0.0
        %351 = vst [vmem:[#allocation3 + $0x70] sm:$0xff] 0.0
        %352 = vst [vmem:[#allocation3 + $0x78] sm:$0xff] 0.0
        %353 = vst [vmem:[#allocation3 + $0x80] sm:$0xff] 0.0
        %354 = vst [vmem:[#allocation3 + $0x88] sm:$0xff] 0.0
        %355 = vst [vmem:[#allocation3 + $0x90] sm:$0xff] 0.0
        %356 = vst [vmem:[#allocation3 + $0x98] sm:$0xff] 0.0
        %357 = vst [vmem:[#allocation3 + $0xa0] sm:$0xff] 0.0
        %358 = vst [vmem:[#allocation3 + $0xa8] sm:$0xff] 0.0
        %359 = vst [vmem:[#allocation3 + $0xb0] sm:$0xff] 0.0
        %360 = vst [vmem:[#allocation3 + $0xb8] sm:$0xff] 0.0
        %361 = vst [vmem:[#allocation3 + $0xc0] sm:$0xff] 0.0
        %362 = vst [vmem:[#allocation3 + $0xc8] sm:$0xff] 0.0
        %363 = vst [vmem:[#allocation3 + $0xd0] sm:$0xff] 0.0
        %364 = vst [vmem:[#allocation3 + $0xd8] sm:$0xff] 0.0
        %365 = vst [vmem:[#allocation3 + $0xe0] sm:$0xff] 0.0
        %366 = vst [vmem:[#allocation3 + $0xe8] sm:$0xff] 0.0
        %367 = vst [vmem:[#allocation3 + $0xf0] sm:$0xff] 0.0
        %368 = vst [vmem:[#allocation3 + $0xf8] sm:$0xff] 0.0
      $region44: #{_mpn_device.5} parent=35 // pred_fallthru
        _
      %p369 = scmp.lt.s32.totalorder %s20, 0
      %s370 = ssub.s32 0, %s20
      %s371 = scalar_select %p369, %s370, %s20
      %s372 = sand.u32 %s371, 1
      %s373 = ssub.s32 0, %s372
      %s374 = scalar_select %p369, %s373, %s372
      %p375 = scmp.ne.s32.totalorder %s374, 0
      %p376 = scmp.lt.s32.totalorder %s374, 0
      %p377 = pnand %p376, %p375
      %p378 = pneg %p377
      %s379 = sadd.s32 %s374, 2
      %s380 = scalar_select %p378, %s379, %s374
      %s381 = smul.u32 %s380, 256
      %s382 = smul.u32 %s22, 256
      %s383 = sadd.s32 %s381, %s382
      %s384 = sshra.s32 %s383, 3
      %s385 = sand.u32 %s383, 7
      %s386 = smul.addr %s384, 4
      %s387 = scalar_lea.vmem [#allocation2], %s386
      %v388 = vld [vmem:[%s387] sm:$0xf]
      %v389 = vld [vmem:[%s387 + $0x4] sm:$0xf]
      %v390 = vld [vmem:[%s387 + $0x8] sm:$0xf]
      %v391 = vld [vmem:[%s387 + $0xc] sm:$0xf]
      %v392 = vld [vmem:[%s387 + $0x10] sm:$0xf]
      %v393 = vld [vmem:[%s387 + $0x14] sm:$0xf]
      %v394 = vld [vmem:[%s387 + $0x18] sm:$0xf]
      %v395 = vld [vmem:[%s387 + $0x1c] sm:$0xf]
      %v396 = vld [vmem:[%s387 + $0x20] sm:$0xf]
      %v397 = vld [vmem:[%s387 + $0x24] sm:$0xf]
      %v398 = vld [vmem:[%s387 + $0x28] sm:$0xf]
      %v399 = vld [vmem:[%s387 + $0x2c] sm:$0xf]
      %v400 = vld [vmem:[%s387 + $0x30] sm:$0xf]
      %v401 = vld [vmem:[%s387 + $0x34] sm:$0xf]
      %v402 = vld [vmem:[%s387 + $0x38] sm:$0xf]
      %v403 = vld [vmem:[%s387 + $0x3c] sm:$0xf]
      %v404 = vld [vmem:[%s387 + $0x40] sm:$0xf]
      %v405 = vld [vmem:[%s387 + $0x44] sm:$0xf]
      %v406 = vld [vmem:[%s387 + $0x48] sm:$0xf]
      %v407 = vld [vmem:[%s387 + $0x4c] sm:$0xf]
      %v408 = vld [vmem:[%s387 + $0x50] sm:$0xf]
      %v409 = vld [vmem:[%s387 + $0x54] sm:$0xf]
      %v410 = vld [vmem:[%s387 + $0x58] sm:$0xf]
      %v411 = vld [vmem:[%s387 + $0x5c] sm:$0xf]
      %v412 = vld [vmem:[%s387 + $0x60] sm:$0xf]
      %v413 = vld [vmem:[%s387 + $0x64] sm:$0xf]
      %v414 = vld [vmem:[%s387 + $0x68] sm:$0xf]
      %v415 = vld [vmem:[%s387 + $0x6c] sm:$0xf]
      %v416 = vld [vmem:[%s387 + $0x70] sm:$0xf]
      %v417 = vld [vmem:[%s387 + $0x74] sm:$0xf]
      %v418 = vld [vmem:[%s387 + $0x78] sm:$0xf]
      %v419 = vld [vmem:[%s387 + $0x7c] sm:$0xf]
      %v420 = vld [vmem:[#allocation3] sm:$0xff]
      %v421 = vld [vmem:[#allocation3 + $0x8] sm:$0xff]
      %v422 = vld [vmem:[#allocation3 + $0x10] sm:$0xff]
      %v423 = vld [vmem:[#allocation3 + $0x18] sm:$0xff]
      %v424 = vld [vmem:[#allocation3 + $0x20] sm:$0xff]
      %v425 = vld [vmem:[#allocation3 + $0x28] sm:$0xff]
      %v426 = vld [vmem:[#allocation3 + $0x30] sm:$0xff]
      %v427 = vld [vmem:[#allocation3 + $0x38] sm:$0xff]
      %v428 = vld [vmem:[#allocation3 + $0x40] sm:$0xff]
      %v429 = vld [vmem:[#allocation3 + $0x48] sm:$0xff]
      %v430 = vld [vmem:[#allocation3 + $0x50] sm:$0xff]
      %v431 = vld [vmem:[#allocation3 + $0x58] sm:$0xff]
      %v432 = vld [vmem:[#allocation3 + $0x60] sm:$0xff]
      %v433 = vld [vmem:[#allocation3 + $0x68] sm:$0xff]
      %v434 = vld [vmem:[#allocation3 + $0x70] sm:$0xff]
      %v435 = vld [vmem:[#allocation3 + $0x78] sm:$0xff]
      %v436 = vld [vmem:[#allocation3 + $0x80] sm:$0xff]
      %v437 = vld [vmem:[#allocation3 + $0x88] sm:$0xff]
      %v438 = vld [vmem:[#allocation3 + $0x90] sm:$0xff]
      %v439 = vld [vmem:[#allocation3 + $0x98] sm:$0xff]
      %v440 = vld [vmem:[#allocation3 + $0xa0] sm:$0xff]
      %v441 = vld [vmem:[#allocation3 + $0xa8] sm:$0xff]
      %v442 = vld [vmem:[#allocation3 + $0xb0] sm:$0xff]
      %v443 = vld [vmem:[#allocation3 + $0xb8] sm:$0xff]
      %v444 = vld [vmem:[#allocation3 + $0xc0] sm:$0xff]
      %v445 = vld [vmem:[#allocation3 + $0xc8] sm:$0xff]
      %v446 = vld [vmem:[#allocation3 + $0xd0] sm:$0xff]
      %v447 = vld [vmem:[#allocation3 + $0xd8] sm:$0xff]
      %v448 = vld [vmem:[#allocation3 + $0xe0] sm:$0xff]
      %v449 = vld [vmem:[#allocation3 + $0xe8] sm:$0xff]
      %v450 = vld [vmem:[#allocation3 + $0xf0] sm:$0xff]
      %v451 = vld [vmem:[#allocation3 + $0xf8] sm:$0xff]
      %v452 = vld [vmem:[%s246] sm:$0xff]
      %v453 = vld [vmem:[%s246 + $0x8] sm:$0xff]
      %v454 = vld [vmem:[%s246 + $0x10] sm:$0xff]
      %v455 = vld [vmem:[%s246 + $0x18] sm:$0xff]
      %v456 = vld [vmem:[%s246 + $0x20] sm:$0xff]
      %v457 = vld [vmem:[%s246 + $0x28] sm:$0xff]
      %v458 = vld [vmem:[%s246 + $0x30] sm:$0xff]
      %v459 = vld [vmem:[%s246 + $0x38] sm:$0xff]
      %v460 = vld [vmem:[%s246 + $0x40] sm:$0xff]
      %v461 = vld [vmem:[%s246 + $0x48] sm:$0xff]
      %v462 = vld [vmem:[%s246 + $0x50] sm:$0xff]
      %v463 = vld [vmem:[%s246 + $0x58] sm:$0xff]
      %v464 = vld [vmem:[%s246 + $0x60] sm:$0xff]
      %v465 = vld [vmem:[%s246 + $0x68] sm:$0xff]
      %v466 = vld [vmem:[%s246 + $0x70] sm:$0xff]
      %v467 = vld [vmem:[%s246 + $0x78] sm:$0xff]
      %v468 = vunpack.c.0.s8 %v452
      %v469 = vunpack.c.0.s8 %v453
      %v470 = vunpack.c.1.s8 %v452
      %v471 = vunpack.c.1.s8 %v453
      %v472 = vunpack.c.2.s8 %v452
      %v473 = vunpack.c.2.s8 %v453
      %v474 = vunpack.c.3.s8 %v452
      %v475 = vunpack.c.3.s8 %v453
      %v476 = vunpack.c.0.s8 %v454
      %v477 = vunpack.c.0.s8 %v455
      %v478 = vunpack.c.1.s8 %v454
      %v479 = vunpack.c.1.s8 %v455
      %v480 = vunpack.c.2.s8 %v454
      %v481 = vunpack.c.2.s8 %v455
      %v482 = vunpack.c.3.s8 %v454
      %v483 = vunpack.c.3.s8 %v455
      %v484 = vunpack.c.0.s8 %v456
      %v485 = vunpack.c.0.s8 %v457
      %v486 = vunpack.c.1.s8 %v456
      %v487 = vunpack.c.1.s8 %v457
      %v488 = vunpack.c.2.s8 %v456
      %v489 = vunpack.c.2.s8 %v457
      %v490 = vunpack.c.3.s8 %v456
      %v491 = vunpack.c.3.s8 %v457
      %v492 = vunpack.c.0.s8 %v458
      %v493 = vunpack.c.0.s8 %v459
      %v494 = vunpack.c.1.s8 %v458
      %v495 = vunpack.c.1.s8 %v459
      %v496 = vunpack.c.2.s8 %v458
      %v497 = vunpack.c.2.s8 %v459
      %v498 = vunpack.c.3.s8 %v458
      %v499 = vunpack.c.3.s8 %v459
      %v500 = vunpack.c.0.s8 %v460
      %v501 = vunpack.c.0.s8 %v461
      %v502 = vunpack.c.1.s8 %v460
      %v503 = vunpack.c.1.s8 %v461
      %v504 = vunpack.c.2.s8 %v460
      %v505 = vunpack.c.2.s8 %v461
      %v506 = vunpack.c.3.s8 %v460
      %v507 = vunpack.c.3.s8 %v461
      %v508 = vunpack.c.0.s8 %v462
      %v509 = vunpack.c.0.s8 %v463
      %v510 = vunpack.c.1.s8 %v462
      %v511 = vunpack.c.1.s8 %v463
      %v512 = vunpack.c.2.s8 %v462
      %v513 = vunpack.c.2.s8 %v463
      %v514 = vunpack.c.3.s8 %v462
      %v515 = vunpack.c.3.s8 %v463
      %v516 = vunpack.c.0.s8 %v464
      %v517 = vunpack.c.0.s8 %v465
      %v518 = vunpack.c.1.s8 %v464
      %v519 = vunpack.c.1.s8 %v465
      %v520 = vunpack.c.2.s8 %v464
      %v521 = vunpack.c.2.s8 %v465
      %v522 = vunpack.c.3.s8 %v464
      %v523 = vunpack.c.3.s8 %v465
      %v524 = vunpack.c.0.s8 %v466
      %v525 = vunpack.c.0.s8 %v467
      %v526 = vunpack.c.1.s8 %v466
      %v527 = vunpack.c.1.s8 %v467
      %v528 = vunpack.c.2.s8 %v466
      %v529 = vunpack.c.2.s8 %v467
      %v530 = vunpack.c.3.s8 %v466
      %v531 = vunpack.c.3.s8 %v467
      %v532 = vcvt.s32.f32 %v468
      %v533 = vcvt.s32.f32 %v469
      %v534 = vcvt.s32.f32 %v470
      %v535 = vcvt.s32.f32 %v471
      %v536 = vcvt.s32.f32 %v472
      %v537 = vcvt.s32.f32 %v473
      %v538 = vcvt.s32.f32 %v474
      %v539 = vcvt.s32.f32 %v475
      %v540 = vcvt.s32.f32 %v476
      %v541 = vcvt.s32.f32 %v477
      %v542 = vcvt.s32.f32 %v478
      %v543 = vcvt.s32.f32 %v479
      %v544 = vcvt.s32.f32 %v480
      %v545 = vcvt.s32.f32 %v481
      %v546 = vcvt.s32.f32 %v482
      %v547 = vcvt.s32.f32 %v483
      %v548 = vcvt.s32.f32 %v484
      %v549 = vcvt.s32.f32 %v485
      %v550 = vcvt.s32.f32 %v486
      %v551 = vcvt.s32.f32 %v487
      %v552 = vcvt.s32.f32 %v488
      %v553 = vcvt.s32.f32 %v489
      %v554 = vcvt.s32.f32 %v490
      %v555 = vcvt.s32.f32 %v491
      %v556 = vcvt.s32.f32 %v492
      %v557 = vcvt.s32.f32 %v493
      %v558 = vcvt.s32.f32 %v494
      %v559 = vcvt.s32.f32 %v495
      %v560 = vcvt.s32.f32 %v496
      %v561 = vcvt.s32.f32 %v497
      %v562 = vcvt.s32.f32 %v498
      %v563 = vcvt.s32.f32 %v499
      %v564 = vcvt.s32.f32 %v500
      %v565 = vcvt.s32.f32 %v501
      %v566 = vcvt.s32.f32 %v502
      %v567 = vcvt.s32.f32 %v503
      %v568 = vcvt.s32.f32 %v504
      %v569 = vcvt.s32.f32 %v505
      %v570 = vcvt.s32.f32 %v506
      %v571 = vcvt.s32.f32 %v507
      %v572 = vcvt.s32.f32 %v508
      %v573 = vcvt.s32.f32 %v509
      %v574 = vcvt.s32.f32 %v510
      %v575 = vcvt.s32.f32 %v511
      %v576 = vcvt.s32.f32 %v512
      %v577 = vcvt.s32.f32 %v513
      %v578 = vcvt.s32.f32 %v514
      %v579 = vcvt.s32.f32 %v515
      %v580 = vcvt.s32.f32 %v516
      %v581 = vcvt.s32.f32 %v517
      %v582 = vcvt.s32.f32 %v518
      %v583 = vcvt.s32.f32 %v519
      %v584 = vcvt.s32.f32 %v520
      %v585 = vcvt.s32.f32 %v521
      %v586 = vcvt.s32.f32 %v522
      %v587 = vcvt.s32.f32 %v523
      %v588 = vcvt.s32.f32 %v524
      %v589 = vcvt.s32.f32 %v525
      %v590 = vcvt.s32.f32 %v526
      %v591 = vcvt.s32.f32 %v527
      %v592 = vcvt.s32.f32 %v528
      %v593 = vcvt.s32.f32 %v529
      %v594 = vcvt.s32.f32 %v530
      %v595 = vcvt.s32.f32 %v531
      %v596 = vpack.c.bf16 %v534, %v532
      %v597 = vpack.c.bf16 %v535, %v533
      %v598 = vpack.c.bf16 %v538, %v536
      %v599 = vpack.c.bf16 %v539, %v537
      %v600 = vpack.c.bf16 %v542, %v540
      %v601 = vpack.c.bf16 %v543, %v541
      %v602 = vpack.c.bf16 %v546, %v544
      %v603 = vpack.c.bf16 %v547, %v545
      %v604 = vpack.c.bf16 %v550, %v548
      %v605 = vpack.c.bf16 %v551, %v549
      %v606 = vpack.c.bf16 %v554, %v552
      %v607 = vpack.c.bf16 %v555, %v553
      %v608 = vpack.c.bf16 %v558, %v556
      %v609 = vpack.c.bf16 %v559, %v557
      %v610 = vpack.c.bf16 %v562, %v560
      %v611 = vpack.c.bf16 %v563, %v561
      %v612 = vpack.c.bf16 %v566, %v564
      %v613 = vpack.c.bf16 %v567, %v565
      %v614 = vpack.c.bf16 %v570, %v568
      %v615 = vpack.c.bf16 %v571, %v569
      %v616 = vpack.c.bf16 %v574, %v572
      %v617 = vpack.c.bf16 %v575, %v573
      %v618 = vpack.c.bf16 %v578, %v576
      %v619 = vpack.c.bf16 %v579, %v577
      %v620 = vpack.c.bf16 %v582, %v580
      %v621 = vpack.c.bf16 %v583, %v581
      %v622 = vpack.c.bf16 %v586, %v584
      %v623 = vpack.c.bf16 %v587, %v585
      %v624 = vpack.c.bf16 %v590, %v588
      %v625 = vpack.c.bf16 %v591, %v589
      %v626 = vpack.c.bf16 %v594, %v592
      %v627 = vpack.c.bf16 %v595, %v593
      %v660 = vunpack.c.l.b16 %v388
      %v661 = vunpack.c.l.b16 %v389
      %v662 = vunpack.c.l.b16 %v390
      %v663 = vunpack.c.l.b16 %v391
      %v664 = vunpack.c.l.b16 %v392
      %v665 = vunpack.c.l.b16 %v393
      %v666 = vunpack.c.l.b16 %v394
      %v667 = vunpack.c.l.b16 %v395
      %v668 = vunpack.c.l.b16 %v396
      %v669 = vunpack.c.l.b16 %v397
      %v670 = vunpack.c.l.b16 %v398
      %v671 = vunpack.c.l.b16 %v399
      %v672 = vunpack.c.l.b16 %v400
      %v673 = vunpack.c.l.b16 %v401
      %v674 = vunpack.c.l.b16 %v402
      %v675 = vunpack.c.l.b16 %v403
      %v676 = vunpack.c.l.b16 %v404
      %v677 = vunpack.c.l.b16 %v405
      %v678 = vunpack.c.l.b16 %v406
      %v679 = vunpack.c.l.b16 %v407
      %v680 = vunpack.c.l.b16 %v408
      %v681 = vunpack.c.l.b16 %v409
      %v682 = vunpack.c.l.b16 %v410
      %v683 = vunpack.c.l.b16 %v411
      %v684 = vunpack.c.l.b16 %v412
      %v685 = vunpack.c.l.b16 %v413
      %v686 = vunpack.c.l.b16 %v414
      %v687 = vunpack.c.l.b16 %v415
      %v688 = vunpack.c.l.b16 %v416
      %v689 = vunpack.c.l.b16 %v417
      %v690 = vunpack.c.l.b16 %v418
      %v691 = vunpack.c.l.b16 %v419
      %v692 = vpack.c.b16 %v661, %v660
      %v693 = vpack.c.b16 %v663, %v662
      %v694 = vpack.c.b16 %v665, %v664
      %v695 = vpack.c.b16 %v667, %v666
      %v696 = vpack.c.b16 %v669, %v668
      %v697 = vpack.c.b16 %v671, %v670
      %v698 = vpack.c.b16 %v673, %v672
      %v699 = vpack.c.b16 %v675, %v674
      %v700 = vpack.c.b16 %v677, %v676
      %v701 = vpack.c.b16 %v679, %v678
      %v702 = vpack.c.b16 %v681, %v680
      %v703 = vpack.c.b16 %v683, %v682
      %v704 = vpack.c.b16 %v685, %v684
      %v705 = vpack.c.b16 %v687, %v686
      %v706 = vpack.c.b16 %v689, %v688
      %v707 = vpack.c.b16 %v691, %v690
      %724 = vmatpush.bf16.msra.mxu0 %v699
      %725 = vmatpush.bf16.msra.mxu0 %v698
      %726 = vmatpush.bf16.msra.mxu0 %v697
      %727 = vmatpush.bf16.msra.mxu0 %v696
      %728 = vmatpush.bf16.msra.mxu0 %v695
      %729 = vmatpush.bf16.msra.mxu0 %v694
      %730 = vmatpush.bf16.msra.mxu0 %v693
      %731 = vmatpush.bf16.msra.mxu0 %v692
      %732 = vmatmul.bf16.gmra.mxu0 %v596
      %v733 = vpop.f32.mrf.mxu0
      %v734 = vadd.f32 0.0, %v733
      %v735 = vpop.f32.mrf.mxu0
      %v736 = vadd.f32 0.0, %v735
      %737 = vmatmul.bf16.gmra.mxu0 %v598
      %v738 = vpop.f32.mrf.mxu0
      %v739 = vadd.f32 0.0, %v738
      %v740 = vpop.f32.mrf.mxu0
      %v741 = vadd.f32 0.0, %v740
      %742 = vmatmul.bf16.gmra.mxu0 %v600
      %v743 = vpop.f32.mrf.mxu0
      %v744 = vadd.f32 0.0, %v743
      %v745 = vpop.f32.mrf.mxu0
      %v746 = vadd.f32 0.0, %v745
      %747 = vmatmul.bf16.gmra.mxu0 %v602
      %v748 = vpop.f32.mrf.mxu0
      %v749 = vadd.f32 0.0, %v748
      %v750 = vpop.f32.mrf.mxu0
      %v751 = vadd.f32 0.0, %v750
      %752 = vmatmul.bf16.gmra.mxu0 %v604
      %v753 = vpop.f32.mrf.mxu0
      %v754 = vadd.f32 0.0, %v753
      %v755 = vpop.f32.mrf.mxu0
      %v756 = vadd.f32 0.0, %v755
      %757 = vmatmul.bf16.gmra.mxu0 %v606
      %v758 = vpop.f32.mrf.mxu0
      %v759 = vadd.f32 0.0, %v758
      %v760 = vpop.f32.mrf.mxu0
      %v761 = vadd.f32 0.0, %v760
      %762 = vmatmul.bf16.gmra.mxu0 %v608
      %v763 = vpop.f32.mrf.mxu0
      %v764 = vadd.f32 0.0, %v763
      %v765 = vpop.f32.mrf.mxu0
      %v766 = vadd.f32 0.0, %v765
      %767 = vmatmul.bf16.gmra.mxu0 %v610
      %v768 = vpop.f32.mrf.mxu0
      %v769 = vadd.f32 0.0, %v768
      %v770 = vpop.f32.mrf.mxu0
      %v771 = vadd.f32 0.0, %v770
      %772 = vmatmul.bf16.gmra.mxu0 %v612
      %v773 = vpop.f32.mrf.mxu0
      %v774 = vadd.f32 0.0, %v773
      %v775 = vpop.f32.mrf.mxu0
      %v776 = vadd.f32 0.0, %v775
      %777 = vmatmul.bf16.gmra.mxu0 %v614
      %v778 = vpop.f32.mrf.mxu0
      %v779 = vadd.f32 0.0, %v778
      %v780 = vpop.f32.mrf.mxu0
      %v781 = vadd.f32 0.0, %v780
      %782 = vmatmul.bf16.gmra.mxu0 %v616
      %v783 = vpop.f32.mrf.mxu0
      %v784 = vadd.f32 0.0, %v783
      %v785 = vpop.f32.mrf.mxu0
      %v786 = vadd.f32 0.0, %v785
      %787 = vmatmul.bf16.gmra.mxu0 %v618
      %v788 = vpop.f32.mrf.mxu0
      %v789 = vadd.f32 0.0, %v788
      %v790 = vpop.f32.mrf.mxu0
      %v791 = vadd.f32 0.0, %v790
      %792 = vmatmul.bf16.gmra.mxu0 %v620
      %v793 = vpop.f32.mrf.mxu0
      %v794 = vadd.f32 0.0, %v793
      %v795 = vpop.f32.mrf.mxu0
      %v796 = vadd.f32 0.0, %v795
      %797 = vmatmul.bf16.gmra.mxu0 %v622
      %v798 = vpop.f32.mrf.mxu0
      %v799 = vadd.f32 0.0, %v798
      %v800 = vpop.f32.mrf.mxu0
      %v801 = vadd.f32 0.0, %v800
      %802 = vmatmul.bf16.gmra.mxu0 %v624
      %v803 = vpop.f32.mrf.mxu0
      %v804 = vadd.f32 0.0, %v803
      %v805 = vpop.f32.mrf.mxu0
      %v806 = vadd.f32 0.0, %v805
      %807 = vmatmul.bf16.gmra.mxu0 %v626
      %v808 = vpop.f32.mrf.mxu0
      %v809 = vadd.f32 0.0, %v808
      %v810 = vpop.f32.mrf.mxu0
      %v811 = vadd.f32 0.0, %v810
      %812 = vdwg.mxu0
      %813 = vmatpush.bf16.msra.mxu0 %v707
      %814 = vmatpush.bf16.msra.mxu0 %v706
      %815 = vmatpush.bf16.msra.mxu0 %v705
      %816 = vmatpush.bf16.msra.mxu0 %v704
      %817 = vmatpush.bf16.msra.mxu0 %v703
      %818 = vmatpush.bf16.msra.mxu0 %v702
      %819 = vmatpush.bf16.msra.mxu0 %v701
      %820 = vmatpush.bf16.msra.mxu0 %v700
      %821 = vmatmul.bf16.gmra.mxu0 %v597
      %v822 = vpop.f32.mrf.mxu0
      %v823 = vadd.f32 %v734, %v822
      %v824 = vpop.f32.mrf.mxu0
      %v825 = vadd.f32 %v736, %v824
      %826 = vmatmul.bf16.gmra.mxu0 %v599
      %v827 = vpop.f32.mrf.mxu0
      %v828 = vadd.f32 %v739, %v827
      %v829 = vpop.f32.mrf.mxu0
      %v830 = vadd.f32 %v741, %v829
      %831 = vmatmul.bf16.gmra.mxu0 %v601
      %v832 = vpop.f32.mrf.mxu0
      %v833 = vadd.f32 %v744, %v832
      %v834 = vpop.f32.mrf.mxu0
      %v835 = vadd.f32 %v746, %v834
      %836 = vmatmul.bf16.gmra.mxu0 %v603
      %v837 = vpop.f32.mrf.mxu0
      %v838 = vadd.f32 %v749, %v837
      %v839 = vpop.f32.mrf.mxu0
      %v840 = vadd.f32 %v751, %v839
      %841 = vmatmul.bf16.gmra.mxu0 %v605
      %v842 = vpop.f32.mrf.mxu0
      %v843 = vadd.f32 %v754, %v842
      %v844 = vpop.f32.mrf.mxu0
      %v845 = vadd.f32 %v756, %v844
      %846 = vmatmul.bf16.gmra.mxu0 %v607
      %v847 = vpop.f32.mrf.mxu0
      %v848 = vadd.f32 %v759, %v847
      %v849 = vpop.f32.mrf.mxu0
      %v850 = vadd.f32 %v761, %v849
      %851 = vmatmul.bf16.gmra.mxu0 %v609
      %v852 = vpop.f32.mrf.mxu0
      %v853 = vadd.f32 %v764, %v852
      %v854 = vpop.f32.mrf.mxu0
      %v855 = vadd.f32 %v766, %v854
      %856 = vmatmul.bf16.gmra.mxu0 %v611
      %v857 = vpop.f32.mrf.mxu0
      %v858 = vadd.f32 %v769, %v857
      %v859 = vpop.f32.mrf.mxu0
      %v860 = vadd.f32 %v771, %v859
      %861 = vmatmul.bf16.gmra.mxu0 %v613
      %v862 = vpop.f32.mrf.mxu0
      %v863 = vadd.f32 %v774, %v862
      %v864 = vpop.f32.mrf.mxu0
      %v865 = vadd.f32 %v776, %v864
      %866 = vmatmul.bf16.gmra.mxu0 %v615
      %v867 = vpop.f32.mrf.mxu0
      %v868 = vadd.f32 %v779, %v867
      %v869 = vpop.f32.mrf.mxu0
      %v870 = vadd.f32 %v781, %v869
      %871 = vmatmul.bf16.gmra.mxu0 %v617
      %v872 = vpop.f32.mrf.mxu0
      %v873 = vadd.f32 %v784, %v872
      %v874 = vpop.f32.mrf.mxu0
      %v875 = vadd.f32 %v786, %v874
      %876 = vmatmul.bf16.gmra.mxu0 %v619
      %v877 = vpop.f32.mrf.mxu0
      %v878 = vadd.f32 %v789, %v877
      %v879 = vpop.f32.mrf.mxu0
      %v880 = vadd.f32 %v791, %v879
      %881 = vmatmul.bf16.gmra.mxu0 %v621
      %v882 = vpop.f32.mrf.mxu0
      %v883 = vadd.f32 %v794, %v882
      %v884 = vpop.f32.mrf.mxu0
      %v885 = vadd.f32 %v796, %v884
      %886 = vmatmul.bf16.gmra.mxu0 %v623
      %v887 = vpop.f32.mrf.mxu0
      %v888 = vadd.f32 %v799, %v887
      %v889 = vpop.f32.mrf.mxu0
      %v890 = vadd.f32 %v801, %v889
      %891 = vmatmul.bf16.gmra.mxu0 %v625
      %v892 = vpop.f32.mrf.mxu0
      %v893 = vadd.f32 %v804, %v892
      %v894 = vpop.f32.mrf.mxu0
      %v895 = vadd.f32 %v806, %v894
      %896 = vmatmul.bf16.gmra.mxu0 %v627
      %v897 = vpop.f32.mrf.mxu0
      %v898 = vadd.f32 %v809, %v897
      %v899 = vpop.f32.mrf.mxu0
      %v900 = vadd.f32 %v811, %v899
      %901 = vdwg.mxu0
      %v902 = vadd.f32 %v420, %v823
      %v903 = vadd.f32 %v421, %v825
      %v904 = vadd.f32 %v422, %v828
      %v905 = vadd.f32 %v423, %v830
      %v906 = vadd.f32 %v424, %v833
      %v907 = vadd.f32 %v425, %v835
      %v908 = vadd.f32 %v426, %v838
      %v909 = vadd.f32 %v427, %v840
      %v910 = vadd.f32 %v428, %v843
      %v911 = vadd.f32 %v429, %v845
      %v912 = vadd.f32 %v430, %v848
      %v913 = vadd.f32 %v431, %v850
      %v914 = vadd.f32 %v432, %v853
      %v915 = vadd.f32 %v433, %v855
      %v916 = vadd.f32 %v434, %v858
      %v917 = vadd.f32 %v435, %v860
      %v918 = vadd.f32 %v436, %v863
      %v919 = vadd.f32 %v437, %v865
      %v920 = vadd.f32 %v438, %v868
      %v921 = vadd.f32 %v439, %v870
      %v922 = vadd.f32 %v440, %v873
      %v923 = vadd.f32 %v441, %v875
      %v924 = vadd.f32 %v442, %v878
      %v925 = vadd.f32 %v443, %v880
      %v926 = vadd.f32 %v444, %v883
      %v927 = vadd.f32 %v445, %v885
      %v928 = vadd.f32 %v446, %v888
      %v929 = vadd.f32 %v447, %v890
      %v930 = vadd.f32 %v448, %v893
      %v931 = vadd.f32 %v449, %v895
      %v932 = vadd.f32 %v450, %v898
      %v933 = vadd.f32 %v451, %v900
      %934 = vst [vmem:[#allocation3] sm:$0xff] %v902
      %935 = vst [vmem:[#allocation3 + $0x8] sm:$0xff] %v903
      %936 = vst [vmem:[#allocation3 + $0x10] sm:$0xff] %v904
      %937 = vst [vmem:[#allocation3 + $0x18] sm:$0xff] %v905
      %938 = vst [vmem:[#allocation3 + $0x20] sm:$0xff] %v906
      %939 = vst [vmem:[#allocation3 + $0x28] sm:$0xff] %v907
      %940 = vst [vmem:[#allocation3 + $0x30] sm:$0xff] %v908
      %941 = vst [vmem:[#allocation3 + $0x38] sm:$0xff] %v909
      %942 = vst [vmem:[#allocation3 + $0x40] sm:$0xff] %v910
      %943 = vst [vmem:[#allocation3 + $0x48] sm:$0xff] %v911
      %944 = vst [vmem:[#allocation3 + $0x50] sm:$0xff] %v912
      %945 = vst [vmem:[#allocation3 + $0x58] sm:$0xff] %v913
      %946 = vst [vmem:[#allocation3 + $0x60] sm:$0xff] %v914
      %947 = vst [vmem:[#allocation3 + $0x68] sm:$0xff] %v915
      %948 = vst [vmem:[#allocation3 + $0x70] sm:$0xff] %v916
      %949 = vst [vmem:[#allocation3 + $0x78] sm:$0xff] %v917
      %950 = vst [vmem:[#allocation3 + $0x80] sm:$0xff] %v918
      %951 = vst [vmem:[#allocation3 + $0x88] sm:$0xff] %v919
      %952 = vst [vmem:[#allocation3 + $0x90] sm:$0xff] %v920
      %953 = vst [vmem:[#allocation3 + $0x98] sm:$0xff] %v921
      %954 = vst [vmem:[#allocation3 + $0xa0] sm:$0xff] %v922
      %955 = vst [vmem:[#allocation3 + $0xa8] sm:$0xff] %v923
      %956 = vst [vmem:[#allocation3 + $0xb0] sm:$0xff] %v924
      %957 = vst [vmem:[#allocation3 + $0xb8] sm:$0xff] %v925
      %958 = vst [vmem:[#allocation3 + $0xc0] sm:$0xff] %v926
      %959 = vst [vmem:[#allocation3 + $0xc8] sm:$0xff] %v927
      %960 = vst [vmem:[#allocation3 + $0xd0] sm:$0xff] %v928
      %961 = vst [vmem:[#allocation3 + $0xd8] sm:$0xff] %v929
      %962 = vst [vmem:[#allocation3 + $0xe0] sm:$0xff] %v930
      %963 = vst [vmem:[#allocation3 + $0xe8] sm:$0xff] %v931
      %964 = vst [vmem:[#allocation3 + $0xf0] sm:$0xff] %v932
      %965 = vst [vmem:[#allocation3 + $0xf8] sm:$0xff] %v933
      // Predicated region
      $region45: #{_mpn_device.5} parent=35 // pred_check
        %p966 = pneg %p265
      $region46: #{_mpn_device.5} parent=35 // pred_check_branch
        %968 = sbr.rel (%p966) target = $region48
      $region47: #{_mpn_device.5} parent=35 // pred_region
        %v969 = vld [vmem:[#allocation3] sm:$0xff]
        %v970 = vld [vmem:[#allocation3 + $0x8] sm:$0xff]
        %v971 = vld [vmem:[#allocation3 + $0x10] sm:$0xff]
        %v972 = vld [vmem:[#allocation3 + $0x18] sm:$0xff]
        %v973 = vld [vmem:[#allocation3 + $0x20] sm:$0xff]
        %v974 = vld [vmem:[#allocation3 + $0x28] sm:$0xff]
        %v975 = vld [vmem:[#allocation3 + $0x30] sm:$0xff]
        %v976 = vld [vmem:[#allocation3 + $0x38] sm:$0xff]
        %v977 = vld [vmem:[#allocation3 + $0x40] sm:$0xff]
        %v978 = vld [vmem:[#allocation3 + $0x48] sm:$0xff]
        %v979 = vld [vmem:[#allocation3 + $0x50] sm:$0xff]
        %v980 = vld [vmem:[#allocation3 + $0x58] sm:$0xff]
        %v981 = vld [vmem:[#allocation3 + $0x60] sm:$0xff]
        %v982 = vld [vmem:[#allocation3 + $0x68] sm:$0xff]
        %v983 = vld [vmem:[#allocation3 + $0x70] sm:$0xff]
        %v984 = vld [vmem:[#allocation3 + $0x78] sm:$0xff]
        %v985 = vld [vmem:[#allocation3 + $0x80] sm:$0xff]
        %v986 = vld [vmem:[#allocation3 + $0x88] sm:$0xff]
        %v987 = vld [vmem:[#allocation3 + $0x90] sm:$0xff]
        %v988 = vld [vmem:[#allocation3 + $0x98] sm:$0xff]
        %v989 = vld [vmem:[#allocation3 + $0xa0] sm:$0xff]
        %v990 = vld [vmem:[#allocation3 + $0xa8] sm:$0xff]
        %v991 = vld [vmem:[#allocation3 + $0xb0] sm:$0xff]
        %v992 = vld [vmem:[#allocation3 + $0xb8] sm:$0xff]
        %v993 = vld [vmem:[#allocation3 + $0xc0] sm:$0xff]
        %v994 = vld [vmem:[#allocation3 + $0xc8] sm:$0xff]
        %v995 = vld [vmem:[#allocation3 + $0xd0] sm:$0xff]
        %v996 = vld [vmem:[#allocation3 + $0xd8] sm:$0xff]
        %v997 = vld [vmem:[#allocation3 + $0xe0] sm:$0xff]
        %v998 = vld [vmem:[#allocation3 + $0xe8] sm:$0xff]
        %v999 = vld [vmem:[#allocation3 + $0xf0] sm:$0xff]
        %v1000 = vld [vmem:[#allocation3 + $0xf8] sm:$0xff]
        %v1001 = vpack.c.bf16 %v970, %v969
        %v1002 = vpack.c.bf16 %v972, %v971
        %v1003 = vpack.c.bf16 %v974, %v973
        %v1004 = vpack.c.bf16 %v976, %v975
        %v1005 = vpack.c.bf16 %v978, %v977
        %v1006 = vpack.c.bf16 %v980, %v979
        %v1007 = vpack.c.bf16 %v982, %v981
        %v1008 = vpack.c.bf16 %v984, %v983
        %v1009 = vpack.c.bf16 %v986, %v985
        %v1010 = vpack.c.bf16 %v988, %v987
        %v1011 = vpack.c.bf16 %v990, %v989
        %v1012 = vpack.c.bf16 %v992, %v991
        %v1013 = vpack.c.bf16 %v994, %v993
        %v1014 = vpack.c.bf16 %v996, %v995
        %v1015 = vpack.c.bf16 %v998, %v997
        %v1016 = vpack.c.bf16 %v1000, %v999
        %v1017 = vld [vmem:[%s3] sm:$0xf]
        %v1018 = vld [vmem:[%s3 + $0x4] sm:$0xf]
        %v1019 = vld [vmem:[%s3 + $0x8] sm:$0xf]
        %v1020 = vld [vmem:[%s3 + $0xc] sm:$0xf]
        %v1021 = vld [vmem:[%s3 + $0x10] sm:$0xf]
        %v1022 = vld [vmem:[%s3 + $0x14] sm:$0xf]
        %v1023 = vld [vmem:[%s3 + $0x18] sm:$0xf]
        %v1024 = vld [vmem:[%s3 + $0x1c] sm:$0xf]
        %v1025 = vld [vmem:[%s3 + $0x20] sm:$0xf]
        %v1026 = vld [vmem:[%s3 + $0x24] sm:$0xf]
        %v1027 = vld [vmem:[%s3 + $0x28] sm:$0xf]
        %v1028 = vld [vmem:[%s3 + $0x2c] sm:$0xf]
        %v1029 = vld [vmem:[%s3 + $0x30] sm:$0xf]
        %v1030 = vld [vmem:[%s3 + $0x34] sm:$0xf]
        %v1031 = vld [vmem:[%s3 + $0x38] sm:$0xf]
        %v1032 = vld [vmem:[%s3 + $0x3c] sm:$0xf]
        %v1049 = vunpack.c.l.b16 %v1017
        %v1050 = vunpack.c.l.b16 %v1018
        %v1051 = vunpack.c.l.b16 %v1019
        %v1052 = vunpack.c.l.b16 %v1020
        %v1053 = vunpack.c.l.b16 %v1021
        %v1054 = vunpack.c.l.b16 %v1022
        %v1055 = vunpack.c.l.b16 %v1023
        %v1056 = vunpack.c.l.b16 %v1024
        %v1057 = vunpack.c.l.b16 %v1025
        %v1058 = vunpack.c.l.b16 %v1026
        %v1059 = vunpack.c.l.b16 %v1027
        %v1060 = vunpack.c.l.b16 %v1028
        %v1061 = vunpack.c.l.b16 %v1029
        %v1062 = vunpack.c.l.b16 %v1030
        %v1063 = vunpack.c.l.b16 %v1031
        %v1064 = vunpack.c.l.b16 %v1032
        %v1065 = vpack.c.b16 %v1050, %v1049
        %v1066 = vpack.c.b16 %v1052, %v1051
        %v1067 = vpack.c.b16 %v1054, %v1053
        %v1068 = vpack.c.b16 %v1056, %v1055
        %v1069 = vpack.c.b16 %v1058, %v1057
        %v1070 = vpack.c.b16 %v1060, %v1059
        %v1071 = vpack.c.b16 %v1062, %v1061
        %v1072 = vpack.c.b16 %v1064, %v1063
        %1081 = vmatpush.bf16.msra.mxu0 %v1072
        %1082 = vmatpush.bf16.msra.mxu0 %v1071
        %1083 = vmatpush.bf16.msra.mxu0 %v1070
        %1084 = vmatpush.bf16.msra.mxu0 %v1069
        %1085 = vmatpush.bf16.msra.mxu0 %v1068
        %1086 = vmatpush.bf16.msra.mxu0 %v1067
        %1087 = vmatpush.bf16.msra.mxu0 %v1066
        %1088 = vmatpush.bf16.msra.mxu0 %v1065
        %1089 = vmatmul.bf16.gmra.mxu0 %v1001
        %v1090 = vpop.f32.mrf.mxu0
        %v1091 = vadd.f32 0.0, %v1090
        %v1092 = vpop.f32.mrf.mxu0
        %v1093 = vadd.f32 0.0, %v1092
        %1094 = vmatmul.bf16.gmra.mxu0 %v1002
        %v1095 = vpop.f32.mrf.mxu0
        %v1096 = vadd.f32 0.0, %v1095
        %v1097 = vpop.f32.mrf.mxu0
        %v1098 = vadd.f32 0.0, %v1097
        %1099 = vmatmul.bf16.gmra.mxu0 %v1003
        %v1100 = vpop.f32.mrf.mxu0
        %v1101 = vadd.f32 0.0, %v1100
        %v1102 = vpop.f32.mrf.mxu0
        %v1103 = vadd.f32 0.0, %v1102
        %1104 = vmatmul.bf16.gmra.mxu0 %v1004
        %v1105 = vpop.f32.mrf.mxu0
        %v1106 = vadd.f32 0.0, %v1105
        %v1107 = vpop.f32.mrf.mxu0
        %v1108 = vadd.f32 0.0, %v1107
        %1109 = vmatmul.bf16.gmra.mxu0 %v1005
        %v1110 = vpop.f32.mrf.mxu0
        %v1111 = vadd.f32 0.0, %v1110
        %v1112 = vpop.f32.mrf.mxu0
        %v1113 = vadd.f32 0.0, %v1112
        %1114 = vmatmul.bf16.gmra.mxu0 %v1006
        %v1115 = vpop.f32.mrf.mxu0
        %v1116 = vadd.f32 0.0, %v1115
        %v1117 = vpop.f32.mrf.mxu0
        %v1118 = vadd.f32 0.0, %v1117
        %1119 = vmatmul.bf16.gmra.mxu0 %v1007
        %v1120 = vpop.f32.mrf.mxu0
        %v1121 = vadd.f32 0.0, %v1120
        %v1122 = vpop.f32.mrf.mxu0
        %v1123 = vadd.f32 0.0, %v1122
        %1124 = vmatmul.bf16.gmra.mxu0 %v1008
        %v1125 = vpop.f32.mrf.mxu0
        %v1126 = vadd.f32 0.0, %v1125
        %v1127 = vpop.f32.mrf.mxu0
        %v1128 = vadd.f32 0.0, %v1127
        %1129 = vmatmul.bf16.gmra.mxu0 %v1009
        %v1130 = vpop.f32.mrf.mxu0
        %v1131 = vadd.f32 0.0, %v1130
        %v1132 = vpop.f32.mrf.mxu0
        %v1133 = vadd.f32 0.0, %v1132
        %1134 = vmatmul.bf16.gmra.mxu0 %v1010
        %v1135 = vpop.f32.mrf.mxu0
        %v1136 = vadd.f32 0.0, %v1135
        %v1137 = vpop.f32.mrf.mxu0
        %v1138 = vadd.f32 0.0, %v1137
        %1139 = vmatmul.bf16.gmra.mxu0 %v1011
        %v1140 = vpop.f32.mrf.mxu0
        %v1141 = vadd.f32 0.0, %v1140
        %v1142 = vpop.f32.mrf.mxu0
        %v1143 = vadd.f32 0.0, %v1142
        %1144 = vmatmul.bf16.gmra.mxu0 %v1012
        %v1145 = vpop.f32.mrf.mxu0
        %v1146 = vadd.f32 0.0, %v1145
        %v1147 = vpop.f32.mrf.mxu0
        %v1148 = vadd.f32 0.0, %v1147
        %1149 = vmatmul.bf16.gmra.mxu0 %v1013
        %v1150 = vpop.f32.mrf.mxu0
        %v1151 = vadd.f32 0.0, %v1150
        %v1152 = vpop.f32.mrf.mxu0
        %v1153 = vadd.f32 0.0, %v1152
        %1154 = vmatmul.bf16.gmra.mxu0 %v1014
        %v1155 = vpop.f32.mrf.mxu0
        %v1156 = vadd.f32 0.0, %v1155
        %v1157 = vpop.f32.mrf.mxu0
        %v1158 = vadd.f32 0.0, %v1157
        %1159 = vmatmul.bf16.gmra.mxu0 %v1015
        %v1160 = vpop.f32.mrf.mxu0
        %v1161 = vadd.f32 0.0, %v1160
        %v1162 = vpop.f32.mrf.mxu0
        %v1163 = vadd.f32 0.0, %v1162
        %1164 = vmatmul.bf16.gmra.mxu0 %v1016
        %v1165 = vpop.f32.mrf.mxu0
        %v1166 = vadd.f32 0.0, %v1165
        %v1167 = vpop.f32.mrf.mxu0
        %v1168 = vadd.f32 0.0, %v1167
        %1169 = vdwg.mxu0
        %v1170 = vld [vmem:[%s253] sm:$0xf]
        %v1171 = vld [vmem:[%s253 + $0x4] sm:$0xf]
        %v1172 = vld [vmem:[%s253 + $0x8] sm:$0xf]
        %v1173 = vld [vmem:[%s253 + $0xc] sm:$0xf]
        %v1174 = vld [vmem:[%s253 + $0x10] sm:$0xf]
        %v1175 = vld [vmem:[%s253 + $0x14] sm:$0xf]
        %v1176 = vld [vmem:[%s253 + $0x18] sm:$0xf]
        %v1177 = vld [vmem:[%s253 + $0x1c] sm:$0xf]
        %v1178 = vld [vmem:[%s253 + $0x20] sm:$0xf]
        %v1179 = vld [vmem:[%s253 + $0x24] sm:$0xf]
        %v1180 = vld [vmem:[%s253 + $0x28] sm:$0xf]
        %v1181 = vld [vmem:[%s253 + $0x2c] sm:$0xf]
        %v1182 = vld [vmem:[%s253 + $0x30] sm:$0xf]
        %v1183 = vld [vmem:[%s253 + $0x34] sm:$0xf]
        %v1184 = vld [vmem:[%s253 + $0x38] sm:$0xf]
        %v1185 = vld [vmem:[%s253 + $0x3c] sm:$0xf]
        %v1186 = vld [vmem:[%s253 + $0x40] sm:$0xf]
        %v1187 = vld [vmem:[%s253 + $0x44] sm:$0xf]
        %v1188 = vld [vmem:[%s253 + $0x48] sm:$0xf]
        %v1189 = vld [vmem:[%s253 + $0x4c] sm:$0xf]
        %v1190 = vld [vmem:[%s253 + $0x50] sm:$0xf]
        %v1191 = vld [vmem:[%s253 + $0x54] sm:$0xf]
        %v1192 = vld [vmem:[%s253 + $0x58] sm:$0xf]
        %v1193 = vld [vmem:[%s253 + $0x5c] sm:$0xf]
        %v1194 = vld [vmem:[%s253 + $0x60] sm:$0xf]
        %v1195 = vld [vmem:[%s253 + $0x64] sm:$0xf]
        %v1196 = vld [vmem:[%s253 + $0x68] sm:$0xf]
        %v1197 = vld [vmem:[%s253 + $0x6c] sm:$0xf]
        %v1198 = vld [vmem:[%s253 + $0x70] sm:$0xf]
        %v1199 = vld [vmem:[%s253 + $0x74] sm:$0xf]
        %v1200 = vld [vmem:[%s253 + $0x78] sm:$0xf]
        %v1201 = vld [vmem:[%s253 + $0x7c] sm:$0xf]
        %v1202 = vunpack.c.l.bf16 %v1170
        %v1203 = vunpack.c.l.bf16 %v1171
        %v1204 = vunpack.c.l.bf16 %v1172
        %v1205 = vunpack.c.l.bf16 %v1173
        %v1206 = vunpack.c.l.bf16 %v1174
        %v1207 = vunpack.c.l.bf16 %v1175
        %v1208 = vunpack.c.l.bf16 %v1176
        %v1209 = vunpack.c.l.bf16 %v1177
        %v1210 = vunpack.c.l.bf16 %v1178
        %v1211 = vunpack.c.l.bf16 %v1179
        %v1212 = vunpack.c.l.bf16 %v1180
        %v1213 = vunpack.c.l.bf16 %v1181
        %v1214 = vunpack.c.l.bf16 %v1182
        %v1215 = vunpack.c.l.bf16 %v1183
        %v1216 = vunpack.c.l.bf16 %v1184
        %v1217 = vunpack.c.l.bf16 %v1185
        %v1218 = vunpack.c.l.bf16 %v1186
        %v1219 = vunpack.c.l.bf16 %v1187
        %v1220 = vunpack.c.l.bf16 %v1188
        %v1221 = vunpack.c.l.bf16 %v1189
        %v1222 = vunpack.c.l.bf16 %v1190
        %v1223 = vunpack.c.l.bf16 %v1191
        %v1224 = vunpack.c.l.bf16 %v1192
        %v1225 = vunpack.c.l.bf16 %v1193
        %v1226 = vunpack.c.l.bf16 %v1194
        %v1227 = vunpack.c.l.bf16 %v1195
        %v1228 = vunpack.c.l.bf16 %v1196
        %v1229 = vunpack.c.l.bf16 %v1197
        %v1230 = vunpack.c.l.bf16 %v1198
        %v1231 = vunpack.c.l.bf16 %v1199
        %v1232 = vunpack.c.l.bf16 %v1200
        %v1233 = vunpack.c.l.bf16 %v1201
        %v1234 = vadd.f32 %v1202, %v1091
        %v1235 = vadd.f32 %v1203, %v1093
        %v1236 = vadd.f32 %v1204, %v1096
        %v1237 = vadd.f32 %v1205, %v1098
        %v1238 = vadd.f32 %v1206, %v1101
        %v1239 = vadd.f32 %v1207, %v1103
        %v1240 = vadd.f32 %v1208, %v1106
        %v1241 = vadd.f32 %v1209, %v1108
        %v1242 = vadd.f32 %v1210, %v1111
        %v1243 = vadd.f32 %v1211, %v1113
        %v1244 = vadd.f32 %v1212, %v1116
        %v1245 = vadd.f32 %v1213, %v1118
        %v1246 = vadd.f32 %v1214, %v1121
        %v1247 = vadd.f32 %v1215, %v1123
        %v1248 = vadd.f32 %v1216, %v1126
        %v1249 = vadd.f32 %v1217, %v1128
        %v1250 = vadd.f32 %v1218, %v1131
        %v1251 = vadd.f32 %v1219, %v1133
        %v1252 = vadd.f32 %v1220, %v1136
        %v1253 = vadd.f32 %v1221, %v1138
        %v1254 = vadd.f32 %v1222, %v1141
        %v1255 = vadd.f32 %v1223, %v1143
        %v1256 = vadd.f32 %v1224, %v1146
        %v1257 = vadd.f32 %v1225, %v1148
        %v1258 = vadd.f32 %v1226, %v1151
        %v1259 = vadd.f32 %v1227, %v1153
        %v1260 = vadd.f32 %v1228, %v1156
        %v1261 = vadd.f32 %v1229, %v1158
        %v1262 = vadd.f32 %v1230, %v1161
        %v1263 = vadd.f32 %v1231, %v1163
        %v1264 = vadd.f32 %v1232, %v1166
        %v1265 = vadd.f32 %v1233, %v1168
        %v1266 = vmax.f32 %v1234, 0.0
        %v1267 = vmax.f32 %v1235, 0.0
        %v1268 = vmax.f32 %v1236, 0.0
        %v1269 = vmax.f32 %v1237, 0.0
        %v1270 = vmax.f32 %v1238, 0.0
        %v1271 = vmax.f32 %v1239, 0.0
        %v1272 = vmax.f32 %v1240, 0.0
        %v1273 = vmax.f32 %v1241, 0.0
        %v1274 = vmax.f32 %v1242, 0.0
        %v1275 = vmax.f32 %v1243, 0.0
        %v1276 = vmax.f32 %v1244, 0.0
        %v1277 = vmax.f32 %v1245, 0.0
        %v1278 = vmax.f32 %v1246, 0.0
        %v1279 = vmax.f32 %v1247, 0.0
        %v1280 = vmax.f32 %v1248, 0.0
        %v1281 = vmax.f32 %v1249, 0.0
        %v1282 = vmax.f32 %v1250, 0.0
        %v1283 = vmax.f32 %v1251, 0.0
        %v1284 = vmax.f32 %v1252, 0.0
        %v1285 = vmax.f32 %v1253, 0.0
        %v1286 = vmax.f32 %v1254, 0.0
        %v1287 = vmax.f32 %v1255, 0.0
        %v1288 = vmax.f32 %v1256, 0.0
        %v1289 = vmax.f32 %v1257, 0.0
        %v1290 = vmax.f32 %v1258, 0.0
        %v1291 = vmax.f32 %v1259, 0.0
        %v1292 = vmax.f32 %v1260, 0.0
        %v1293 = vmax.f32 %v1261, 0.0
        %v1294 = vmax.f32 %v1262, 0.0
        %v1295 = vmax.f32 %v1263, 0.0
        %v1296 = vmax.f32 %v1264, 0.0
        %v1297 = vmax.f32 %v1265, 0.0
        %v1298 = vpack.c.bf16 %v1266, %v1266
        %v1299 = vpack.c.bf16 %v1267, %v1267
        %v1300 = vpack.c.bf16 %v1268, %v1268
        %v1301 = vpack.c.bf16 %v1269, %v1269
        %v1302 = vpack.c.bf16 %v1270, %v1270
        %v1303 = vpack.c.bf16 %v1271, %v1271
        %v1304 = vpack.c.bf16 %v1272, %v1272
        %v1305 = vpack.c.bf16 %v1273, %v1273
        %v1306 = vpack.c.bf16 %v1274, %v1274
        %v1307 = vpack.c.bf16 %v1275, %v1275
        %v1308 = vpack.c.bf16 %v1276, %v1276
        %v1309 = vpack.c.bf16 %v1277, %v1277
        %v1310 = vpack.c.bf16 %v1278, %v1278
        %v1311 = vpack.c.bf16 %v1279, %v1279
        %v1312 = vpack.c.bf16 %v1280, %v1280
        %v1313 = vpack.c.bf16 %v1281, %v1281
        %v1314 = vpack.c.bf16 %v1282, %v1282
        %v1315 = vpack.c.bf16 %v1283, %v1283
        %v1316 = vpack.c.bf16 %v1284, %v1284
        %v1317 = vpack.c.bf16 %v1285, %v1285
        %v1318 = vpack.c.bf16 %v1286, %v1286
        %v1319 = vpack.c.bf16 %v1287, %v1287
        %v1320 = vpack.c.bf16 %v1288, %v1288
        %v1321 = vpack.c.bf16 %v1289, %v1289
        %v1322 = vpack.c.bf16 %v1290, %v1290
        %v1323 = vpack.c.bf16 %v1291, %v1291
        %v1324 = vpack.c.bf16 %v1292, %v1292
        %v1325 = vpack.c.bf16 %v1293, %v1293
        %v1326 = vpack.c.bf16 %v1294, %v1294
        %v1327 = vpack.c.bf16 %v1295, %v1295
        %v1328 = vpack.c.bf16 %v1296, %v1296
        %v1329 = vpack.c.bf16 %v1297, %v1297
        %s1330 = ssub.s32 1, %s380
        %s1331 = smul.u32 %s1330, 256
        %s1332 = smul.u32 %s21, 256
        %s1333 = sadd.s32 %s1331, %s1332
        %s1334 = sshra.s32 %s1333, 3
        %s1335 = sand.u32 %s1333, 7
        %s1336 = smul.addr %s1334, 4
        %s1337 = scalar_lea.vmem [#allocation2], %s1336
        %1338 = vst [vmem:[%s1337] sm:$0xf] %v1298
        %1339 = vst [vmem:[%s1337 + $0x4] sm:$0xf] %v1299
        %1340 = vst [vmem:[%s1337 + $0x8] sm:$0xf] %v1300
        %1341 = vst [vmem:[%s1337 + $0xc] sm:$0xf] %v1301
        %1342 = vst [vmem:[%s1337 + $0x10] sm:$0xf] %v1302
        %1343 = vst [vmem:[%s1337 + $0x14] sm:$0xf] %v1303
        %1344 = vst [vmem:[%s1337 + $0x18] sm:$0xf] %v1304
        %1345 = vst [vmem:[%s1337 + $0x1c] sm:$0xf] %v1305
        %1346 = vst [vmem:[%s1337 + $0x20] sm:$0xf] %v1306
        %1347 = vst [vmem:[%s1337 + $0x24] sm:$0xf] %v1307
        %1348 = vst [vmem:[%s1337 + $0x28] sm:$0xf] %v1308
        %1349 = vst [vmem:[%s1337 + $0x2c] sm:$0xf] %v1309
        %1350 = vst [vmem:[%s1337 + $0x30] sm:$0xf] %v1310
        %1351 = vst [vmem:[%s1337 + $0x34] sm:$0xf] %v1311
        %1352 = vst [vmem:[%s1337 + $0x38] sm:$0xf] %v1312
        %1353 = vst [vmem:[%s1337 + $0x3c] sm:$0xf] %v1313
        %1354 = vst [vmem:[%s1337 + $0x40] sm:$0xf] %v1314
        %1355 = vst [vmem:[%s1337 + $0x44] sm:$0xf] %v1315
        %1356 = vst [vmem:[%s1337 + $0x48] sm:$0xf] %v1316
        %1357 = vst [vmem:[%s1337 + $0x4c] sm:$0xf] %v1317
        %1358 = vst [vmem:[%s1337 + $0x50] sm:$0xf] %v1318
        %1359 = vst [vmem:[%s1337 + $0x54] sm:$0xf] %v1319
        %1360 = vst [vmem:[%s1337 + $0x58] sm:$0xf] %v1320
        %1361 = vst [vmem:[%s1337 + $0x5c] sm:$0xf] %v1321
        %1362 = vst [vmem:[%s1337 + $0x60] sm:$0xf] %v1322
        %1363 = vst [vmem:[%s1337 + $0x64] sm:$0xf] %v1323
        %1364 = vst [vmem:[%s1337 + $0x68] sm:$0xf] %v1324
        %1365 = vst [vmem:[%s1337 + $0x6c] sm:$0xf] %v1325
        %1366 = vst [vmem:[%s1337 + $0x70] sm:$0xf] %v1326
        %1367 = vst [vmem:[%s1337 + $0x74] sm:$0xf] %v1327
        %1368 = vst [vmem:[%s1337 + $0x78] sm:$0xf] %v1328
        %1369 = vst [vmem:[%s1337 + $0x7c] sm:$0xf] %v1329
        %1370 = vst [vmem:[%s259] sm:$0xf] %v1298
        %1371 = vst [vmem:[%s259 + $0x4] sm:$0xf] %v1299
        %1372 = vst [vmem:[%s259 + $0x8] sm:$0xf] %v1300
        %1373 = vst [vmem:[%s259 + $0xc] sm:$0xf] %v1301
        %1374 = vst [vmem:[%s259 + $0x10] sm:$0xf] %v1302
        %1375 = vst [vmem:[%s259 + $0x14] sm:$0xf] %v1303
        %1376 = vst [vmem:[%s259 + $0x18] sm:$0xf] %v1304
        %1377 = vst [vmem:[%s259 + $0x1c] sm:$0xf] %v1305
        %1378 = vst [vmem:[%s259 + $0x20] sm:$0xf] %v1306
        %1379 = vst [vmem:[%s259 + $0x24] sm:$0xf] %v1307
        %1380 = vst [vmem:[%s259 + $0x28] sm:$0xf] %v1308
        %1381 = vst [vmem:[%s259 + $0x2c] sm:$0xf] %v1309
        %1382 = vst [vmem:[%s259 + $0x30] sm:$0xf] %v1310
        %1383 = vst [vmem:[%s259 + $0x34] sm:$0xf] %v1311
        %1384 = vst [vmem:[%s259 + $0x38] sm:$0xf] %v1312
        %1385 = vst [vmem:[%s259 + $0x3c] sm:$0xf] %v1313
        %1386 = vst [vmem:[%s259 + $0x40] sm:$0xf] %v1314
        %1387 = vst [vmem:[%s259 + $0x44] sm:$0xf] %v1315
        %1388 = vst [vmem:[%s259 + $0x48] sm:$0xf] %v1316
        %1389 = vst [vmem:[%s259 + $0x4c] sm:$0xf] %v1317
        %1390 = vst [vmem:[%s259 + $0x50] sm:$0xf] %v1318
        %1391 = vst [vmem:[%s259 + $0x54] sm:$0xf] %v1319
        %1392 = vst [vmem:[%s259 + $0x58] sm:$0xf] %v1320
        %1393 = vst [vmem:[%s259 + $0x5c] sm:$0xf] %v1321
        %1394 = vst [vmem:[%s259 + $0x60] sm:$0xf] %v1322
        %1395 = vst [vmem:[%s259 + $0x64] sm:$0xf] %v1323
        %1396 = vst [vmem:[%s259 + $0x68] sm:$0xf] %v1324
        %1397 = vst [vmem:[%s259 + $0x6c] sm:$0xf] %v1325
        %1398 = vst [vmem:[%s259 + $0x70] sm:$0xf] %v1326
        %1399 = vst [vmem:[%s259 + $0x74] sm:$0xf] %v1327
        %1400 = vst [vmem:[%s259 + $0x78] sm:$0xf] %v1328
        %1401 = vst [vmem:[%s259 + $0x7c] sm:$0xf] %v1329
      $region48: #{_mpn_device.5} parent=35 // pred_fallthru
        _
      %s1402 = smul.u32 32, %s21
      %p1403 = scmp.lt.s32.totalorder %s1402, 31
      %s1404 = scalar_select %p1403, %s1402, 31
      %s1405 = smul.addr %s1404, 4
      %s1406 = scalar_lea.vmem %s4, %s1405
      // Predicated region
      $region49: #{_mpn_device.5} parent=35 // pred_check
        %p1407 = pneg %p148
      $region50: #{_mpn_device.5} parent=35 // pred_check_branch
        %1409 = sbr.rel (%p1407) target = $region52
      $region51: #{_mpn_device.5} parent=35 // pred_region
        %s1410 = smul.u32 32, %s21
      $region52: #{_mpn_device.5} parent=35 // pred_fallthru
        _
      // Predicated region
      $region53: #{_mpn_device.5} parent=35 // pred_check
        %p1411 = pneg %p148
      $region54: #{_mpn_device.5} parent=35 // pred_check_branch
        %1413 = sbr.rel (%p1411) target = $region56
      $region55: #{_mpn_device.5} parent=35 // pred_region
        %s1414 = smul.u32 32, %s21
        %p1415 = scmp.lt.s32.totalorder %s1414, 31
        %s1416 = scalar_select %p1415, %s1414, 31
        %s1417 = smul.addr %s1416, 4
        %s1418 = scalar_lea.vmem %s4, %s1417
      $region56: #{_mpn_device.5} parent=35 // pred_fallthru
        _
    $region36: #{_mpn_device.5} parent=5 // pred_fallthru
      _
    %p1419 = scmp.le.s32.totalorder 2, %s10
    // Predicated region
    $region57: #{_mpn_device.5} parent=5 // pred_check
      %p1420 = pneg %p1419
    $region58: #{_mpn_device.5} parent=5 // pred_check_branch
      %1422 = sbr.rel (%p1420) target = $region60
    $region59: #{_mpn_device.5} parent=5 // pred_region
      %s1423 = ssub.s32 %s10, 2
    $region60: #{_mpn_device.5} parent=5 // pred_fallthru
      _
  $region6: #{_mpn_device.5} parent=0 // loop_footer
    %s14 = sadd.s32 1, %s10
  $region7: #{_mpn_device.5} parent=0 // loop_footer_branch
    %9 = sbr.rel target = $region3
  $region8: #{_mpn_device.5} parent=0 // loop_exit
    _

</llo_original>
